<compile_context>
chip_gen: v5e
topology: v5e:2x2
jax: 0.10.0
libtpu: 0.0.40
codegen_flags: <defaults>
</compile_context>

<pallas_src>
import functools

import jax
import jax.numpy as jnp
import numpy as np
from jax import lax
from jax.experimental import pallas as pl
from jax.experimental.pallas import tpu as pltpu

LANE = 128
_VMEM_LIMIT = 32 * 1024 * 1024   # safe on v5e/v6e/v7x; per-step tiles are far smaller


def _round_up(x, m):
    return (x + m - 1) // m * m


def _choose_tile(h_out, row_bytes, min_tiles=2, budget_bytes=2 * 1024 * 1024):
    """Largest divisor TH of h_out that gives >= min_tiles grid steps within budget."""
    divisors = [d for d in range(1, h_out + 1) if h_out % d == 0]
    for th in sorted(divisors, reverse=True):
        if h_out // th >= min_tiles and th * row_bytes <= budget_bytes:
            return th
    for th in sorted(divisors, reverse=True):
        if th * row_bytes <= budget_bytes:
            return th
    return h_out


def _halo_tiles(xp, th, kh):
    """xp: (N, H_out + kh - 1, Wp, C)  ->  (N, H_out//th, th + kh - 1, Wp, C)."""
    h_out = xp.shape[1] - (kh - 1)
    n_t = h_out // th
    tiles = [xp[:, t * th: t * th + th + (kh - 1)] for t in range(n_t)]
    return jnp.stack(tiles, axis=1)


# ----------------------------------------------------------------------------
# In-kernel im2col slab: kw column relayouts, lane-aligned concat, one big dot
# ----------------------------------------------------------------------------
def _im2col_slab(x, kh, kw, th, w):
    """x: (th+kh-1, w+kw-1, Cp) bf16 -> (th*w, kh*kw*Cp) bf16."""
    hh = th + kh - 1
    cp = x.shape[-1]
    cols = [x[:, dj:dj + w, :].reshape(hh * w, cp) for dj in range(kw)]
    wins = [cols[dj][di * w:(di + th) * w, :] for di in range(kh) for dj in range(kw)]
    if len(wins) == 1:
        return wins[0]
    return jnp.concatenate(wins, axis=-1)


# ----------------------------------------------------------------------------
# Kernel 1: generic tap conv (+bias, +optional ReLU); used for the packed
# 2x2 (== 4x4/stride-2) head convs and the 3x3/stride-1 convs.
# ----------------------------------------------------------------------------
def _tapconv_kernel(xp_ref, w_ref, b_ref, o_ref, *, kh, kw, post_relu):
    _, th, w, co = o_ref.shape
    x = xp_ref[0]                                            # (th+kh-1, w+kw-1, Cp) bf16
    slab = _im2col_slab(x, kh, kw, th, w)                    # single lane-dense slab
    acc = jnp.dot(slab, w_ref[...], preferred_element_type=jnp.float32)
    acc = acc + b_ref[...]                                   # f32 bias
    if post_relu:
        acc = jnp.maximum(acc, 0.0)
    o_ref[...] = acc.reshape(1, th, w, co).astype(o_ref.dtype)


def _tapconv_call(tiles, w_mat, b_row, *, kh, kw, th, w_out, post_relu):
    m, th_h, wp, cp = tiles.shape
    k, co = w_mat.shape
    return pl.pallas_call(
        functools.partial(_tapconv_kernel, kh=kh, kw=kw, post_relu=post_relu),
        grid=(m,),
        in_specs=[
            pl.BlockSpec((1, th_h, wp, cp), lambda i: (i, 0, 0, 0)),
            pl.BlockSpec((k, co), lambda i: (0, 0)),          # weights: replicated
            pl.BlockSpec((1, co), lambda i: (0, 0)),          # bias: replicated
        ],
        out_specs=pl.BlockSpec((1, th, w_out, co), lambda i: (i, 0, 0, 0)),
        out_shape=jax.ShapeDtypeStruct((m, th, w_out, co), jnp.bfloat16),
        compiler_params=pltpu.CompilerParams(
            dimension_semantics=("parallel",),
            vmem_limit_bytes=_VMEM_LIMIT,
        ),
    )(tiles, w_mat, b_row)


def _pack_s2(x_bf16, packed_pad):
    """Pad by 1 and space-to-depth: (N,H,W,C) -> (N,H/2+1,W/2+1,packed_pad) bf16."""
    n, h, w, c = x_bf16.shape
    assert h % 2 == 0 and w % 2 == 0
    xp = jnp.pad(x_bf16, ((0, 0), (1, 1), (1, 1), (0, 0)))
    hp, wp = h + 2, w + 2
    xp = xp.reshape(n, hp // 2, 2, wp // 2, 2, c)
    xp = jnp.transpose(xp, (0, 1, 3, 2, 4, 5)).reshape(n, hp // 2, wp // 2, 4 * c)
    if packed_pad > 4 * c:
        xp = jnp.pad(xp, ((0, 0), (0, 0), (0, 0), (0, packed_pad - 4 * c)))
    return xp


def conv4x4_s2(x_nhwc, w_mat, b_row, *, post_relu):
    """4x4 / stride-2 / pad-1 conv as a packed 2x2 / stride-1 direct kernel."""
    n, h, w, _ = x_nhwc.shape
    packed_pad = w_mat.shape[0] // 4
    co = w_mat.shape[1]
    xp = _pack_s2(x_nhwc.astype(jnp.bfloat16), packed_pad)   # (N, Ho+1, Wo+1, Cpk)
    ho, wo = h // 2, w // 2
    th = _choose_tile(ho, (wo + 1) * packed_pad * 2)
    tiles = _halo_tiles(xp, th, 2)
    n_t = tiles.shape[1]
    tiles = tiles.reshape(n * n_t, th + 1, wo + 1, packed_pad)
    out = _tapconv_call(tiles, w_mat, b_row, kh=2, kw=2, th=th, w_out=wo,
                        post_relu=post_relu)
    return out.reshape(n, n_t * th, wo, co)


def conv3x3(x_nhwc, w_mat, b_row, *, post_relu):
    n, h, w, c = x_nhwc.shape
    co = w_mat.shape[1]
    xp = jnp.pad(x_nhwc.astype(jnp.bfloat16), ((0, 0), (1, 1), (1, 1), (0, 0)))
    th = _choose_tile(h, (w + 2) * c * 2)
    tiles = _halo_tiles(xp, th, 3)
    n_t = tiles.shape[1]
    tiles = tiles.reshape(n * n_t, th + 2, w + 2, c)
    out = _tapconv_call(tiles, w_mat, b_row, kh=3, kw=3, th=th, w_out=w,
                        post_relu=post_relu)
    return out.reshape(n, n_t * th, w, co)


# ----------------------------------------------------------------------------
# Kernel 2: fully fused ResBlock: ReLU -> 3x3 -> ReLU -> 1x1 -> +residual
# ----------------------------------------------------------------------------
def _resblock_kernel(xp_ref, w1_ref, b1_ref, w2_ref, b2_ref, o_ref, *, final_relu):
    _, th, w, cp = o_ref.shape
    x = xp_ref[0]                                            # (th+2, w+2, Cp) bf16
    res = x[1:1 + th, 1:1 + w, :].reshape(th * w, cp).astype(jnp.float32)
    xa = jnp.maximum(x, 0.0)                                 # pre-ReLU (exact in bf16)
    slab = _im2col_slab(xa, 3, 3, th, w)
    h = jnp.dot(slab, w1_ref[...], preferred_element_type=jnp.float32)
    h = jnp.maximum(h + b1_ref[...], 0.0)                    # intermediate stays in VMEM
    out = jnp.dot(h.astype(jnp.bfloat16), w2_ref[...],
                  preferred_element_type=jnp.float32)
    out = out + b2_ref[...] + res
    if final_relu:                                           # network's trailing ReLU
        out = jnp.maximum(out, 0.0)
    o_ref[...] = out.reshape(1, th, w, cp).astype(o_ref.dtype)


def resblock_fused(x_nhwc, w1, b1, w2, b2, *, final_relu):
    n, h, w, cp = x_nhwc.shape
    cr = w1.shape[1]
    xp = jnp.pad(x_nhwc.astype(jnp.bfloat16), ((0, 0), (1, 1), (1, 1), (0, 0)))
    th = _choose_tile(h, (w + 2) * cp * 2)
    tiles = _halo_tiles(xp, th, 3)
    n_t = tiles.shape[1]
    tiles = tiles.reshape(n * n_t, th + 2, w + 2, cp)
    out = pl.pallas_call(
        functools.partial(_resblock_kernel, final_relu=final_relu),
        grid=(n * n_t,),
        in_specs=[
            pl.BlockSpec((1, th + 2, w + 2, cp), lambda i: (i, 0, 0, 0)),
            pl.BlockSpec((9 * cp, cr), lambda i: (0, 0)),
            pl.BlockSpec((1, cr), lambda i: (0, 0)),
            pl.BlockSpec((cr, cp), lambda i: (0, 0)),
            pl.BlockSpec((1, cp), lambda i: (0, 0)),
        ],
        out_specs=pl.BlockSpec((1, th, w, cp), lambda i: (i, 0, 0, 0)),
        out_shape=jax.ShapeDtypeStruct((n * n_t, th, w, cp), jnp.bfloat16),
        compiler_params=pltpu.CompilerParams(
            dimension_semantics=("parallel",),
            vmem_limit_bytes=_VMEM_LIMIT,
        ),
    )(tiles, w1, b1, w2, b2)
    return out.reshape(n, n_t * th, w, cp)


# ----------------------------------------------------------------------------
# Parameter init (PyTorch-default-like) and one-time kernel-layout prep
# ----------------------------------------------------------------------------
def _init_conv(key, cout, cin, kh, kw):
    kwk, kbk = jax.random.split(key)
    bound = 1.0 / float(np.sqrt(cin * kh * kw))
    w = jax.random.uniform(kwk, (cout, cin, kh, kw), jnp.float32, -bound, bound)
    b = jax.random.uniform(kbk, (cout,), jnp.float32, -bound, bound)
    return w, b


def init_encoder_params(key, in_channel, channel, n_res_block, n_res_channel, stride):
    params = {}
    keys = jax.random.split(key, 8 + 2 * n_res_block)
    ki = iter(range(len(keys)))
    if stride == 6:
        params["conv1"] = _init_conv(keys[next(ki)], channel // 2, in_channel, 4, 4)
        params["conv2"] = _init_conv(keys[next(ki)], channel // 2, channel // 2, 4, 4)
        params["conv3"] = _init_conv(keys[next(ki)], channel, channel // 2, 4, 4)
        params["conv4"] = _init_conv(keys[next(ki)], channel, channel, 3, 3)
    elif stride == 2:
        params["conv1"] = _init_conv(keys[next(ki)], channel // 2, in_channel, 4, 4)
        params["conv2"] = _init_conv(keys[next(ki)], channel, channel // 2, 3, 3)
    else:
        raise ValueError("stride must be 2 or 6")
    for i in range(n_res_block):
        params[f"res{i}_conv1"] = _init_conv(keys[next(ki)], n_res_channel, channel, 3, 3)
        params[f"res{i}_conv2"] = _init_conv(keys[next(ki)], channel, n_res_channel, 1, 1)
    return params


def _pad_bias(b, cout_pad):
    return jnp.pad(b, (0, cout_pad - b.shape[0])).reshape(1, cout_pad).astype(jnp.float32)


def _prep_packed4(w_oihw, b, *, cin_lane, cout_pad):
    """4x4 conv weight -> packed 2x2 weight matrix (4*packed_pad, cout_pad) bf16."""
    cout, cin, _, _ = w_oihw.shape
    w = jnp.transpose(w_oihw, (2, 3, 1, 0))                   # (4, 4, cin, cout)
    w = jnp.pad(w, ((0, 0), (0, 0), (0, cin_lane - cin), (0, cout_pad - cout)))
    w = w.reshape(2, 2, 2, 2, cin_lane, cout_pad)             # (di, si, dj, sj, c, o)
    w = jnp.transpose(w, (0, 2, 1, 3, 4, 5))                   # (di, dj, si, sj, c, o)
    w = w.reshape(2, 2, 4 * cin_lane, cout_pad)
    packed_pad = _round_up(4 * cin_lane, LANE)                 # lane-dense K (conv1: 128)
    w = jnp.pad(w, ((0, 0), (0, 0), (0, packed_pad - 4 * cin_lane), (0, 0)))
    return w.reshape(4 * packed_pad, cout_pad).astype(jnp.bfloat16), _pad_bias(b, cout_pad)


def _prep_3x3(w_oihw, b, *, cin_pad, cout_pad):
    cout, cin, _, _ = w_oihw.shape
    w = jnp.transpose(w_oihw, (2, 3, 1, 0))                   # (3, 3, cin, cout)
    w = jnp.pad(w, ((0, 0), (0, 0), (0, cin_pad - cin), (0, cout_pad - cout)))
    return w.reshape(9 * cin_pad, cout_pad).astype(jnp.bfloat16), _pad_bias(b, cout_pad)


def _prep_1x1(w_oihw, b, *, cin_pad, cout_pad):
    cout, cin, _, _ = w_oihw.shape
    w = jnp.transpose(w_oihw, (2, 3, 1, 0))[0, 0]              # (cin, cout)
    w = jnp.pad(w, ((0, cin_pad - cin), (0, cout_pad - cout)))
    return w.astype(jnp.bfloat16), _pad_bias(b, cout_pad)


def prepare_encoder_params(raw, in_channel, channel, n_res_block, n_res_channel, stride):
    cpad = _round_up(channel, LANE)
    hpad = _round_up(channel // 2, LANE)
    rpad = _round_up(n_res_channel, LANE)
    prep = {}
    if stride == 6:
        prep["conv1"] = _prep_packed4(*raw["conv1"], cin_lane=in_channel, cout_pad=hpad)
        prep["conv2"] = _prep_packed4(*raw["conv2"], cin_lane=hpad, cout_pad=hpad)
        prep["conv3"] = _prep_packed4(*raw["conv3"], cin_lane=hpad, cout_pad=cpad)
        prep["conv4"] = _prep_3x3(*raw["conv4"], cin_pad=cpad, cout_pad=cpad)
    else:
        prep["conv1"] = _prep_packed4(*raw["conv1"], cin_lane=in_channel, cout_pad=hpad)
        prep["conv2"] = _prep_3x3(*raw["conv2"], cin_pad=hpad, cout_pad=cpad)
    for i in range(n_res_block):
        prep[f"res{i}_conv1"] = _prep_3x3(*raw[f"res{i}_conv1"], cin_pad=cpad, cout_pad=rpad)
        prep[f"res{i}_conv2"] = _prep_1x1(*raw[f"res{i}_conv2"], cin_pad=rpad, cout_pad=cpad)
    return prep


# ----------------------------------------------------------------------------
# Encoder forward (matches nn.Sequential semantics of the PyTorch module)
# ----------------------------------------------------------------------------
def encoder_forward(prep, x_nchw, *, stride, n_res_block, channel):
    x = jnp.transpose(x_nchw, (0, 2, 3, 1))                   # NCHW -> NHWC

    head_last_relu = (n_res_block == 0)        # fuse trailing ReLU here if no ResBlocks
    if stride == 6:
        x = conv4x4_s2(x, *prep["conv1"], post_relu=True)
        x = conv4x4_s2(x, *prep["conv2"], post_relu=True)
        x = conv4x4_s2(x, *prep["conv3"], post_relu=True)
        x = conv3x3(x, *prep["conv4"], post_relu=head_last_relu)
    else:  # stride == 2
        x = conv4x4_s2(x, *prep["conv1"], post_relu=True)
        x = conv3x3(x, *prep["conv2"], post_relu=head_last_relu)

    for i in range(n_res_block):
        x = resblock_fused(x, *prep[f"res{i}_conv1"], *prep[f"res{i}_conv2"],
                           final_relu=(i == n_res_block - 1))

    x = x[..., :channel].astype(jnp.float32)                  # drop padded channels
    return jnp.transpose(x, (0, 3, 1, 2))                     # NHWC -> NCHW


# ----------------------------------------------------------------------------
# Pure-JAX (XLA) reference mirroring the PyTorch module, for a tolerance check
# ----------------------------------------------------------------------------
def _conv_ref(x, w, b, stride, padding):
    out = lax.conv_general_dilated(
        x, w, window_strides=(stride, stride),
        padding=[(padding, padding), (padding, padding)],
        dimension_numbers=("NCHW", "OIHW", "NCHW"))
    return out + b[None, :, None, None]


def encoder_reference(raw, x, *, stride, n_res_block):
    if stride == 6:
        x = jax.nn.relu(_conv_ref(x, *raw["conv1"], 2, 1))
        x = jax.nn.relu(_conv_ref(x, *raw["conv2"], 2, 1))
        x = jax.nn.relu(_conv_ref(x, *raw["conv3"], 2, 1))
        x = _conv_ref(x, *raw["conv4"], 1, 1)
    else:
        x = jax.nn.relu(_conv_ref(x, *raw["conv1"], 2, 1))
        x = _conv_ref(x, *raw["conv2"], 1, 1)
    for i in range(n_res_block):
        h = jax.nn.relu(x)
        h = jax.nn.relu(_conv_ref(h, *raw[f"res{i}_conv1"], 1, 1))
        h = _conv_ref(h, *raw[f"res{i}_conv2"], 1, 0)
        x = x + h
    return jax.nn.relu(x)


# ----------------------------------------------------------------------------
# Demo
# ----------------------------------------------------------------------------
if __name__ == "__main__":
    # Encoder(in_channel=4, channel=32, n_res_block=2, n_res_channel=8, stride=2)
    in_channel, channel, n_res_block, n_res_channel, stride = 4, 32, 2, 8, 2
    batch, spatial = 2, 16

    root = jax.random.PRNGKey(0)
    kx, kp = jax.random.split(root)

    x = jax.random.normal(kx, (batch, in_channel, spatial, spatial), jnp.float32)
    raw_params = init_encoder_params(kp, in_channel, channel, n_res_block,
                                     n_res_channel, stride)
    prep_params = prepare_encoder_params(raw_params, in_channel, channel,
                                         n_res_block, n_res_channel, stride)

    fwd = jax.jit(functools.partial(encoder_forward, stride=stride,
                                    n_res_block=n_res_block, channel=channel))
    out = jax.block_until_ready(fwd(prep_params, x))

    expected = (batch, channel, spatial // 2, spatial // 2)
    assert out.shape == expected, (out.shape, expected)
    assert bool(jnp.all(out >= 0.0)), "final ReLU violated"

    ref = encoder_reference(raw_params, x, stride=stride, n_res_block=n_res_block)
    max_err = float(jnp.max(jnp.abs(out - ref)))
    assert max_err < 0.1, f"bf16-matmul result too far from f32 reference: {max_err}"

    print("KERNEL_OK")
</pallas_src>

<mosaic_0001>
module attributes {stable_mosaic.version = 11 : i64} {
  func.func @_tapconv_kernel(%arg0: i32, %arg1: memref<1x5x9x128xbf16, #tpu.memory_space<vmem>>, %arg2: memref<512x128xbf16, #tpu.memory_space<vmem>>, %arg3: memref<1x128xf32, #tpu.memory_space<vmem>>, %arg4: memref<1x4x8x128xbf16, #tpu.memory_space<vmem>>) attributes {dimension_semantics = [#tpu.dimension_semantics<parallel>], iteration_bounds = array<i64: 4>, scalar_prefetch = 0 : i64, scratch_operands = 0 : i64, tpu.core_type = #tpu.core_type<tc>, window_params = [{transform_indices = @transform_0, window_bounds = array<i64: 1, 5, 9, 128>}, {pipeline_mode = #tpu.pipeline_mode<synchronous>, transform_indices = @transform_1, window_bounds = array<i64: 512, 128>}, {pipeline_mode = #tpu.pipeline_mode<synchronous>, transform_indices = @transform_2, window_bounds = array<i64: 1, 128>}, {transform_indices = @transform_3, window_bounds = array<i64: 1, 4, 8, 128>}]} {
    %c0 = arith.constant 0 : index
    %c0_0 = arith.constant 0 : index
    %c0_1 = arith.constant 0 : index
    %c0_2 = arith.constant 0 : index
    %0 = vector.load %arg1[%c0, %c0_0, %c0_1, %c0_2] : memref<1x5x9x128xbf16, #tpu.memory_space<vmem>>, vector<1x5x9x128xbf16>
    %1 = vector.shape_cast %0 : vector<1x5x9x128xbf16> to vector<5x9x128xbf16>
    %2 = vector.extract_strided_slice %1 {offsets = [0, 0, 0], sizes = [5, 8, 128], strides = [1, 1, 1]} : vector<5x9x128xbf16> to vector<5x8x128xbf16>
    %3 = vector.shape_cast %2 : vector<5x8x128xbf16> to vector<40x128xbf16>
    %4 = vector.extract_strided_slice %1 {offsets = [0, 1, 0], sizes = [5, 8, 128], strides = [1, 1, 1]} : vector<5x9x128xbf16> to vector<5x8x128xbf16>
    %5 = vector.shape_cast %4 : vector<5x8x128xbf16> to vector<40x128xbf16>
    %6 = vector.extract_strided_slice %3 {offsets = [0, 0], sizes = [32, 128], strides = [1, 1]} : vector<40x128xbf16> to vector<32x128xbf16>
    %7 = vector.extract_strided_slice %5 {offsets = [0, 0], sizes = [32, 128], strides = [1, 1]} : vector<40x128xbf16> to vector<32x128xbf16>
    %8 = vector.extract_strided_slice %3 {offsets = [8, 0], sizes = [32, 128], strides = [1, 1]} : vector<40x128xbf16> to vector<32x128xbf16>
    %9 = vector.extract_strided_slice %5 {offsets = [8, 0], sizes = [32, 128], strides = [1, 1]} : vector<40x128xbf16> to vector<32x128xbf16>
    %10 = tpu.concatenate %6, %7, %8, %9 in 1 : vector<32x128xbf16>, vector<32x128xbf16>, vector<32x128xbf16>, vector<32x128xbf16> -> vector<32x512xbf16>
    %c0_3 = arith.constant 0 : index
    %c0_4 = arith.constant 0 : index
    %11 = vector.load %arg2[%c0_3, %c0_4] : memref<512x128xbf16, #tpu.memory_space<vmem>>, vector<512x128xbf16>
    %cst = arith.constant dense<0.000000e+00> : vector<32x128xf32>
    %12 = tpu.matmul %10, %11, %cst {dimension_numbers = #tpu.dot_dimension_numbers<[1], [0], [0], [1], [0, 0, 1, 1], [], []>} : vector<32x512xbf16>, vector<512x128xbf16>, vector<32x128xf32> -> vector<32x128xf32>
    %c0_5 = arith.constant 0 : index
    %c0_6 = arith.constant 0 : index
    %13 = vector.load %arg3[%c0_5, %c0_6] : memref<1x128xf32, #tpu.memory_space<vmem>>, vector<1x128xf32>
    %14 = vector.broadcast %13 : vector<1x128xf32> to vector<32x128xf32>
    %15 = arith.addf %12, %14 : vector<32x128xf32>
    %cst_7 = arith.constant 0.000000e+00 : f32
    %16 = vector.broadcast %cst_7 : f32 to vector<32x128xf32>
    %17 = arith.maximumf %15, %16 : vector<32x128xf32>
    %18 = vector.shape_cast %17 : vector<32x128xf32> to vector<1x4x8x128xf32>
    %19 = arith.truncf %18 : vector<1x4x8x128xf32> to vector<1x4x8x128xbf16>
    %c0_8 = arith.constant 0 : index
    %c0_9 = arith.constant 0 : index
    %c0_10 = arith.constant 0 : index
    %c0_11 = arith.constant 0 : index
    %20 = vector.load %arg4[%c0_8, %c0_9, %c0_10, %c0_11] : memref<1x4x8x128xbf16, #tpu.memory_space<vmem>>, vector<1x4x8x128xbf16>
    tpu.vector_store %arg4[%c0_8, %c0_9, %c0_10, %c0_11], %19 {strides = array<i32>} : memref<1x4x8x128xbf16, #tpu.memory_space<vmem>>, vector<1x4x8x128xbf16>,
    return
  }
  func.func @transform_0(%arg0: i32) -> (i32, i32, i32, i32) {
    %c0_i32 = arith.constant 0 : i32
    %c0_i32_0 = arith.constant 0 : i32
    %c0_i32_1 = arith.constant 0 : i32
    %c0_i32_2 = arith.constant 0 : i32
    return %arg0, %c0_i32, %c0_i32_0, %c0_i32_1 : i32, i32, i32, i32
  }
  func.func @transform_1(%arg0: i32) -> (i32, i32) {
    %c0_i32 = arith.constant 0 : i32
    %c0_i32_0 = arith.constant 0 : i32
    %c0_i32_1 = arith.constant 0 : i32
    return %c0_i32, %c0_i32_0 : i32, i32
  }
  func.func @transform_2(%arg0: i32) -> (i32, i32) {
    %c0_i32 = arith.constant 0 : i32
    %c0_i32_0 = arith.constant 0 : i32
    %c0_i32_1 = arith.constant 0 : i32
    return %c0_i32, %c0_i32_0 : i32, i32
  }
  func.func @transform_3(%arg0: i32) -> (i32, i32, i32, i32) {
    %c0_i32 = arith.constant 0 : i32
    %c0_i32_0 = arith.constant 0 : i32
    %c0_i32_1 = arith.constant 0 : i32
    %c0_i32_2 = arith.constant 0 : i32
    return %arg0, %c0_i32, %c0_i32_0, %c0_i32_1 : i32, i32, i32, i32
  }
}

module attributes {stable_mosaic.version = 11 : i64} {
  func.func @_tapconv_kernel(%arg0: i32, %arg1: memref<1x6x10x128xbf16, #tpu.memory_space<vmem>>, %arg2: memref<1152x128xbf16, #tpu.memory_space<vmem>>, %arg3: memref<1x128xf32, #tpu.memory_space<vmem>>, %arg4: memref<1x4x8x128xbf16, #tpu.memory_space<vmem>>) attributes {dimension_semantics = [#tpu.dimension_semantics<parallel>], iteration_bounds = array<i64: 4>, scalar_prefetch = 0 : i64, scratch_operands = 0 : i64, tpu.core_type = #tpu.core_type<tc>, window_params = [{transform_indices = @transform_0, window_bounds = array<i64: 1, 6, 10, 128>}, {pipeline_mode = #tpu.pipeline_mode<synchronous>, transform_indices = @transform_1, window_bounds = array<i64: 1152, 128>}, {pipeline_mode = #tpu.pipeline_mode<synchronous>, transform_indices = @transform_2, window_bounds = array<i64: 1, 128>}, {transform_indices = @transform_3, window_bounds = array<i64: 1, 4, 8, 128>}]} {
    %c0 = arith.constant 0 : index
    %c0_0 = arith.constant 0 : index
    %c0_1 = arith.constant 0 : index
    %c0_2 = arith.constant 0 : index
    %0 = vector.load %arg1[%c0, %c0_0, %c0_1, %c0_2] : memref<1x6x10x128xbf16, #tpu.memory_space<vmem>>, vector<1x6x10x128xbf16>
    %1 = vector.shape_cast %0 : vector<1x6x10x128xbf16> to vector<6x10x128xbf16>
    %2 = vector.extract_strided_slice %1 {offsets = [0, 0, 0], sizes = [6, 8, 128], strides = [1, 1, 1]} : vector<6x10x128xbf16> to vector<6x8x128xbf16>
    %3 = vector.shape_cast %2 : vector<6x8x128xbf16> to vector<48x128xbf16>
    %4 = vector.extract_strided_slice %1 {offsets = [0, 1, 0], sizes = [6, 8, 128], strides = [1, 1, 1]} : vector<6x10x128xbf16> to vector<6x8x128xbf16>
    %5 = vector.shape_cast %4 : vector<6x8x128xbf16> to vector<48x128xbf16>
    %6 = vector.extract_strided_slice %1 {offsets = [0, 2, 0], sizes = [6, 8, 128], strides = [1, 1, 1]} : vector<6x10x128xbf16> to vector<6x8x128xbf16>
    %7 = vector.shape_cast %6 : vector<6x8x128xbf16> to vector<48x128xbf16>
    %8 = vector.extract_strided_slice %3 {offsets = [0, 0], sizes = [32, 128], strides = [1, 1]} : vector<48x128xbf16> to vector<32x128xbf16>
    %9 = vector.extract_strided_slice %5 {offsets = [0, 0], sizes = [32, 128], strides = [1, 1]} : vector<48x128xbf16> to vector<32x128xbf16>
    %10 = vector.extract_strided_slice %7 {offsets = [0, 0], sizes = [32, 128], strides = [1, 1]} : vector<48x128xbf16> to vector<32x128xbf16>
    %11 = vector.extract_strided_slice %3 {offsets = [8, 0], sizes = [32, 128], strides = [1, 1]} : vector<48x128xbf16> to vector<32x128xbf16>
    %12 = vector.extract_strided_slice %5 {offsets = [8, 0], sizes = [32, 128], strides = [1, 1]} : vector<48x128xbf16> to vector<32x128xbf16>
    %13 = vector.extract_strided_slice %7 {offsets = [8, 0], sizes = [32, 128], strides = [1, 1]} : vector<48x128xbf16> to vector<32x128xbf16>
    %14 = vector.extract_strided_slice %3 {offsets = [16, 0], sizes = [32, 128], strides = [1, 1]} : vector<48x128xbf16> to vector<32x128xbf16>
    %15 = vector.extract_strided_slice %5 {offsets = [16, 0], sizes = [32, 128], strides = [1, 1]} : vector<48x128xbf16> to vector<32x128xbf16>
    %16 = vector.extract_strided_slice %7 {offsets = [16, 0], sizes = [32, 128], strides = [1, 1]} : vector<48x128xbf16> to vector<32x128xbf16>
    %17 = tpu.concatenate %8, %9, %10, %11, %12, %13, %14, %15, %16 in 1 : vector<32x128xbf16>, vector<32x128xbf16>, vector<32x128xbf16>, vector<32x128xbf16>, vector<32x128xbf16>, vector<32x128xbf16>, vector<32x128xbf16>, vector<32x128xbf16>, vector<32x128xbf16> -> vector<32x1152xbf16>
    %c0_3 = arith.constant 0 : index
    %c0_4 = arith.constant 0 : index
    %18 = vector.load %arg2[%c0_3, %c0_4] : memref<1152x128xbf16, #tpu.memory_space<vmem>>, vector<1152x128xbf16>
    %cst = arith.constant dense<0.000000e+00> : vector<32x128xf32>
    %19 = tpu.matmul %17, %18, %cst {dimension_numbers = #tpu.dot_dimension_numbers<[1], [0], [0], [1], [0, 0, 1, 1], [], []>} : vector<32x1152xbf16>, vector<1152x128xbf16>, vector<32x128xf32> -> vector<32x128xf32>
    %c0_5 = arith.constant 0 : index
    %c0_6 = arith.constant 0 : index
    %20 = vector.load %arg3[%c0_5, %c0_6] : memref<1x128xf32, #tpu.memory_space<vmem>>, vector<1x128xf32>
    %21 = vector.broadcast %20 : vector<1x128xf32> to vector<32x128xf32>
    %22 = arith.addf %19, %21 : vector<32x128xf32>
    %23 = vector.shape_cast %22 : vector<32x128xf32> to vector<1x4x8x128xf32>
    %24 = arith.truncf %23 : vector<1x4x8x128xf32> to vector<1x4x8x128xbf16>
    %c0_7 = arith.constant 0 : index
    %c0_8 = arith.constant 0 : index
    %c0_9 = arith.constant 0 : index
    %c0_10 = arith.constant 0 : index
    %25 = vector.load %arg4[%c0_7, %c0_8, %c0_9, %c0_10] : memref<1x4x8x128xbf16, #tpu.memory_space<vmem>>, vector<1x4x8x128xbf16>
    tpu.vector_store %arg4[%c0_7, %c0_8, %c0_9, %c0_10], %24 {strides = array<i32>} : memref<1x4x8x128xbf16, #tpu.memory_space<vmem>>, vector<1x4x8x128xbf16>,
    return
  }
  func.func @transform_0(%arg0: i32) -> (i32, i32, i32, i32) {
    %c0_i32 = arith.constant 0 : i32
    %c0_i32_0 = arith.constant 0 : i32
    %c0_i32_1 = arith.constant 0 : i32
    %c0_i32_2 = arith.constant 0 : i32
    return %arg0, %c0_i32, %c0_i32_0, %c0_i32_1 : i32, i32, i32, i32
  }
  func.func @transform_1(%arg0: i32) -> (i32, i32) {
    %c0_i32 = arith.constant 0 : i32
    %c0_i32_0 = arith.constant 0 : i32
    %c0_i32_1 = arith.constant 0 : i32
    return %c0_i32, %c0_i32_0 : i32, i32
  }
  func.func @transform_2(%arg0: i32) -> (i32, i32) {
    %c0_i32 = arith.constant 0 : i32
    %c0_i32_0 = arith.constant 0 : i32
    %c0_i32_1 = arith.constant 0 : i32
    return %c0_i32, %c0_i32_0 : i32, i32
  }
  func.func @transform_3(%arg0: i32) -> (i32, i32, i32, i32) {
    %c0_i32 = arith.constant 0 : i32
    %c0_i32_0 = arith.constant 0 : i32
    %c0_i32_1 = arith.constant 0 : i32
    %c0_i32_2 = arith.constant 0 : i32
    return %arg0, %c0_i32, %c0_i32_0, %c0_i32_1 : i32, i32, i32, i32
  }
}

module attributes {stable_mosaic.version = 11 : i64} {
  func.func @_resblock_kernel(%arg0: i32, %arg1: memref<1x6x10x128xbf16, #tpu.memory_space<vmem>>, %arg2: memref<1152x128xbf16, #tpu.memory_space<vmem>>, %arg3: memref<1x128xf32, #tpu.memory_space<vmem>>, %arg4: memref<128x128xbf16, #tpu.memory_space<vmem>>, %arg5: memref<1x128xf32, #tpu.memory_space<vmem>>, %arg6: memref<1x4x8x128xbf16, #tpu.memory_space<vmem>>) attributes {dimension_semantics = [#tpu.dimension_semantics<parallel>], iteration_bounds = array<i64: 4>, scalar_prefetch = 0 : i64, scratch_operands = 0 : i64, tpu.core_type = #tpu.core_type<tc>, window_params = [{transform_indices = @transform_0, window_bounds = array<i64: 1, 6, 10, 128>}, {pipeline_mode = #tpu.pipeline_mode<synchronous>, transform_indices = @transform_1, window_bounds = array<i64: 1152, 128>}, {pipeline_mode = #tpu.pipeline_mode<synchronous>, transform_indices = @transform_2, window_bounds = array<i64: 1, 128>}, {pipeline_mode = #tpu.pipeline_mode<synchronous>, transform_indices = @transform_3, window_bounds = array<i64: 128, 128>}, {pipeline_mode = #tpu.pipeline_mode<synchronous>, transform_indices = @transform_4, window_bounds = array<i64: 1, 128>}, {transform_indices = @transform_5, window_bounds = array<i64: 1, 4, 8, 128>}]} {
    %c0 = arith.constant 0 : index
    %c0_0 = arith.constant 0 : index
    %c0_1 = arith.constant 0 : index
    %c0_2 = arith.constant 0 : index
    %0 = vector.load %arg1[%c0, %c0_0, %c0_1, %c0_2] : memref<1x6x10x128xbf16, #tpu.memory_space<vmem>>, vector<1x6x10x128xbf16>
    %1 = vector.shape_cast %0 : vector<1x6x10x128xbf16> to vector<6x10x128xbf16>
    %2 = vector.extract_strided_slice %1 {offsets = [1, 1, 0], sizes = [4, 8, 128], strides = [1, 1, 1]} : vector<6x10x128xbf16> to vector<4x8x128xbf16>
    %3 = vector.shape_cast %2 : vector<4x8x128xbf16> to vector<32x128xbf16>
    %4 = arith.extf %3 : vector<32x128xbf16> to vector<32x128xf32>
    %cst = arith.constant 0.000000e+00 : bf16
    %5 = vector.broadcast %cst : bf16 to vector<6x10x128xbf16>
    %6 = arith.maximumf %1, %5 : vector<6x10x128xbf16>
    %7 = vector.extract_strided_slice %6 {offsets = [0, 0, 0], sizes = [6, 8, 128], strides = [1, 1, 1]} : vector<6x10x128xbf16> to vector<6x8x128xbf16>
    %8 = vector.shape_cast %7 : vector<6x8x128xbf16> to vector<48x128xbf16>
    %9 = vector.extract_strided_slice %6 {offsets = [0, 1, 0], sizes = [6, 8, 128], strides = [1, 1, 1]} : vector<6x10x128xbf16> to vector<6x8x128xbf16>
    %10 = vector.shape_cast %9 : vector<6x8x128xbf16> to vector<48x128xbf16>
    %11 = vector.extract_strided_slice %6 {offsets = [0, 2, 0], sizes = [6, 8, 128], strides = [1, 1, 1]} : vector<6x10x128xbf16> to vector<6x8x128xbf16>
    %12 = vector.shape_cast %11 : vector<6x8x128xbf16> to vector<48x128xbf16>
    %13 = vector.extract_strided_slice %8 {offsets = [0, 0], sizes = [32, 128], strides = [1, 1]} : vector<48x128xbf16> to vector<32x128xbf16>
    %14 = vector.extract_strided_slice %10 {offsets = [0, 0], sizes = [32, 128], strides = [1, 1]} : vector<48x128xbf16> to vector<32x128xbf16>
    %15 = vector.extract_strided_slice %12 {offsets = [0, 0], sizes = [32, 128], strides = [1, 1]} : vector<48x128xbf16> to vector<32x128xbf16>
    %16 = vector.extract_strided_slice %8 {offsets = [8, 0], sizes = [32, 128], strides = [1, 1]} : vector<48x128xbf16> to vector<32x128xbf16>
    %17 = vector.extract_strided_slice %10 {offsets = [8, 0], sizes = [32, 128], strides = [1, 1]} : vector<48x128xbf16> to vector<32x128xbf16>
    %18 = vector.extract_strided_slice %12 {offsets = [8, 0], sizes = [32, 128], strides = [1, 1]} : vector<48x128xbf16> to vector<32x128xbf16>
    %19 = vector.extract_strided_slice %8 {offsets = [16, 0], sizes = [32, 128], strides = [1, 1]} : vector<48x128xbf16> to vector<32x128xbf16>
    %20 = vector.extract_strided_slice %10 {offsets = [16, 0], sizes = [32, 128], strides = [1, 1]} : vector<48x128xbf16> to vector<32x128xbf16>
    %21 = vector.extract_strided_slice %12 {offsets = [16, 0], sizes = [32, 128], strides = [1, 1]} : vector<48x128xbf16> to vector<32x128xbf16>
    %22 = tpu.concatenate %13, %14, %15, %16, %17, %18, %19, %20, %21 in 1 : vector<32x128xbf16>, vector<32x128xbf16>, vector<32x128xbf16>, vector<32x128xbf16>, vector<32x128xbf16>, vector<32x128xbf16>, vector<32x128xbf16>, vector<32x128xbf16>, vector<32x128xbf16> -> vector<32x1152xbf16>
    %c0_3 = arith.constant 0 : index
    %c0_4 = arith.constant 0 : index
    %23 = vector.load %arg2[%c0_3, %c0_4] : memref<1152x128xbf16, #tpu.memory_space<vmem>>, vector<1152x128xbf16>
    %cst_5 = arith.constant dense<0.000000e+00> : vector<32x128xf32>
    %24 = tpu.matmul %22, %23, %cst_5 {dimension_numbers = #tpu.dot_dimension_numbers<[1], [0], [0], [1], [0, 0, 1, 1], [], []>} : vector<32x1152xbf16>, vector<1152x128xbf16>, vector<32x128xf32> -> vector<32x128xf32>
    %c0_6 = arith.constant 0 : index
    %c0_7 = arith.constant 0 : index
    %25 = vector.load %arg3[%c0_6, %c0_7] : memref<1x128xf32, #tpu.memory_space<vmem>>, vector<1x128xf32>
    %26 = vector.broadcast %25 : vector<1x128xf32> to vector<32x128xf32>
    %27 = arith.addf %24, %26 : vector<32x128xf32>
    %cst_8 = arith.constant 0.000000e+00 : f32
    %28 = vector.broadcast %cst_8 : f32 to vector<32x128xf32>
    %29 = arith.maximumf %27, %28 : vector<32x128xf32>
    %30 = arith.truncf %29 : vector<32x128xf32> to vector<32x128xbf16>
    %c0_9 = arith.constant 0 : index
    %c0_10 = arith.constant 0 : index
    %31 = vector.load %arg4[%c0_9, %c0_10] : memref<128x128xbf16, #tpu.memory_space<vmem>>, vector<128x128xbf16>
    %cst_11 = arith.constant dense<0.000000e+00> : vector<32x128xf32>
    %32 = tpu.matmul %30, %31, %cst_11 {dimension_numbers = #tpu.dot_dimension_numbers<[1], [0], [0], [1], [0, 0, 1, 1], [], []>} : vector<32x128xbf16>, vector<128x128xbf16>, vector<32x128xf32> -> vector<32x128xf32>
    %c0_12 = arith.constant 0 : index
    %c0_13 = arith.constant 0 : index
    %33 = vector.load %arg5[%c0_12, %c0_13] : memref<1x128xf32, #tpu.memory_space<vmem>>, vector<1x128xf32>
    %34 = vector.broadcast %33 : vector<1x128xf32> to vector<32x128xf32>
    %35 = arith.addf %32, %34 : vector<32x128xf32>
    %36 = arith.addf %35, %4 : vector<32x128xf32>
    %37 = vector.shape_cast %36 : vector<32x128xf32> to vector<1x4x8x128xf32>
    %38 = arith.truncf %37 : vector<1x4x8x128xf32> to vector<1x4x8x128xbf16>
    %c0_14 = arith.constant 0 : index
    %c0_15 = arith.constant 0 : index
    %c0_16 = arith.constant 0 : index
    %c0_17 = arith.constant 0 : index
    %39 = vector.load %arg6[%c0_14, %c0_15, %c0_16, %c0_17] : memref<1x4x8x128xbf16, #tpu.memory_space<vmem>>, vector<1x4x8x128xbf16>
    tpu.vector_store %arg6[%c0_14, %c0_15, %c0_16, %c0_17], %38 {strides = array<i32>} : memref<1x4x8x128xbf16, #tpu.memory_space<vmem>>, vector<1x4x8x128xbf16>,
    return
  }
  func.func @transform_0(%arg0: i32) -> (i32, i32, i32, i32) {
    %c0_i32 = arith.constant 0 : i32
    %c0_i32_0 = arith.constant 0 : i32
    %c0_i32_1 = arith.constant 0 : i32
    %c0_i32_2 = arith.constant 0 : i32
    return %arg0, %c0_i32, %c0_i32_0, %c0_i32_1 : i32, i32, i32, i32
  }
  func.func @transform_1(%arg0: i32) -> (i32, i32) {
    %c0_i32 = arith.constant 0 : i32
    %c0_i32_0 = arith.constant 0 : i32
    %c0_i32_1 = arith.constant 0 : i32
    return %c0_i32, %c0_i32_0 : i32, i32
  }
  func.func @transform_2(%arg0: i32) -> (i32, i32) {
    %c0_i32 = arith.constant 0 : i32
    %c0_i32_0 = arith.constant 0 : i32
    %c0_i32_1 = arith.constant 0 : i32
    return %c0_i32, %c0_i32_0 : i32, i32
  }
  func.func @transform_3(%arg0: i32) -> (i32, i32) {
    %c0_i32 = arith.constant 0 : i32
    %c0_i32_0 = arith.constant 0 : i32
    %c0_i32_1 = arith.constant 0 : i32
    return %c0_i32, %c0_i32_0 : i32, i32
  }
  func.func @transform_4(%arg0: i32) -> (i32, i32) {
    %c0_i32 = arith.constant 0 : i32
    %c0_i32_0 = arith.constant 0 : i32
    %c0_i32_1 = arith.constant 0 : i32
    return %c0_i32, %c0_i32_0 : i32, i32
  }
  func.func @transform_5(%arg0: i32) -> (i32, i32, i32, i32) {
    %c0_i32 = arith.constant 0 : i32
    %c0_i32_0 = arith.constant 0 : i32
    %c0_i32_1 = arith.constant 0 : i32
    %c0_i32_2 = arith.constant 0 : i32
    return %arg0, %c0_i32, %c0_i32_0, %c0_i32_1 : i32, i32, i32, i32
  }
}

module attributes {stable_mosaic.version = 11 : i64} {
  func.func @_resblock_kernel(%arg0: i32, %arg1: memref<1x6x10x128xbf16, #tpu.memory_space<vmem>>, %arg2: memref<1152x128xbf16, #tpu.memory_space<vmem>>, %arg3: memref<1x128xf32, #tpu.memory_space<vmem>>, %arg4: memref<128x128xbf16, #tpu.memory_space<vmem>>, %arg5: memref<1x128xf32, #tpu.memory_space<vmem>>, %arg6: memref<1x4x8x128xbf16, #tpu.memory_space<vmem>>) attributes {dimension_semantics = [#tpu.dimension_semantics<parallel>], iteration_bounds = array<i64: 4>, scalar_prefetch = 0 : i64, scratch_operands = 0 : i64, tpu.core_type = #tpu.core_type<tc>, window_params = [{transform_indices = @transform_0, window_bounds = array<i64: 1, 6, 10, 128>}, {pipeline_mode = #tpu.pipeline_mode<synchronous>, transform_indices = @transform_1, window_bounds = array<i64: 1152, 128>}, {pipeline_mode = #tpu.pipeline_mode<synchronous>, transform_indices = @transform_2, window_bounds = array<i64: 1, 128>}, {pipeline_mode = #tpu.pipeline_mode<synchronous>, transform_indices = @transform_3, window_bounds = array<i64: 128, 128>}, {pipeline_mode = #tpu.pipeline_mode<synchronous>, transform_indices = @transform_4, window_bounds = array<i64: 1, 128>}, {transform_indices = @transform_5, window_bounds = array<i64: 1, 4, 8, 128>}]} {
    %c0 = arith.constant 0 : index
    %c0_0 = arith.constant 0 : index
    %c0_1 = arith.constant 0 : index
    %c0_2 = arith.constant 0 : index
    %0 = vector.load %arg1[%c0, %c0_0, %c0_1, %c0_2] : memref<1x6x10x128xbf16, #tpu.memory_space<vmem>>, vector<1x6x10x128xbf16>
    %1 = vector.shape_cast %0 : vector<1x6x10x128xbf16> to vector<6x10x128xbf16>
    %2 = vector.extract_strided_slice %1 {offsets = [1, 1, 0], sizes = [4, 8, 128], strides = [1, 1, 1]} : vector<6x10x128xbf16> to vector<4x8x128xbf16>
    %3 = vector.shape_cast %2 : vector<4x8x128xbf16> to vector<32x128xbf16>
    %4 = arith.extf %3 : vector<32x128xbf16> to vector<32x128xf32>
    %cst = arith.constant 0.000000e+00 : bf16
    %5 = vector.broadcast %cst : bf16 to vector<6x10x128xbf16>
    %6 = arith.maximumf %1, %5 : vector<6x10x128xbf16>
    %7 = vector.extract_strided_slice %6 {offsets = [0, 0, 0], sizes = [6, 8, 128], strides = [1, 1, 1]} : vector<6x10x128xbf16> to vector<6x8x128xbf16>
    %8 = vector.shape_cast %7 : vector<6x8x128xbf16> to vector<48x128xbf16>
    %9 = vector.extract_strided_slice %6 {offsets = [0, 1, 0], sizes = [6, 8, 128], strides = [1, 1, 1]} : vector<6x10x128xbf16> to vector<6x8x128xbf16>
    %10 = vector.shape_cast %9 : vector<6x8x128xbf16> to vector<48x128xbf16>
    %11 = vector.extract_strided_slice %6 {offsets = [0, 2, 0], sizes = [6, 8, 128], strides = [1, 1, 1]} : vector<6x10x128xbf16> to vector<6x8x128xbf16>
    %12 = vector.shape_cast %11 : vector<6x8x128xbf16> to vector<48x128xbf16>
    %13 = vector.extract_strided_slice %8 {offsets = [0, 0], sizes = [32, 128], strides = [1, 1]} : vector<48x128xbf16> to vector<32x128xbf16>
    %14 = vector.extract_strided_slice %10 {offsets = [0, 0], sizes = [32, 128], strides = [1, 1]} : vector<48x128xbf16> to vector<32x128xbf16>
    %15 = vector.extract_strided_slice %12 {offsets = [0, 0], sizes = [32, 128], strides = [1, 1]} : vector<48x128xbf16> to vector<32x128xbf16>
    %16 = vector.extract_strided_slice %8 {offsets = [8, 0], sizes = [32, 128], strides = [1, 1]} : vector<48x128xbf16> to vector<32x128xbf16>
    %17 = vector.extract_strided_slice %10 {offsets = [8, 0], sizes = [32, 128], strides = [1, 1]} : vector<48x128xbf16> to vector<32x128xbf16>
    %18 = vector.extract_strided_slice %12 {offsets = [8, 0], sizes = [32, 128], strides = [1, 1]} : vector<48x128xbf16> to vector<32x128xbf16>
    %19 = vector.extract_strided_slice %8 {offsets = [16, 0], sizes = [32, 128], strides = [1, 1]} : vector<48x128xbf16> to vector<32x128xbf16>
    %20 = vector.extract_strided_slice %10 {offsets = [16, 0], sizes = [32, 128], strides = [1, 1]} : vector<48x128xbf16> to vector<32x128xbf16>
    %21 = vector.extract_strided_slice %12 {offsets = [16, 0], sizes = [32, 128], strides = [1, 1]} : vector<48x128xbf16> to vector<32x128xbf16>
    %22 = tpu.concatenate %13, %14, %15, %16, %17, %18, %19, %20, %21 in 1 : vector<32x128xbf16>, vector<32x128xbf16>, vector<32x128xbf16>, vector<32x128xbf16>, vector<32x128xbf16>, vector<32x128xbf16>, vector<32x128xbf16>, vector<32x128xbf16>, vector<32x128xbf16> -> vector<32x1152xbf16>
    %c0_3 = arith.constant 0 : index
    %c0_4 = arith.constant 0 : index
    %23 = vector.load %arg2[%c0_3, %c0_4] : memref<1152x128xbf16, #tpu.memory_space<vmem>>, vector<1152x128xbf16>
    %cst_5 = arith.constant dense<0.000000e+00> : vector<32x128xf32>
    %24 = tpu.matmul %22, %23, %cst_5 {dimension_numbers = #tpu.dot_dimension_numbers<[1], [0], [0], [1], [0, 0, 1, 1], [], []>} : vector<32x1152xbf16>, vector<1152x128xbf16>, vector<32x128xf32> -> vector<32x128xf32>
    %c0_6 = arith.constant 0 : index
    %c0_7 = arith.constant 0 : index
    %25 = vector.load %arg3[%c0_6, %c0_7] : memref<1x128xf32, #tpu.memory_space<vmem>>, vector<1x128xf32>
    %26 = vector.broadcast %25 : vector<1x128xf32> to vector<32x128xf32>
    %27 = arith.addf %24, %26 : vector<32x128xf32>
    %cst_8 = arith.constant 0.000000e+00 : f32
    %28 = vector.broadcast %cst_8 : f32 to vector<32x128xf32>
    %29 = arith.maximumf %27, %28 : vector<32x128xf32>
    %30 = arith.truncf %29 : vector<32x128xf32> to vector<32x128xbf16>
    %c0_9 = arith.constant 0 : index
    %c0_10 = arith.constant 0 : index
    %31 = vector.load %arg4[%c0_9, %c0_10] : memref<128x128xbf16, #tpu.memory_space<vmem>>, vector<128x128xbf16>
    %cst_11 = arith.constant dense<0.000000e+00> : vector<32x128xf32>
    %32 = tpu.matmul %30, %31, %cst_11 {dimension_numbers = #tpu.dot_dimension_numbers<[1], [0], [0], [1], [0, 0, 1, 1], [], []>} : vector<32x128xbf16>, vector<128x128xbf16>, vector<32x128xf32> -> vector<32x128xf32>
    %c0_12 = arith.constant 0 : index
    %c0_13 = arith.constant 0 : index
    %33 = vector.load %arg5[%c0_12, %c0_13] : memref<1x128xf32, #tpu.memory_space<vmem>>, vector<1x128xf32>
    %34 = vector.broadcast %33 : vector<1x128xf32> to vector<32x128xf32>
    %35 = arith.addf %32, %34 : vector<32x128xf32>
    %36 = arith.addf %35, %4 : vector<32x128xf32>
    %cst_14 = arith.constant 0.000000e+00 : f32
    %37 = vector.broadcast %cst_14 : f32 to vector<32x128xf32>
    %38 = arith.maximumf %36, %37 : vector<32x128xf32>
    %39 = vector.shape_cast %38 : vector<32x128xf32> to vector<1x4x8x128xf32>
    %40 = arith.truncf %39 : vector<1x4x8x128xf32> to vector<1x4x8x128xbf16>
    %c0_15 = arith.constant 0 : index
    %c0_16 = arith.constant 0 : index
    %c0_17 = arith.constant 0 : index
    %c0_18 = arith.constant 0 : index
    %41 = vector.load %arg6[%c0_15, %c0_16, %c0_17, %c0_18] : memref<1x4x8x128xbf16, #tpu.memory_space<vmem>>, vector<1x4x8x128xbf16>
    tpu.vector_store %arg6[%c0_15, %c0_16, %c0_17, %c0_18], %40 {strides = array<i32>} : memref<1x4x8x128xbf16, #tpu.memory_space<vmem>>, vector<1x4x8x128xbf16>,
    return
  }
  func.func @transform_0(%arg0: i32) -> (i32, i32, i32, i32) {
    %c0_i32 = arith.constant 0 : i32
    %c0_i32_0 = arith.constant 0 : i32
    %c0_i32_1 = arith.constant 0 : i32
    %c0_i32_2 = arith.constant 0 : i32
    return %arg0, %c0_i32, %c0_i32_0, %c0_i32_1 : i32, i32, i32, i32
  }
  func.func @transform_1(%arg0: i32) -> (i32, i32) {
    %c0_i32 = arith.constant 0 : i32
    %c0_i32_0 = arith.constant 0 : i32
    %c0_i32_1 = arith.constant 0 : i32
    return %c0_i32, %c0_i32_0 : i32, i32
  }
  func.func @transform_2(%arg0: i32) -> (i32, i32) {
    %c0_i32 = arith.constant 0 : i32
    %c0_i32_0 = arith.constant 0 : i32
    %c0_i32_1 = arith.constant 0 : i32
    return %c0_i32, %c0_i32_0 : i32, i32
  }
  func.func @transform_3(%arg0: i32) -> (i32, i32) {
    %c0_i32 = arith.constant 0 : i32
    %c0_i32_0 = arith.constant 0 : i32
    %c0_i32_1 = arith.constant 0 : i32
    return %c0_i32, %c0_i32_0 : i32, i32
  }
  func.func @transform_4(%arg0: i32) -> (i32, i32) {
    %c0_i32 = arith.constant 0 : i32
    %c0_i32_0 = arith.constant 0 : i32
    %c0_i32_1 = arith.constant 0 : i32
    return %c0_i32, %c0_i32_0 : i32, i32
  }
  func.func @transform_5(%arg0: i32) -> (i32, i32, i32, i32) {
    %c0_i32 = arith.constant 0 : i32
    %c0_i32_0 = arith.constant 0 : i32
    %c0_i32_1 = arith.constant 0 : i32
    %c0_i32_2 = arith.constant 0 : i32
    return %arg0, %c0_i32, %c0_i32_0, %c0_i32_1 : i32, i32, i32, i32
  }
}

</mosaic_0001>

<llo_original>
// kernel: encoder_forward.4
$region0: #{encoder_forward.4}
  #allocation0 [shape = 'u32[]', space=smem, size = 0x4, offset = 0x4, fixed_abs, tag = 'smem constant byte address 0x4 - core index']
  #allocation1 [shape = 'u32[72,128]{1,0:T(1,128)}', space=vmem, size = 0x9000, scoped, tag = 'internal scratch']
  %s0 = inlined_call_operand.vmem [shape: bf16[4,5,9,128], index: 0, kind: input, shape index: {}]
  %s1 = inlined_call_operand.vmem [shape: bf16[512,128], index: 1, kind: input, shape index: {}]
  %s2 = inlined_call_operand.vmem [shape: f32[1,128], index: 2, kind: input, shape index: {}]
  %s3 = inlined_call_operand.vmem [shape: bf16[4,4,8,128], index: 3, kind: output, shape index: {}]
  %s4 = sld [smem:[#allocation0]]
  $region45: #{encoder_forward.4} parent=0
    _
  %s6 = ssub.s32 1, %s4
  %s7 = scalar_select 0, %s6, %s4
  loop: start=0, step=1, limit=6
  $region2: #{encoder_forward.4} parent=0 // loop_pre_header
    _
  $region3: #{encoder_forward.4} parent=0 // loop_header
    %s9 = sphi 0, %s13
    %p10 = scmp.ge.s32.totalorder %s9, 6
    %s19 = sphi 0, %s21
    %s22 = sphi 0, %s19
    %s23 = sphi 0, %s22
    %s39 = sphi 0, %s23
    %s43 = sphi 0, %s43
    %s45 = sphi 0, %s43
    %s46 = sphi 0, %s45
    %s60 = sphi 0, %s46
    %s64 = sphi 0, %s64
    %s66 = sphi 0, %s64
    %s67 = sphi 0, %s66
    %s81 = sphi 0, %s67
    %s87 = sphi 0, %s89
    %s90 = sphi 0, %s87
    %s91 = sphi 0, %s90
    %s107 = sphi 0, %s91
  $region4: #{encoder_forward.4} parent=0 // loop_header_branch
    %12 = sbr.rel (%p10) target = $region8
  $region5: #{encoder_forward.4} parent=0 // loop_body
    %s14 = ssub.s32 %s9, 1
    %s15 = ssub.s32 %s9, 2
    %s16 = sadd.s32 %s9, 1
    %s17 = ssub.s32 %s9, %s16
    %p18 = scmp.eq.s32.totalorder %s17, 0
    %s20 = sadd.s32 %s19, 1
    %s21 = scalar_select %p18, %s19, %s20
    %p24 = pneg %p18
    %p25 = scmp.eq.s32.totalorder %s9, 3
    %p26 = por %p24, %p25
    %p27 = scmp.ne.s32.totalorder %s19, %s22
    %p28 = scmp.eq.s32.totalorder %s9, 0
    %p29 = por %p27, %p28
    %p30 = scmp.ne.s32.totalorder %s19, %s22
    %p31 = scmp.eq.s32.totalorder %s14, 3
    %p32 = por %p30, %p31
    %p33 = scmp.ne.s32.totalorder %s22, %s23
    %p34 = scmp.eq.s32.totalorder %s14, 0
    %p35 = por %p33, %p34
    %p36 = scmp.ne.s32.totalorder %s22, %s23
    %p37 = scmp.eq.s32.totalorder %s15, 3
    %p38 = por %p36, %p37
    %p40 = scmp.ne.s32.totalorder %s23, %s39
    %p41 = scmp.eq.s32.totalorder %s15, 0
    %p42 = por %p40, %p41
    %s44 = sadd.s32 %s43, 1
    %p47 = scmp.eq.s32.totalorder %s9, 3
    %p48 = scmp.ne.s32.totalorder %s43, %s45
    %p49 = scmp.eq.s32.totalorder %s9, 0
    %p50 = por %p48, %p49
    %p51 = scmp.ne.s32.totalorder %s43, %s45
    %p52 = scmp.eq.s32.totalorder %s14, 3
    %p53 = por %p51, %p52
    %p54 = scmp.ne.s32.totalorder %s45, %s46
    %p55 = scmp.eq.s32.totalorder %s14, 0
    %p56 = por %p54, %p55
    %p57 = scmp.ne.s32.totalorder %s45, %s46
    %p58 = scmp.eq.s32.totalorder %s15, 3
    %p59 = por %p57, %p58
    %p61 = scmp.ne.s32.totalorder %s46, %s60
    %p62 = scmp.eq.s32.totalorder %s15, 0
    %p63 = por %p61, %p62
    %s65 = sadd.s32 %s64, 1
    %p68 = scmp.eq.s32.totalorder %s9, 3
    %p69 = scmp.ne.s32.totalorder %s64, %s66
    %p70 = scmp.eq.s32.totalorder %s9, 0
    %p71 = por %p69, %p70
    %p72 = scmp.ne.s32.totalorder %s64, %s66
    %p73 = scmp.eq.s32.totalorder %s14, 3
    %p74 = por %p72, %p73
    %p75 = scmp.ne.s32.totalorder %s66, %s67
    %p76 = scmp.eq.s32.totalorder %s14, 0
    %p77 = por %p75, %p76
    %p78 = scmp.ne.s32.totalorder %s66, %s67
    %p79 = scmp.eq.s32.totalorder %s15, 3
    %p80 = por %p78, %p79
    %p82 = scmp.ne.s32.totalorder %s67, %s81
    %p83 = scmp.eq.s32.totalorder %s15, 0
    %p84 = por %p82, %p83
    %s85 = ssub.s32 %s9, %s16
    %p86 = scmp.eq.s32.totalorder %s85, 0
    %s88 = sadd.s32 %s87, 1
    %s89 = scalar_select %p86, %s87, %s88
    %p92 = pneg %p86
    %p93 = scmp.eq.s32.totalorder %s9, 3
    %p94 = por %p92, %p93
    %p95 = scmp.ne.s32.totalorder %s87, %s90
    %p96 = scmp.eq.s32.totalorder %s9, 0
    %p97 = por %p95, %p96
    %p98 = scmp.ne.s32.totalorder %s87, %s90
    %p99 = scmp.eq.s32.totalorder %s14, 3
    %p100 = por %p98, %p99
    %p101 = scmp.ne.s32.totalorder %s90, %s91
    %p102 = scmp.eq.s32.totalorder %s14, 0
    %p103 = por %p101, %p102
    %p104 = scmp.ne.s32.totalorder %s90, %s91
    %p105 = scmp.eq.s32.totalorder %s15, 3
    %p106 = por %p104, %p105
    %p108 = scmp.ne.s32.totalorder %s91, %s107
    %p109 = scmp.eq.s32.totalorder %s15, 0
    %p110 = por %p108, %p109
    %p111 = scmp.le.s32.totalorder 1, %s9
    %p112 = scmp.lt.s32.totalorder %s9, 5
    %p113 = pnand %p111, %p112
    %p114 = pneg %p113
    // Predicated region
    $region9: #{encoder_forward.4} parent=5 // pred_check
      _
    $region10: #{encoder_forward.4} parent=5 // pred_check_branch
      %116 = sbr.rel (%p113) target = $region12
    $region11: #{encoder_forward.4} parent=5 // pred_region
      %s117 = ssub.s32 %s9, 1
      // Predicated region
      $region13: #{encoder_forward.4} parent=11 // pred_check
        %p118 = pneg %p56
      $region14: #{encoder_forward.4} parent=11 // pred_check_branch
        %120 = sbr.rel (%p118) target = $region16
      $region15: #{encoder_forward.4} parent=11 // pred_region
        _
      $region16: #{encoder_forward.4} parent=11 // pred_fallthru
        _
      // Predicated region
      $region17: #{encoder_forward.4} parent=11 // pred_check
        %p121 = pneg %p77
      $region18: #{encoder_forward.4} parent=11 // pred_check_branch
        %123 = sbr.rel (%p121) target = $region20
      $region19: #{encoder_forward.4} parent=11 // pred_region
        _
      $region20: #{encoder_forward.4} parent=11 // pred_fallthru
        _
    $region12: #{encoder_forward.4} parent=5 // pred_fallthru
      _
    %p124 = scmp.lt.s32.totalorder %s9, 4
    // Predicated region
    $region21: #{encoder_forward.4} parent=5 // pred_check
      %p125 = pneg %p124
    $region22: #{encoder_forward.4} parent=5 // pred_check_branch
      %127 = sbr.rel (%p125) target = $region24
    $region23: #{encoder_forward.4} parent=5 // pred_region
      // Predicated region
      $region25: #{encoder_forward.4} parent=23 // pred_check
        %p128 = pneg %p29
      $region26: #{encoder_forward.4} parent=23 // pred_check_branch
        %130 = sbr.rel (%p128) target = $region28
      $region27: #{encoder_forward.4} parent=23 // pred_region
        %p131 = scmp.lt.s32.totalorder %s9, 3
        %s132 = scalar_select %p131, %s9, 3
        %s133 = smul.addr %s132, 10
        %s134 = smul.addr %s133, 4
        %s135 = scalar_lea.vmem %s0, %s134
      $region28: #{encoder_forward.4} parent=23 // pred_fallthru
        _
    $region24: #{encoder_forward.4} parent=5 // pred_fallthru
      _
    %p136 = scmp.le.s32.totalorder 1, %s9
    %p137 = scmp.lt.s32.totalorder %s9, 5
    %p138 = pnand %p136, %p137
    %p139 = pneg %p138
    // Predicated region
    $region29: #{encoder_forward.4} parent=5 // pred_check
      _
    $region30: #{encoder_forward.4} parent=5 // pred_check_branch
      %141 = sbr.rel (%p138) target = $region32
    $region31: #{encoder_forward.4} parent=5 // pred_region
      %s142 = ssub.s32 %s9, 1
      %p143 = scmp.lt.s32.totalorder %s14, 3
      %s144 = scalar_select %p143, %s14, 3
      %s145 = smul.addr %s144, 10
      %s146 = smul.addr %s145, 4
      %s147 = scalar_lea.vmem %s0, %s146
      %p148 = pneg %p35
      %p149 = pneg %p32
      %p150 = pneg %p56
      %p151 = pneg %p53
      %p152 = pneg %p77
      %p153 = pneg %p74
      %p154 = pneg %p103
      %p155 = pneg %p100
      %p156 = scmp.lt.s32.totalorder %s14, 3
      %s157 = scalar_select %p156, %s14, 3
      %s158 = smul.addr %s157, 4
      %s159 = smul.addr %s158, 4
      %s160 = scalar_lea.vmem %s3, %s159
      %p161 = scmp.lt.s32.totalorder %s14, 3
      %s162 = scalar_select %p161, %s14, 3
      %s163 = smul.addr %s162, 10
      %s164 = smul.addr %s163, 4
      %s165 = scalar_lea.vmem %s0, %s164
      %p166 = scmp.lt.s32.totalorder %s14, 3
      %s167 = scalar_select %p166, %s14, 3
      %s168 = smul.addr %s167, 4
      %s169 = smul.addr %s168, 4
      %s170 = scalar_lea.vmem %s3, %s169
      %v171 = vld [vmem:[%s165] sm:$0xf]
      %v172 = vld [vmem:[%s165 + $0x4] sm:$0x1]
      %v173 = vld [vmem:[%s165 + $0x8] sm:$0xf]
      %v174 = vld [vmem:[%s165 + $0xc] sm:$0x1]
      %v175 = vld [vmem:[%s165 + $0x10] sm:$0xf]
      %v176 = vld [vmem:[%s165 + $0x14] sm:$0x1]
      %v177 = vld [vmem:[%s165 + $0x18] sm:$0xf]
      %v178 = vld [vmem:[%s165 + $0x1c] sm:$0x1]
      %v179 = vld [vmem:[%s165 + $0x20] sm:$0xf]
      %v180 = vld [vmem:[%s165 + $0x24] sm:$0x1]
      %vm181 = vsmask.f32 3328
      %vm182 = vsmask.f32 7440
      %vm183 = vmor %vm181, %vm182
      %v185 = vshrl.u32 %v171, 16
      %v187 = vrot.slane %v185, 4
      %v188 = vshll.u32 %v171, 16
      %v190 = vrot.slane %v188, 5
      %v191 = vor.u32 %v187, %v190
      %v192 = vrot.slane %v191, 4
      %v194 = vshll.u32 %v172, 16
      %v196 = vrot.slane %v194, 5
      %v197 = vsel %vm183, %v192, %v196
      %v199 = vshrl.u32 %v173, 16
      %v201 = vrot.slane %v199, 4
      %v202 = vshll.u32 %v173, 16
      %v204 = vrot.slane %v202, 5
      %v205 = vor.u32 %v201, %v204
      %v206 = vrot.slane %v205, 4
      %v208 = vshll.u32 %v174, 16
      %v210 = vrot.slane %v208, 5
      %v211 = vsel %vm183, %v206, %v210
      %v213 = vshrl.u32 %v175, 16
      %v215 = vrot.slane %v213, 4
      %v216 = vshll.u32 %v175, 16
      %v218 = vrot.slane %v216, 5
      %v219 = vor.u32 %v215, %v218
      %v220 = vrot.slane %v219, 4
      %v222 = vshll.u32 %v176, 16
      %v224 = vrot.slane %v222, 5
      %v225 = vsel %vm183, %v220, %v224
      %v227 = vshrl.u32 %v177, 16
      %v229 = vrot.slane %v227, 4
      %v230 = vshll.u32 %v177, 16
      %v232 = vrot.slane %v230, 5
      %v233 = vor.u32 %v229, %v232
      %v234 = vrot.slane %v233, 4
      %v236 = vshll.u32 %v178, 16
      %v238 = vrot.slane %v236, 5
      %v239 = vsel %vm183, %v234, %v238
      %v241 = vshrl.u32 %v179, 16
      %v243 = vrot.slane %v241, 4
      %v244 = vshll.u32 %v179, 16
      %v246 = vrot.slane %v244, 5
      %v247 = vor.u32 %v243, %v246
      %v248 = vrot.slane %v247, 4
      %v250 = vshll.u32 %v180, 16
      %v252 = vrot.slane %v250, 5
      %v253 = vsel %vm183, %v248, %v252
      %v258 = vunpack.c.l.b16 %v171
      %v259 = vunpack.c.l.b16 %v173
      %v260 = vunpack.c.l.b16 %v175
      %v261 = vunpack.c.l.b16 %v177
      %v262 = vpack.c.b16 %v259, %v258
      %v263 = vpack.c.b16 %v261, %v260
      %v266 = vunpack.c.l.b16 %v197
      %v267 = vunpack.c.l.b16 %v211
      %v268 = vunpack.c.l.b16 %v225
      %v269 = vunpack.c.l.b16 %v239
      %v270 = vpack.c.b16 %v267, %v266
      %v271 = vpack.c.b16 %v269, %v268
      %v275 = vunpack.c.l.b16 %v179
      %v276 = vpack.c.b16 %v260, %v259
      %v277 = vpack.c.b16 %v275, %v261
      %v280 = vunpack.c.l.b16 %v253
      %v281 = vpack.c.b16 %v268, %v267
      %v282 = vpack.c.b16 %v280, %v269
      %v285 = vld [vmem:[%s1] sm:$0xf]
      %v286 = vld [vmem:[%s1 + $0x4] sm:$0xf]
      %v287 = vld [vmem:[%s1 + $0x8] sm:$0xf]
      %v288 = vld [vmem:[%s1 + $0xc] sm:$0xf]
      %v289 = vld [vmem:[%s1 + $0x10] sm:$0xf]
      %v290 = vld [vmem:[%s1 + $0x14] sm:$0xf]
      %v291 = vld [vmem:[%s1 + $0x18] sm:$0xf]
      %v292 = vld [vmem:[%s1 + $0x1c] sm:$0xf]
      %v293 = vld [vmem:[%s1 + $0x20] sm:$0xf]
      %v294 = vld [vmem:[%s1 + $0x24] sm:$0xf]
      %v295 = vld [vmem:[%s1 + $0x28] sm:$0xf]
      %v296 = vld [vmem:[%s1 + $0x2c] sm:$0xf]
      %v297 = vld [vmem:[%s1 + $0x30] sm:$0xf]
      %v298 = vld [vmem:[%s1 + $0x34] sm:$0xf]
      %v299 = vld [vmem:[%s1 + $0x38] sm:$0xf]
      %v300 = vld [vmem:[%s1 + $0x3c] sm:$0xf]
      %v301 = vld [vmem:[%s1 + $0x40] sm:$0xf]
      %v302 = vld [vmem:[%s1 + $0x44] sm:$0xf]
      %v303 = vld [vmem:[%s1 + $0x48] sm:$0xf]
      %v304 = vld [vmem:[%s1 + $0x4c] sm:$0xf]
      %v305 = vld [vmem:[%s1 + $0x50] sm:$0xf]
      %v306 = vld [vmem:[%s1 + $0x54] sm:$0xf]
      %v307 = vld [vmem:[%s1 + $0x58] sm:$0xf]
      %v308 = vld [vmem:[%s1 + $0x5c] sm:$0xf]
      %v309 = vld [vmem:[%s1 + $0x60] sm:$0xf]
      %v310 = vld [vmem:[%s1 + $0x64] sm:$0xf]
      %v311 = vld [vmem:[%s1 + $0x68] sm:$0xf]
      %v312 = vld [vmem:[%s1 + $0x6c] sm:$0xf]
      %v313 = vld [vmem:[%s1 + $0x70] sm:$0xf]
      %v314 = vld [vmem:[%s1 + $0x74] sm:$0xf]
      %v315 = vld [vmem:[%s1 + $0x78] sm:$0xf]
      %v316 = vld [vmem:[%s1 + $0x7c] sm:$0xf]
      %v317 = vld [vmem:[%s1 + $0x80] sm:$0xf]
      %v318 = vld [vmem:[%s1 + $0x84] sm:$0xf]
      %v319 = vld [vmem:[%s1 + $0x88] sm:$0xf]
      %v320 = vld [vmem:[%s1 + $0x8c] sm:$0xf]
      %v321 = vld [vmem:[%s1 + $0x90] sm:$0xf]
      %v322 = vld [vmem:[%s1 + $0x94] sm:$0xf]
      %v323 = vld [vmem:[%s1 + $0x98] sm:$0xf]
      %v324 = vld [vmem:[%s1 + $0x9c] sm:$0xf]
      %v325 = vld [vmem:[%s1 + $0xa0] sm:$0xf]
      %v326 = vld [vmem:[%s1 + $0xa4] sm:$0xf]
      %v327 = vld [vmem:[%s1 + $0xa8] sm:$0xf]
      %v328 = vld [vmem:[%s1 + $0xac] sm:$0xf]
      %v329 = vld [vmem:[%s1 + $0xb0] sm:$0xf]
      %v330 = vld [vmem:[%s1 + $0xb4] sm:$0xf]
      %v331 = vld [vmem:[%s1 + $0xb8] sm:$0xf]
      %v332 = vld [vmem:[%s1 + $0xbc] sm:$0xf]
      %v333 = vld [vmem:[%s1 + $0xc0] sm:$0xf]
      %v334 = vld [vmem:[%s1 + $0xc4] sm:$0xf]
      %v335 = vld [vmem:[%s1 + $0xc8] sm:$0xf]
      %v336 = vld [vmem:[%s1 + $0xcc] sm:$0xf]
      %v337 = vld [vmem:[%s1 + $0xd0] sm:$0xf]
      %v338 = vld [vmem:[%s1 + $0xd4] sm:$0xf]
      %v339 = vld [vmem:[%s1 + $0xd8] sm:$0xf]
      %v340 = vld [vmem:[%s1 + $0xdc] sm:$0xf]
      %v341 = vld [vmem:[%s1 + $0xe0] sm:$0xf]
      %v342 = vld [vmem:[%s1 + $0xe4] sm:$0xf]
      %v343 = vld [vmem:[%s1 + $0xe8] sm:$0xf]
      %v344 = vld [vmem:[%s1 + $0xec] sm:$0xf]
      %v345 = vld [vmem:[%s1 + $0xf0] sm:$0xf]
      %v346 = vld [vmem:[%s1 + $0xf4] sm:$0xf]
      %v347 = vld [vmem:[%s1 + $0xf8] sm:$0xf]
      %v348 = vld [vmem:[%s1 + $0xfc] sm:$0xf]
      %v349 = vld [vmem:[%s2] sm:$0x1]
      %v351 = vperm.slane %v349, 0
      %v417 = vunpack.c.l.b16 %v285
      %v418 = vunpack.c.l.b16 %v286
      %v419 = vunpack.c.l.b16 %v287
      %v420 = vunpack.c.l.b16 %v288
      %v421 = vunpack.c.l.b16 %v289
      %v422 = vunpack.c.l.b16 %v290
      %v423 = vunpack.c.l.b16 %v291
      %v424 = vunpack.c.l.b16 %v292
      %v425 = vunpack.c.l.b16 %v293
      %v426 = vunpack.c.l.b16 %v294
      %v427 = vunpack.c.l.b16 %v295
      %v428 = vunpack.c.l.b16 %v296
      %v429 = vunpack.c.l.b16 %v297
      %v430 = vunpack.c.l.b16 %v298
      %v431 = vunpack.c.l.b16 %v299
      %v432 = vunpack.c.l.b16 %v300
      %v433 = vunpack.c.l.b16 %v301
      %v434 = vunpack.c.l.b16 %v302
      %v435 = vunpack.c.l.b16 %v303
      %v436 = vunpack.c.l.b16 %v304
      %v437 = vunpack.c.l.b16 %v305
      %v438 = vunpack.c.l.b16 %v306
      %v439 = vunpack.c.l.b16 %v307
      %v440 = vunpack.c.l.b16 %v308
      %v441 = vunpack.c.l.b16 %v309
      %v442 = vunpack.c.l.b16 %v310
      %v443 = vunpack.c.l.b16 %v311
      %v444 = vunpack.c.l.b16 %v312
      %v445 = vunpack.c.l.b16 %v313
      %v446 = vunpack.c.l.b16 %v314
      %v447 = vunpack.c.l.b16 %v315
      %v448 = vunpack.c.l.b16 %v316
      %v449 = vunpack.c.l.b16 %v317
      %v450 = vunpack.c.l.b16 %v318
      %v451 = vunpack.c.l.b16 %v319
      %v452 = vunpack.c.l.b16 %v320
      %v453 = vunpack.c.l.b16 %v321
      %v454 = vunpack.c.l.b16 %v322
      %v455 = vunpack.c.l.b16 %v323
      %v456 = vunpack.c.l.b16 %v324
      %v457 = vunpack.c.l.b16 %v325
      %v458 = vunpack.c.l.b16 %v326
      %v459 = vunpack.c.l.b16 %v327
      %v460 = vunpack.c.l.b16 %v328
      %v461 = vunpack.c.l.b16 %v329
      %v462 = vunpack.c.l.b16 %v330
      %v463 = vunpack.c.l.b16 %v331
      %v464 = vunpack.c.l.b16 %v332
      %v465 = vunpack.c.l.b16 %v333
      %v466 = vunpack.c.l.b16 %v334
      %v467 = vunpack.c.l.b16 %v335
      %v468 = vunpack.c.l.b16 %v336
      %v469 = vunpack.c.l.b16 %v337
      %v470 = vunpack.c.l.b16 %v338
      %v471 = vunpack.c.l.b16 %v339
      %v472 = vunpack.c.l.b16 %v340
      %v473 = vunpack.c.l.b16 %v341
      %v474 = vunpack.c.l.b16 %v342
      %v475 = vunpack.c.l.b16 %v343
      %v476 = vunpack.c.l.b16 %v344
      %v477 = vunpack.c.l.b16 %v345
      %v478 = vunpack.c.l.b16 %v346
      %v479 = vunpack.c.l.b16 %v347
      %v480 = vunpack.c.l.b16 %v348
      %v481 = vpack.c.b16 %v418, %v417
      %v482 = vpack.c.b16 %v420, %v419
      %v483 = vpack.c.b16 %v422, %v421
      %v484 = vpack.c.b16 %v424, %v423
      %v485 = vpack.c.b16 %v426, %v425
      %v486 = vpack.c.b16 %v428, %v427
      %v487 = vpack.c.b16 %v430, %v429
      %v488 = vpack.c.b16 %v432, %v431
      %v489 = vpack.c.b16 %v434, %v433
      %v490 = vpack.c.b16 %v436, %v435
      %v491 = vpack.c.b16 %v438, %v437
      %v492 = vpack.c.b16 %v440, %v439
      %v493 = vpack.c.b16 %v442, %v441
      %v494 = vpack.c.b16 %v444, %v443
      %v495 = vpack.c.b16 %v446, %v445
      %v496 = vpack.c.b16 %v448, %v447
      %v497 = vpack.c.b16 %v450, %v449
      %v498 = vpack.c.b16 %v452, %v451
      %v499 = vpack.c.b16 %v454, %v453
      %v500 = vpack.c.b16 %v456, %v455
      %v501 = vpack.c.b16 %v458, %v457
      %v502 = vpack.c.b16 %v460, %v459
      %v503 = vpack.c.b16 %v462, %v461
      %v504 = vpack.c.b16 %v464, %v463
      %v505 = vpack.c.b16 %v466, %v465
      %v506 = vpack.c.b16 %v468, %v467
      %v507 = vpack.c.b16 %v470, %v469
      %v508 = vpack.c.b16 %v472, %v471
      %v509 = vpack.c.b16 %v474, %v473
      %v510 = vpack.c.b16 %v476, %v475
      %v511 = vpack.c.b16 %v478, %v477
      %v512 = vpack.c.b16 %v480, %v479
      %545 = vmatpush.bf16.msra.mxu0 %v488
      %546 = vmatpush.bf16.msra.mxu0 %v487
      %547 = vmatpush.bf16.msra.mxu0 %v486
      %548 = vmatpush.bf16.msra.mxu0 %v485
      %549 = vmatpush.bf16.msra.mxu0 %v484
      %550 = vmatpush.bf16.msra.mxu0 %v483
      %551 = vmatpush.bf16.msra.mxu0 %v482
      %552 = vmatpush.bf16.msra.mxu0 %v481
      %553 = vmatmul.bf16.gmra.mxu0 %v262
      %v554 = vpop.f32.mrf.mxu0
      %v555 = vadd.f32 %v351, %v554
      %v556 = vpop.f32.mrf.mxu0
      %v557 = vadd.f32 %v351, %v556
      %558 = vmatmul.bf16.gmra.mxu0 %v263
      %v559 = vpop.f32.mrf.mxu0
      %v560 = vadd.f32 %v351, %v559
      %v561 = vpop.f32.mrf.mxu0
      %v562 = vadd.f32 %v351, %v561
      %563 = vdwg.mxu0
      %564 = vmatpush.bf16.msra.mxu0 %v496
      %565 = vmatpush.bf16.msra.mxu0 %v495
      %566 = vmatpush.bf16.msra.mxu0 %v494
      %567 = vmatpush.bf16.msra.mxu0 %v493
      %568 = vmatpush.bf16.msra.mxu0 %v492
      %569 = vmatpush.bf16.msra.mxu0 %v491
      %570 = vmatpush.bf16.msra.mxu0 %v490
      %571 = vmatpush.bf16.msra.mxu0 %v489
      %572 = vmatmul.bf16.gmra.mxu0 %v270
      %v573 = vpop.f32.mrf.mxu0
      %v574 = vadd.f32 %v555, %v573
      %v575 = vpop.f32.mrf.mxu0
      %v576 = vadd.f32 %v557, %v575
      %577 = vmatmul.bf16.gmra.mxu0 %v271
      %v578 = vpop.f32.mrf.mxu0
      %v579 = vadd.f32 %v560, %v578
      %v580 = vpop.f32.mrf.mxu0
      %v581 = vadd.f32 %v562, %v580
      %582 = vdwg.mxu0
      %583 = vmatpush.bf16.msra.mxu0 %v504
      %584 = vmatpush.bf16.msra.mxu0 %v503
      %585 = vmatpush.bf16.msra.mxu0 %v502
      %586 = vmatpush.bf16.msra.mxu0 %v501
      %587 = vmatpush.bf16.msra.mxu0 %v500
      %588 = vmatpush.bf16.msra.mxu0 %v499
      %589 = vmatpush.bf16.msra.mxu0 %v498
      %590 = vmatpush.bf16.msra.mxu0 %v497
      %591 = vmatmul.bf16.gmra.mxu0 %v276
      %v592 = vpop.f32.mrf.mxu0
      %v593 = vadd.f32 %v574, %v592
      %v594 = vpop.f32.mrf.mxu0
      %v595 = vadd.f32 %v576, %v594
      %596 = vmatmul.bf16.gmra.mxu0 %v277
      %v597 = vpop.f32.mrf.mxu0
      %v598 = vadd.f32 %v579, %v597
      %v599 = vpop.f32.mrf.mxu0
      %v600 = vadd.f32 %v581, %v599
      %601 = vdwg.mxu0
      %602 = vmatpush.bf16.msra.mxu0 %v512
      %603 = vmatpush.bf16.msra.mxu0 %v511
      %604 = vmatpush.bf16.msra.mxu0 %v510
      %605 = vmatpush.bf16.msra.mxu0 %v509
      %606 = vmatpush.bf16.msra.mxu0 %v508
      %607 = vmatpush.bf16.msra.mxu0 %v507
      %608 = vmatpush.bf16.msra.mxu0 %v506
      %609 = vmatpush.bf16.msra.mxu0 %v505
      %610 = vmatmul.bf16.gmra.mxu0 %v281
      %v611 = vpop.f32.mrf.mxu0
      %v612 = vadd.f32 %v593, %v611
      %v613 = vpop.f32.mrf.mxu0
      %v614 = vadd.f32 %v595, %v613
      %615 = vmatmul.bf16.gmra.mxu0 %v282
      %v616 = vpop.f32.mrf.mxu0
      %v617 = vadd.f32 %v598, %v616
      %v618 = vpop.f32.mrf.mxu0
      %v619 = vadd.f32 %v600, %v618
      %620 = vdwg.mxu0
      %v621 = vmax.f32 %v612, 0.0
      %v622 = vmax.f32 %v614, 0.0
      %v623 = vmax.f32 %v617, 0.0
      %v624 = vmax.f32 %v619, 0.0
      %v625 = vpack.c.bf16 %v621, %v621
      %v626 = vpack.c.bf16 %v622, %v622
      %v627 = vpack.c.bf16 %v623, %v623
      %v628 = vpack.c.bf16 %v624, %v624
      %629 = vst [vmem:[%s170] sm:$0xf] %v625
      %630 = vst [vmem:[%s170 + $0x4] sm:$0xf] %v626
      %631 = vst [vmem:[%s170 + $0x8] sm:$0xf] %v627
      %632 = vst [vmem:[%s170 + $0xc] sm:$0xf] %v628
      %p633 = scmp.lt.s32.totalorder %s14, 3
      %s634 = scalar_select %p633, %s14, 3
      %s635 = smul.addr %s634, 4
      %s636 = smul.addr %s635, 4
      %s637 = scalar_lea.vmem %s3, %s636
      // Predicated region
      $region33: #{encoder_forward.4} parent=31 // pred_check
        %p638 = pneg %p100
      $region34: #{encoder_forward.4} parent=31 // pred_check_branch
        %640 = sbr.rel (%p638) target = $region36
      $region35: #{encoder_forward.4} parent=31 // pred_region
        _
      $region36: #{encoder_forward.4} parent=31 // pred_fallthru
        _
    $region32: #{encoder_forward.4} parent=5 // pred_fallthru
      _
    %p641 = scmp.le.s32.totalorder 2, %s9
    // Predicated region
    $region37: #{encoder_forward.4} parent=5 // pred_check
      %p642 = pneg %p641
    $region38: #{encoder_forward.4} parent=5 // pred_check_branch
      %644 = sbr.rel (%p642) target = $region40
    $region39: #{encoder_forward.4} parent=5 // pred_region
      %s645 = ssub.s32 %s9, 2
      // Predicated region
      $region41: #{encoder_forward.4} parent=39 // pred_check
        %p646 = pneg %p106
      $region42: #{encoder_forward.4} parent=39 // pred_check_branch
        %648 = sbr.rel (%p646) target = $region44
      $region43: #{encoder_forward.4} parent=39 // pred_region
        %p649 = scmp.lt.s32.totalorder %s15, 3
        %s650 = scalar_select %p649, %s15, 3
        %s651 = smul.addr %s650, 4
        %s652 = smul.addr %s651, 4
        %s653 = scalar_lea.vmem %s3, %s652
      $region44: #{encoder_forward.4} parent=39 // pred_fallthru
        _
    $region40: #{encoder_forward.4} parent=5 // pred_fallthru
      _
  $region6: #{encoder_forward.4} parent=0 // loop_footer
    %s13 = sadd.s32 1, %s9
  $region7: #{encoder_forward.4} parent=0 // loop_footer_branch
    %8 = sbr.rel target = $region3
  $region8: #{encoder_forward.4} parent=0 // loop_exit
    _

// kernel: encoder_forward.5
$region0: #{encoder_forward.5}
  #allocation0 [shape = 'u32[]', space=smem, size = 0x4, offset = 0x4, fixed_abs, tag = 'smem constant byte address 0x4 - core index']
  #allocation1 [shape = 'u32[72,128]{1,0:T(1,128)}', space=vmem, size = 0x9000, scoped, tag = 'internal scratch']
  %s0 = inlined_call_operand.vmem [shape: bf16[4,6,10,128], index: 0, kind: input, shape index: {}]
  %s1 = inlined_call_operand.vmem [shape: bf16[1152,128], index: 1, kind: input, shape index: {}]
  %s2 = inlined_call_operand.vmem [shape: f32[1,128], index: 2, kind: input, shape index: {}]
  %s3 = inlined_call_operand.vmem [shape: bf16[4,4,8,128], index: 3, kind: output, shape index: {}]
  %s4 = sld [smem:[#allocation0]]
  $region45: #{encoder_forward.5} parent=0
    _
  %s6 = ssub.s32 1, %s4
  %s7 = scalar_select 0, %s6, %s4
  loop: start=0, step=1, limit=6
  $region2: #{encoder_forward.5} parent=0 // loop_pre_header
    _
  $region3: #{encoder_forward.5} parent=0 // loop_header
    %s9 = sphi 0, %s13
    %p10 = scmp.ge.s32.totalorder %s9, 6
    %s19 = sphi 0, %s21
    %s22 = sphi 0, %s19
    %s23 = sphi 0, %s22
    %s39 = sphi 0, %s23
    %s43 = sphi 0, %s43
    %s45 = sphi 0, %s43
    %s46 = sphi 0, %s45
    %s60 = sphi 0, %s46
    %s64 = sphi 0, %s64
    %s66 = sphi 0, %s64
    %s67 = sphi 0, %s66
    %s81 = sphi 0, %s67
    %s87 = sphi 0, %s89
    %s90 = sphi 0, %s87
    %s91 = sphi 0, %s90
    %s107 = sphi 0, %s91
  $region4: #{encoder_forward.5} parent=0 // loop_header_branch
    %12 = sbr.rel (%p10) target = $region8
  $region5: #{encoder_forward.5} parent=0 // loop_body
    %s14 = ssub.s32 %s9, 1
    %s15 = ssub.s32 %s9, 2
    %s16 = sadd.s32 %s9, 1
    %s17 = ssub.s32 %s9, %s16
    %p18 = scmp.eq.s32.totalorder %s17, 0
    %s20 = sadd.s32 %s19, 1
    %s21 = scalar_select %p18, %s19, %s20
    %p24 = pneg %p18
    %p25 = scmp.eq.s32.totalorder %s9, 3
    %p26 = por %p24, %p25
    %p27 = scmp.ne.s32.totalorder %s19, %s22
    %p28 = scmp.eq.s32.totalorder %s9, 0
    %p29 = por %p27, %p28
    %p30 = scmp.ne.s32.totalorder %s19, %s22
    %p31 = scmp.eq.s32.totalorder %s14, 3
    %p32 = por %p30, %p31
    %p33 = scmp.ne.s32.totalorder %s22, %s23
    %p34 = scmp.eq.s32.totalorder %s14, 0
    %p35 = por %p33, %p34
    %p36 = scmp.ne.s32.totalorder %s22, %s23
    %p37 = scmp.eq.s32.totalorder %s15, 3
    %p38 = por %p36, %p37
    %p40 = scmp.ne.s32.totalorder %s23, %s39
    %p41 = scmp.eq.s32.totalorder %s15, 0
    %p42 = por %p40, %p41
    %s44 = sadd.s32 %s43, 1
    %p47 = scmp.eq.s32.totalorder %s9, 3
    %p48 = scmp.ne.s32.totalorder %s43, %s45
    %p49 = scmp.eq.s32.totalorder %s9, 0
    %p50 = por %p48, %p49
    %p51 = scmp.ne.s32.totalorder %s43, %s45
    %p52 = scmp.eq.s32.totalorder %s14, 3
    %p53 = por %p51, %p52
    %p54 = scmp.ne.s32.totalorder %s45, %s46
    %p55 = scmp.eq.s32.totalorder %s14, 0
    %p56 = por %p54, %p55
    %p57 = scmp.ne.s32.totalorder %s45, %s46
    %p58 = scmp.eq.s32.totalorder %s15, 3
    %p59 = por %p57, %p58
    %p61 = scmp.ne.s32.totalorder %s46, %s60
    %p62 = scmp.eq.s32.totalorder %s15, 0
    %p63 = por %p61, %p62
    %s65 = sadd.s32 %s64, 1
    %p68 = scmp.eq.s32.totalorder %s9, 3
    %p69 = scmp.ne.s32.totalorder %s64, %s66
    %p70 = scmp.eq.s32.totalorder %s9, 0
    %p71 = por %p69, %p70
    %p72 = scmp.ne.s32.totalorder %s64, %s66
    %p73 = scmp.eq.s32.totalorder %s14, 3
    %p74 = por %p72, %p73
    %p75 = scmp.ne.s32.totalorder %s66, %s67
    %p76 = scmp.eq.s32.totalorder %s14, 0
    %p77 = por %p75, %p76
    %p78 = scmp.ne.s32.totalorder %s66, %s67
    %p79 = scmp.eq.s32.totalorder %s15, 3
    %p80 = por %p78, %p79
    %p82 = scmp.ne.s32.totalorder %s67, %s81
    %p83 = scmp.eq.s32.totalorder %s15, 0
    %p84 = por %p82, %p83
    %s85 = ssub.s32 %s9, %s16
    %p86 = scmp.eq.s32.totalorder %s85, 0
    %s88 = sadd.s32 %s87, 1
    %s89 = scalar_select %p86, %s87, %s88
    %p92 = pneg %p86
    %p93 = scmp.eq.s32.totalorder %s9, 3
    %p94 = por %p92, %p93
    %p95 = scmp.ne.s32.totalorder %s87, %s90
    %p96 = scmp.eq.s32.totalorder %s9, 0
    %p97 = por %p95, %p96
    %p98 = scmp.ne.s32.totalorder %s87, %s90
    %p99 = scmp.eq.s32.totalorder %s14, 3
    %p100 = por %p98, %p99
    %p101 = scmp.ne.s32.totalorder %s90, %s91
    %p102 = scmp.eq.s32.totalorder %s14, 0
    %p103 = por %p101, %p102
    %p104 = scmp.ne.s32.totalorder %s90, %s91
    %p105 = scmp.eq.s32.totalorder %s15, 3
    %p106 = por %p104, %p105
    %p108 = scmp.ne.s32.totalorder %s91, %s107
    %p109 = scmp.eq.s32.totalorder %s15, 0
    %p110 = por %p108, %p109
    %p111 = scmp.le.s32.totalorder 1, %s9
    %p112 = scmp.lt.s32.totalorder %s9, 5
    %p113 = pnand %p111, %p112
    %p114 = pneg %p113
    // Predicated region
    $region9: #{encoder_forward.5} parent=5 // pred_check
      _
    $region10: #{encoder_forward.5} parent=5 // pred_check_branch
      %116 = sbr.rel (%p113) target = $region12
    $region11: #{encoder_forward.5} parent=5 // pred_region
      %s117 = ssub.s32 %s9, 1
      // Predicated region
      $region13: #{encoder_forward.5} parent=11 // pred_check
        %p118 = pneg %p56
      $region14: #{encoder_forward.5} parent=11 // pred_check_branch
        %120 = sbr.rel (%p118) target = $region16
      $region15: #{encoder_forward.5} parent=11 // pred_region
        _
      $region16: #{encoder_forward.5} parent=11 // pred_fallthru
        _
      // Predicated region
      $region17: #{encoder_forward.5} parent=11 // pred_check
        %p121 = pneg %p77
      $region18: #{encoder_forward.5} parent=11 // pred_check_branch
        %123 = sbr.rel (%p121) target = $region20
      $region19: #{encoder_forward.5} parent=11 // pred_region
        _
      $region20: #{encoder_forward.5} parent=11 // pred_fallthru
        _
    $region12: #{encoder_forward.5} parent=5 // pred_fallthru
      _
    %p124 = scmp.lt.s32.totalorder %s9, 4
    // Predicated region
    $region21: #{encoder_forward.5} parent=5 // pred_check
      %p125 = pneg %p124
    $region22: #{encoder_forward.5} parent=5 // pred_check_branch
      %127 = sbr.rel (%p125) target = $region24
    $region23: #{encoder_forward.5} parent=5 // pred_region
      // Predicated region
      $region25: #{encoder_forward.5} parent=23 // pred_check
        %p128 = pneg %p29
      $region26: #{encoder_forward.5} parent=23 // pred_check_branch
        %130 = sbr.rel (%p128) target = $region28
      $region27: #{encoder_forward.5} parent=23 // pred_region
        %p131 = scmp.lt.s32.totalorder %s9, 3
        %s132 = scalar_select %p131, %s9, 3
        %s133 = smul.addr %s132, 12
        %s134 = smul.addr %s133, 4
        %s135 = scalar_lea.vmem %s0, %s134
      $region28: #{encoder_forward.5} parent=23 // pred_fallthru
        _
    $region24: #{encoder_forward.5} parent=5 // pred_fallthru
      _
    %p136 = scmp.le.s32.totalorder 1, %s9
    %p137 = scmp.lt.s32.totalorder %s9, 5
    %p138 = pnand %p136, %p137
    %p139 = pneg %p138
    // Predicated region
    $region29: #{encoder_forward.5} parent=5 // pred_check
      _
    $region30: #{encoder_forward.5} parent=5 // pred_check_branch
      %141 = sbr.rel (%p138) target = $region32
    $region31: #{encoder_forward.5} parent=5 // pred_region
      %s142 = ssub.s32 %s9, 1
      %p143 = scmp.lt.s32.totalorder %s14, 3
      %s144 = scalar_select %p143, %s14, 3
      %s145 = smul.addr %s144, 12
      %s146 = smul.addr %s145, 4
      %s147 = scalar_lea.vmem %s0, %s146
      %p148 = pneg %p35
      %p149 = pneg %p32
      %p150 = pneg %p56
      %p151 = pneg %p53
      %p152 = pneg %p77
      %p153 = pneg %p74
      %p154 = pneg %p103
      %p155 = pneg %p100
      %p156 = scmp.lt.s32.totalorder %s14, 3
      %s157 = scalar_select %p156, %s14, 3
      %s158 = smul.addr %s157, 4
      %s159 = smul.addr %s158, 4
      %s160 = scalar_lea.vmem %s3, %s159
      %p161 = scmp.lt.s32.totalorder %s14, 3
      %s162 = scalar_select %p161, %s14, 3
      %s163 = smul.addr %s162, 12
      %s164 = smul.addr %s163, 4
      %s165 = scalar_lea.vmem %s0, %s164
      %p166 = scmp.lt.s32.totalorder %s14, 3
      %s167 = scalar_select %p166, %s14, 3
      %s168 = smul.addr %s167, 4
      %s169 = smul.addr %s168, 4
      %s170 = scalar_lea.vmem %s3, %s169
      %v171 = vld [vmem:[%s165] sm:$0xf]
      %v172 = vld [vmem:[%s165 + $0x4] sm:$0x1]
      %v173 = vld [vmem:[%s165 + $0x8] sm:$0xf]
      %v174 = vld [vmem:[%s165 + $0xc] sm:$0x1]
      %v175 = vld [vmem:[%s165 + $0x10] sm:$0xf]
      %v176 = vld [vmem:[%s165 + $0x14] sm:$0x1]
      %v177 = vld [vmem:[%s165 + $0x18] sm:$0xf]
      %v178 = vld [vmem:[%s165 + $0x1c] sm:$0x1]
      %v179 = vld [vmem:[%s165 + $0x20] sm:$0xf]
      %v180 = vld [vmem:[%s165 + $0x24] sm:$0x1]
      %v181 = vld [vmem:[%s165 + $0x28] sm:$0xf]
      %v182 = vld [vmem:[%s165 + $0x2c] sm:$0x1]
      %vm183 = vsmask.f32 3328
      %vm184 = vsmask.f32 7440
      %vm185 = vmor %vm183, %vm184
      %v187 = vshrl.u32 %v171, 16
      %v189 = vrot.slane %v187, 4
      %v190 = vshll.u32 %v171, 16
      %v192 = vrot.slane %v190, 5
      %v193 = vor.u32 %v189, %v192
      %v194 = vrot.slane %v193, 4
      %v196 = vshll.u32 %v172, 16
      %v198 = vrot.slane %v196, 5
      %v199 = vsel %vm185, %v194, %v198
      %v201 = vshrl.u32 %v173, 16
      %v203 = vrot.slane %v201, 4
      %v204 = vshll.u32 %v173, 16
      %v206 = vrot.slane %v204, 5
      %v207 = vor.u32 %v203, %v206
      %v208 = vrot.slane %v207, 4
      %v210 = vshll.u32 %v174, 16
      %v212 = vrot.slane %v210, 5
      %v213 = vsel %vm185, %v208, %v212
      %v215 = vshrl.u32 %v175, 16
      %v217 = vrot.slane %v215, 4
      %v218 = vshll.u32 %v175, 16
      %v220 = vrot.slane %v218, 5
      %v221 = vor.u32 %v217, %v220
      %v222 = vrot.slane %v221, 4
      %v224 = vshll.u32 %v176, 16
      %v226 = vrot.slane %v224, 5
      %v227 = vsel %vm185, %v222, %v226
      %v229 = vshrl.u32 %v177, 16
      %v231 = vrot.slane %v229, 4
      %v232 = vshll.u32 %v177, 16
      %v234 = vrot.slane %v232, 5
      %v235 = vor.u32 %v231, %v234
      %v236 = vrot.slane %v235, 4
      %v238 = vshll.u32 %v178, 16
      %v240 = vrot.slane %v238, 5
      %v241 = vsel %vm185, %v236, %v240
      %v243 = vshrl.u32 %v179, 16
      %v245 = vrot.slane %v243, 4
      %v246 = vshll.u32 %v179, 16
      %v248 = vrot.slane %v246, 5
      %v249 = vor.u32 %v245, %v248
      %v250 = vrot.slane %v249, 4
      %v252 = vshll.u32 %v180, 16
      %v254 = vrot.slane %v252, 5
      %v255 = vsel %vm185, %v250, %v254
      %v257 = vshrl.u32 %v181, 16
      %v259 = vrot.slane %v257, 4
      %v260 = vshll.u32 %v181, 16
      %v262 = vrot.slane %v260, 5
      %v263 = vor.u32 %v259, %v262
      %v264 = vrot.slane %v263, 4
      %v266 = vshll.u32 %v182, 16
      %v268 = vrot.slane %v266, 5
      %v269 = vsel %vm185, %v264, %v268
      %vm282 = vcmask 1042432
      %vm283 = vcmask 1046532
      %vm284 = vmor %vm282, %vm283
      %v285 = vrot.slane %v171, 5
      %v286 = vrot.slane %v285, 4
      %v287 = vrot.slane %v172, 5
      %v288 = vsel %vm284, %v286, %v287
      %v289 = vrot.slane %v173, 5
      %v290 = vrot.slane %v289, 4
      %v291 = vrot.slane %v174, 5
      %v292 = vsel %vm284, %v290, %v291
      %v293 = vrot.slane %v175, 5
      %v294 = vrot.slane %v293, 4
      %v295 = vrot.slane %v176, 5
      %v296 = vsel %vm284, %v294, %v295
      %v297 = vrot.slane %v177, 5
      %v298 = vrot.slane %v297, 4
      %v299 = vrot.slane %v178, 5
      %v300 = vsel %vm284, %v298, %v299
      %v301 = vrot.slane %v179, 5
      %v302 = vrot.slane %v301, 4
      %v303 = vrot.slane %v180, 5
      %v304 = vsel %vm284, %v302, %v303
      %v305 = vrot.slane %v181, 5
      %v306 = vrot.slane %v305, 4
      %v307 = vrot.slane %v182, 5
      %v308 = vsel %vm284, %v306, %v307
      %v309 = vunpack.c.l.b16 %v171
      %v310 = vunpack.c.l.b16 %v173
      %v311 = vunpack.c.l.b16 %v175
      %v312 = vunpack.c.l.b16 %v177
      %v313 = vpack.c.b16 %v310, %v309
      %v314 = vpack.c.b16 %v312, %v311
      %v317 = vunpack.c.l.b16 %v199
      %v318 = vunpack.c.l.b16 %v213
      %v319 = vunpack.c.l.b16 %v227
      %v320 = vunpack.c.l.b16 %v241
      %v321 = vpack.c.b16 %v318, %v317
      %v322 = vpack.c.b16 %v320, %v319
      %v325 = vunpack.c.l.b16 %v288
      %v326 = vunpack.c.l.b16 %v292
      %v327 = vunpack.c.l.b16 %v296
      %v328 = vunpack.c.l.b16 %v300
      %v329 = vpack.c.b16 %v326, %v325
      %v330 = vpack.c.b16 %v328, %v327
      %v333 = vunpack.c.l.b16 %v179
      %v334 = vpack.c.b16 %v311, %v310
      %v335 = vpack.c.b16 %v333, %v312
      %v338 = vunpack.c.l.b16 %v255
      %v339 = vpack.c.b16 %v319, %v318
      %v340 = vpack.c.b16 %v338, %v320
      %v343 = vunpack.c.l.b16 %v304
      %v344 = vpack.c.b16 %v327, %v326
      %v345 = vpack.c.b16 %v343, %v328
      %v348 = vunpack.c.l.b16 %v181
      %v349 = vpack.c.b16 %v348, %v333
      %v351 = vunpack.c.l.b16 %v269
      %v352 = vpack.c.b16 %v351, %v338
      %v354 = vunpack.c.l.b16 %v308
      %v355 = vpack.c.b16 %v354, %v343
      %v357 = vld [vmem:[%s1] sm:$0xf]
      %v358 = vld [vmem:[%s1 + $0x4] sm:$0xf]
      %v359 = vld [vmem:[%s1 + $0x8] sm:$0xf]
      %v360 = vld [vmem:[%s1 + $0xc] sm:$0xf]
      %v361 = vld [vmem:[%s1 + $0x10] sm:$0xf]
      %v362 = vld [vmem:[%s1 + $0x14] sm:$0xf]
      %v363 = vld [vmem:[%s1 + $0x18] sm:$0xf]
      %v364 = vld [vmem:[%s1 + $0x1c] sm:$0xf]
      %v365 = vld [vmem:[%s1 + $0x20] sm:$0xf]
      %v366 = vld [vmem:[%s1 + $0x24] sm:$0xf]
      %v367 = vld [vmem:[%s1 + $0x28] sm:$0xf]
      %v368 = vld [vmem:[%s1 + $0x2c] sm:$0xf]
      %v369 = vld [vmem:[%s1 + $0x30] sm:$0xf]
      %v370 = vld [vmem:[%s1 + $0x34] sm:$0xf]
      %v371 = vld [vmem:[%s1 + $0x38] sm:$0xf]
      %v372 = vld [vmem:[%s1 + $0x3c] sm:$0xf]
      %v373 = vld [vmem:[%s1 + $0x40] sm:$0xf]
      %v374 = vld [vmem:[%s1 + $0x44] sm:$0xf]
      %v375 = vld [vmem:[%s1 + $0x48] sm:$0xf]
      %v376 = vld [vmem:[%s1 + $0x4c] sm:$0xf]
      %v377 = vld [vmem:[%s1 + $0x50] sm:$0xf]
      %v378 = vld [vmem:[%s1 + $0x54] sm:$0xf]
      %v379 = vld [vmem:[%s1 + $0x58] sm:$0xf]
      %v380 = vld [vmem:[%s1 + $0x5c] sm:$0xf]
      %v381 = vld [vmem:[%s1 + $0x60] sm:$0xf]
      %v382 = vld [vmem:[%s1 + $0x64] sm:$0xf]
      %v383 = vld [vmem:[%s1 + $0x68] sm:$0xf]
      %v384 = vld [vmem:[%s1 + $0x6c] sm:$0xf]
      %v385 = vld [vmem:[%s1 + $0x70] sm:$0xf]
      %v386 = vld [vmem:[%s1 + $0x74] sm:$0xf]
      %v387 = vld [vmem:[%s1 + $0x78] sm:$0xf]
      %v388 = vld [vmem:[%s1 + $0x7c] sm:$0xf]
      %v389 = vld [vmem:[%s1 + $0x80] sm:$0xf]
      %v390 = vld [vmem:[%s1 + $0x84] sm:$0xf]
      %v391 = vld [vmem:[%s1 + $0x88] sm:$0xf]
      %v392 = vld [vmem:[%s1 + $0x8c] sm:$0xf]
      %v393 = vld [vmem:[%s1 + $0x90] sm:$0xf]
      %v394 = vld [vmem:[%s1 + $0x94] sm:$0xf]
      %v395 = vld [vmem:[%s1 + $0x98] sm:$0xf]
      %v396 = vld [vmem:[%s1 + $0x9c] sm:$0xf]
      %v397 = vld [vmem:[%s1 + $0xa0] sm:$0xf]
      %v398 = vld [vmem:[%s1 + $0xa4] sm:$0xf]
      %v399 = vld [vmem:[%s1 + $0xa8] sm:$0xf]
      %v400 = vld [vmem:[%s1 + $0xac] sm:$0xf]
      %v401 = vld [vmem:[%s1 + $0xb0] sm:$0xf]
      %v402 = vld [vmem:[%s1 + $0xb4] sm:$0xf]
      %v403 = vld [vmem:[%s1 + $0xb8] sm:$0xf]
      %v404 = vld [vmem:[%s1 + $0xbc] sm:$0xf]
      %v405 = vld [vmem:[%s1 + $0xc0] sm:$0xf]
      %v406 = vld [vmem:[%s1 + $0xc4] sm:$0xf]
      %v407 = vld [vmem:[%s1 + $0xc8] sm:$0xf]
      %v408 = vld [vmem:[%s1 + $0xcc] sm:$0xf]
      %v409 = vld [vmem:[%s1 + $0xd0] sm:$0xf]
      %v410 = vld [vmem:[%s1 + $0xd4] sm:$0xf]
      %v411 = vld [vmem:[%s1 + $0xd8] sm:$0xf]
      %v412 = vld [vmem:[%s1 + $0xdc] sm:$0xf]
      %v413 = vld [vmem:[%s1 + $0xe0] sm:$0xf]
      %v414 = vld [vmem:[%s1 + $0xe4] sm:$0xf]
      %v415 = vld [vmem:[%s1 + $0xe8] sm:$0xf]
      %v416 = vld [vmem:[%s1 + $0xec] sm:$0xf]
      %v417 = vld [vmem:[%s1 + $0xf0] sm:$0xf]
      %v418 = vld [vmem:[%s1 + $0xf4] sm:$0xf]
      %v419 = vld [vmem:[%s1 + $0xf8] sm:$0xf]
      %v420 = vld [vmem:[%s1 + $0xfc] sm:$0xf]
      %v421 = vld [vmem:[%s1 + $0x100] sm:$0xf]
      %v422 = vld [vmem:[%s1 + $0x104] sm:$0xf]
      %v423 = vld [vmem:[%s1 + $0x108] sm:$0xf]
      %v424 = vld [vmem:[%s1 + $0x10c] sm:$0xf]
      %v425 = vld [vmem:[%s1 + $0x110] sm:$0xf]
      %v426 = vld [vmem:[%s1 + $0x114] sm:$0xf]
      %v427 = vld [vmem:[%s1 + $0x118] sm:$0xf]
      %v428 = vld [vmem:[%s1 + $0x11c] sm:$0xf]
      %v429 = vld [vmem:[%s1 + $0x120] sm:$0xf]
      %v430 = vld [vmem:[%s1 + $0x124] sm:$0xf]
      %v431 = vld [vmem:[%s1 + $0x128] sm:$0xf]
      %v432 = vld [vmem:[%s1 + $0x12c] sm:$0xf]
      %v433 = vld [vmem:[%s1 + $0x130] sm:$0xf]
      %v434 = vld [vmem:[%s1 + $0x134] sm:$0xf]
      %v435 = vld [vmem:[%s1 + $0x138] sm:$0xf]
      %v436 = vld [vmem:[%s1 + $0x13c] sm:$0xf]
      %v437 = vld [vmem:[%s1 + $0x140] sm:$0xf]
      %v438 = vld [vmem:[%s1 + $0x144] sm:$0xf]
      %v439 = vld [vmem:[%s1 + $0x148] sm:$0xf]
      %v440 = vld [vmem:[%s1 + $0x14c] sm:$0xf]
      %v441 = vld [vmem:[%s1 + $0x150] sm:$0xf]
      %v442 = vld [vmem:[%s1 + $0x154] sm:$0xf]
      %v443 = vld [vmem:[%s1 + $0x158] sm:$0xf]
      %v444 = vld [vmem:[%s1 + $0x15c] sm:$0xf]
      %v445 = vld [vmem:[%s1 + $0x160] sm:$0xf]
      %v446 = vld [vmem:[%s1 + $0x164] sm:$0xf]
      %v447 = vld [vmem:[%s1 + $0x168] sm:$0xf]
      %v448 = vld [vmem:[%s1 + $0x16c] sm:$0xf]
      %v449 = vld [vmem:[%s1 + $0x170] sm:$0xf]
      %v450 = vld [vmem:[%s1 + $0x174] sm:$0xf]
      %v451 = vld [vmem:[%s1 + $0x178] sm:$0xf]
      %v452 = vld [vmem:[%s1 + $0x17c] sm:$0xf]
      %v453 = vld [vmem:[%s1 + $0x180] sm:$0xf]
      %v454 = vld [vmem:[%s1 + $0x184] sm:$0xf]
      %v455 = vld [vmem:[%s1 + $0x188] sm:$0xf]
      %v456 = vld [vmem:[%s1 + $0x18c] sm:$0xf]
      %v457 = vld [vmem:[%s1 + $0x190] sm:$0xf]
      %v458 = vld [vmem:[%s1 + $0x194] sm:$0xf]
      %v459 = vld [vmem:[%s1 + $0x198] sm:$0xf]
      %v460 = vld [vmem:[%s1 + $0x19c] sm:$0xf]
      %v461 = vld [vmem:[%s1 + $0x1a0] sm:$0xf]
      %v462 = vld [vmem:[%s1 + $0x1a4] sm:$0xf]
      %v463 = vld [vmem:[%s1 + $0x1a8] sm:$0xf]
      %v464 = vld [vmem:[%s1 + $0x1ac] sm:$0xf]
      %v465 = vld [vmem:[%s1 + $0x1b0] sm:$0xf]
      %v466 = vld [vmem:[%s1 + $0x1b4] sm:$0xf]
      %v467 = vld [vmem:[%s1 + $0x1b8] sm:$0xf]
      %v468 = vld [vmem:[%s1 + $0x1bc] sm:$0xf]
      %v469 = vld [vmem:[%s1 + $0x1c0] sm:$0xf]
      %v470 = vld [vmem:[%s1 + $0x1c4] sm:$0xf]
      %v471 = vld [vmem:[%s1 + $0x1c8] sm:$0xf]
      %v472 = vld [vmem:[%s1 + $0x1cc] sm:$0xf]
      %v473 = vld [vmem:[%s1 + $0x1d0] sm:$0xf]
      %v474 = vld [vmem:[%s1 + $0x1d4] sm:$0xf]
      %v475 = vld [vmem:[%s1 + $0x1d8] sm:$0xf]
      %v476 = vld [vmem:[%s1 + $0x1dc] sm:$0xf]
      %v477 = vld [vmem:[%s1 + $0x1e0] sm:$0xf]
      %v478 = vld [vmem:[%s1 + $0x1e4] sm:$0xf]
      %v479 = vld [vmem:[%s1 + $0x1e8] sm:$0xf]
      %v480 = vld [vmem:[%s1 + $0x1ec] sm:$0xf]
      %v481 = vld [vmem:[%s1 + $0x1f0] sm:$0xf]
      %v482 = vld [vmem:[%s1 + $0x1f4] sm:$0xf]
      %v483 = vld [vmem:[%s1 + $0x1f8] sm:$0xf]
      %v484 = vld [vmem:[%s1 + $0x1fc] sm:$0xf]
      %v485 = vld [vmem:[%s1 + $0x200] sm:$0xf]
      %v486 = vld [vmem:[%s1 + $0x204] sm:$0xf]
      %v487 = vld [vmem:[%s1 + $0x208] sm:$0xf]
      %v488 = vld [vmem:[%s1 + $0x20c] sm:$0xf]
      %v489 = vld [vmem:[%s1 + $0x210] sm:$0xf]
      %v490 = vld [vmem:[%s1 + $0x214] sm:$0xf]
      %v491 = vld [vmem:[%s1 + $0x218] sm:$0xf]
      %v492 = vld [vmem:[%s1 + $0x21c] sm:$0xf]
      %v493 = vld [vmem:[%s1 + $0x220] sm:$0xf]
      %v494 = vld [vmem:[%s1 + $0x224] sm:$0xf]
      %v495 = vld [vmem:[%s1 + $0x228] sm:$0xf]
      %v496 = vld [vmem:[%s1 + $0x22c] sm:$0xf]
      %v497 = vld [vmem:[%s1 + $0x230] sm:$0xf]
      %v498 = vld [vmem:[%s1 + $0x234] sm:$0xf]
      %v499 = vld [vmem:[%s1 + $0x238] sm:$0xf]
      %v500 = vld [vmem:[%s1 + $0x23c] sm:$0xf]
      %v501 = vld [vmem:[%s2] sm:$0x1]
      %v503 = vperm.slane %v501, 0
      %v649 = vunpack.c.l.b16 %v357
      %v650 = vunpack.c.l.b16 %v358
      %v651 = vunpack.c.l.b16 %v359
      %v652 = vunpack.c.l.b16 %v360
      %v653 = vunpack.c.l.b16 %v361
      %v654 = vunpack.c.l.b16 %v362
      %v655 = vunpack.c.l.b16 %v363
      %v656 = vunpack.c.l.b16 %v364
      %v657 = vunpack.c.l.b16 %v365
      %v658 = vunpack.c.l.b16 %v366
      %v659 = vunpack.c.l.b16 %v367
      %v660 = vunpack.c.l.b16 %v368
      %v661 = vunpack.c.l.b16 %v369
      %v662 = vunpack.c.l.b16 %v370
      %v663 = vunpack.c.l.b16 %v371
      %v664 = vunpack.c.l.b16 %v372
      %v665 = vunpack.c.l.b16 %v373
      %v666 = vunpack.c.l.b16 %v374
      %v667 = vunpack.c.l.b16 %v375
      %v668 = vunpack.c.l.b16 %v376
      %v669 = vunpack.c.l.b16 %v377
      %v670 = vunpack.c.l.b16 %v378
      %v671 = vunpack.c.l.b16 %v379
      %v672 = vunpack.c.l.b16 %v380
      %v673 = vunpack.c.l.b16 %v381
      %v674 = vunpack.c.l.b16 %v382
      %v675 = vunpack.c.l.b16 %v383
      %v676 = vunpack.c.l.b16 %v384
      %v677 = vunpack.c.l.b16 %v385
      %v678 = vunpack.c.l.b16 %v386
      %v679 = vunpack.c.l.b16 %v387
      %v680 = vunpack.c.l.b16 %v388
      %v681 = vunpack.c.l.b16 %v389
      %v682 = vunpack.c.l.b16 %v390
      %v683 = vunpack.c.l.b16 %v391
      %v684 = vunpack.c.l.b16 %v392
      %v685 = vunpack.c.l.b16 %v393
      %v686 = vunpack.c.l.b16 %v394
      %v687 = vunpack.c.l.b16 %v395
      %v688 = vunpack.c.l.b16 %v396
      %v689 = vunpack.c.l.b16 %v397
      %v690 = vunpack.c.l.b16 %v398
      %v691 = vunpack.c.l.b16 %v399
      %v692 = vunpack.c.l.b16 %v400
      %v693 = vunpack.c.l.b16 %v401
      %v694 = vunpack.c.l.b16 %v402
      %v695 = vunpack.c.l.b16 %v403
      %v696 = vunpack.c.l.b16 %v404
      %v697 = vunpack.c.l.b16 %v405
      %v698 = vunpack.c.l.b16 %v406
      %v699 = vunpack.c.l.b16 %v407
      %v700 = vunpack.c.l.b16 %v408
      %v701 = vunpack.c.l.b16 %v409
      %v702 = vunpack.c.l.b16 %v410
      %v703 = vunpack.c.l.b16 %v411
      %v704 = vunpack.c.l.b16 %v412
      %v705 = vunpack.c.l.b16 %v413
      %v706 = vunpack.c.l.b16 %v414
      %v707 = vunpack.c.l.b16 %v415
      %v708 = vunpack.c.l.b16 %v416
      %v709 = vunpack.c.l.b16 %v417
      %v710 = vunpack.c.l.b16 %v418
      %v711 = vunpack.c.l.b16 %v419
      %v712 = vunpack.c.l.b16 %v420
      %v713 = vunpack.c.l.b16 %v421
      %v714 = vunpack.c.l.b16 %v422
      %v715 = vunpack.c.l.b16 %v423
      %v716 = vunpack.c.l.b16 %v424
      %v717 = vunpack.c.l.b16 %v425
      %v718 = vunpack.c.l.b16 %v426
      %v719 = vunpack.c.l.b16 %v427
      %v720 = vunpack.c.l.b16 %v428
      %v721 = vunpack.c.l.b16 %v429
      %v722 = vunpack.c.l.b16 %v430
      %v723 = vunpack.c.l.b16 %v431
      %v724 = vunpack.c.l.b16 %v432
      %v725 = vunpack.c.l.b16 %v433
      %v726 = vunpack.c.l.b16 %v434
      %v727 = vunpack.c.l.b16 %v435
      %v728 = vunpack.c.l.b16 %v436
      %v729 = vunpack.c.l.b16 %v437
      %v730 = vunpack.c.l.b16 %v438
      %v731 = vunpack.c.l.b16 %v439
      %v732 = vunpack.c.l.b16 %v440
      %v733 = vunpack.c.l.b16 %v441
      %v734 = vunpack.c.l.b16 %v442
      %v735 = vunpack.c.l.b16 %v443
      %v736 = vunpack.c.l.b16 %v444
      %v737 = vunpack.c.l.b16 %v445
      %v738 = vunpack.c.l.b16 %v446
      %v739 = vunpack.c.l.b16 %v447
      %v740 = vunpack.c.l.b16 %v448
      %v741 = vunpack.c.l.b16 %v449
      %v742 = vunpack.c.l.b16 %v450
      %v743 = vunpack.c.l.b16 %v451
      %v744 = vunpack.c.l.b16 %v452
      %v745 = vunpack.c.l.b16 %v453
      %v746 = vunpack.c.l.b16 %v454
      %v747 = vunpack.c.l.b16 %v455
      %v748 = vunpack.c.l.b16 %v456
      %v749 = vunpack.c.l.b16 %v457
      %v750 = vunpack.c.l.b16 %v458
      %v751 = vunpack.c.l.b16 %v459
      %v752 = vunpack.c.l.b16 %v460
      %v753 = vunpack.c.l.b16 %v461
      %v754 = vunpack.c.l.b16 %v462
      %v755 = vunpack.c.l.b16 %v463
      %v756 = vunpack.c.l.b16 %v464
      %v757 = vunpack.c.l.b16 %v465
      %v758 = vunpack.c.l.b16 %v466
      %v759 = vunpack.c.l.b16 %v467
      %v760 = vunpack.c.l.b16 %v468
      %v761 = vunpack.c.l.b16 %v469
      %v762 = vunpack.c.l.b16 %v470
      %v763 = vunpack.c.l.b16 %v471
      %v764 = vunpack.c.l.b16 %v472
      %v765 = vunpack.c.l.b16 %v473
      %v766 = vunpack.c.l.b16 %v474
      %v767 = vunpack.c.l.b16 %v475
      %v768 = vunpack.c.l.b16 %v476
      %v769 = vunpack.c.l.b16 %v477
      %v770 = vunpack.c.l.b16 %v478
      %v771 = vunpack.c.l.b16 %v479
      %v772 = vunpack.c.l.b16 %v480
      %v773 = vunpack.c.l.b16 %v481
      %v774 = vunpack.c.l.b16 %v482
      %v775 = vunpack.c.l.b16 %v483
      %v776 = vunpack.c.l.b16 %v484
      %v777 = vunpack.c.l.b16 %v485
      %v778 = vunpack.c.l.b16 %v486
      %v779 = vunpack.c.l.b16 %v487
      %v780 = vunpack.c.l.b16 %v488
      %v781 = vunpack.c.l.b16 %v489
      %v782 = vunpack.c.l.b16 %v490
      %v783 = vunpack.c.l.b16 %v491
      %v784 = vunpack.c.l.b16 %v492
      %v785 = vunpack.c.l.b16 %v493
      %v786 = vunpack.c.l.b16 %v494
      %v787 = vunpack.c.l.b16 %v495
      %v788 = vunpack.c.l.b16 %v496
      %v789 = vunpack.c.l.b16 %v497
      %v790 = vunpack.c.l.b16 %v498
      %v791 = vunpack.c.l.b16 %v499
      %v792 = vunpack.c.l.b16 %v500
      %v793 = vpack.c.b16 %v650, %v649
      %v794 = vpack.c.b16 %v652, %v651
      %v795 = vpack.c.b16 %v654, %v653
      %v796 = vpack.c.b16 %v656, %v655
      %v797 = vpack.c.b16 %v658, %v657
      %v798 = vpack.c.b16 %v660, %v659
      %v799 = vpack.c.b16 %v662, %v661
      %v800 = vpack.c.b16 %v664, %v663
      %v801 = vpack.c.b16 %v666, %v665
      %v802 = vpack.c.b16 %v668, %v667
      %v803 = vpack.c.b16 %v670, %v669
      %v804 = vpack.c.b16 %v672, %v671
      %v805 = vpack.c.b16 %v674, %v673
      %v806 = vpack.c.b16 %v676, %v675
      %v807 = vpack.c.b16 %v678, %v677
      %v808 = vpack.c.b16 %v680, %v679
      %v809 = vpack.c.b16 %v682, %v681
      %v810 = vpack.c.b16 %v684, %v683
      %v811 = vpack.c.b16 %v686, %v685
      %v812 = vpack.c.b16 %v688, %v687
      %v813 = vpack.c.b16 %v690, %v689
      %v814 = vpack.c.b16 %v692, %v691
      %v815 = vpack.c.b16 %v694, %v693
      %v816 = vpack.c.b16 %v696, %v695
      %v817 = vpack.c.b16 %v698, %v697
      %v818 = vpack.c.b16 %v700, %v699
      %v819 = vpack.c.b16 %v702, %v701
      %v820 = vpack.c.b16 %v704, %v703
      %v821 = vpack.c.b16 %v706, %v705
      %v822 = vpack.c.b16 %v708, %v707
      %v823 = vpack.c.b16 %v710, %v709
      %v824 = vpack.c.b16 %v712, %v711
      %v825 = vpack.c.b16 %v714, %v713
      %v826 = vpack.c.b16 %v716, %v715
      %v827 = vpack.c.b16 %v718, %v717
      %v828 = vpack.c.b16 %v720, %v719
      %v829 = vpack.c.b16 %v722, %v721
      %v830 = vpack.c.b16 %v724, %v723
      %v831 = vpack.c.b16 %v726, %v725
      %v832 = vpack.c.b16 %v728, %v727
      %v833 = vpack.c.b16 %v730, %v729
      %v834 = vpack.c.b16 %v732, %v731
      %v835 = vpack.c.b16 %v734, %v733
      %v836 = vpack.c.b16 %v736, %v735
      %v837 = vpack.c.b16 %v738, %v737
      %v838 = vpack.c.b16 %v740, %v739
      %v839 = vpack.c.b16 %v742, %v741
      %v840 = vpack.c.b16 %v744, %v743
      %v841 = vpack.c.b16 %v746, %v745
      %v842 = vpack.c.b16 %v748, %v747
      %v843 = vpack.c.b16 %v750, %v749
      %v844 = vpack.c.b16 %v752, %v751
      %v845 = vpack.c.b16 %v754, %v753
      %v846 = vpack.c.b16 %v756, %v755
      %v847 = vpack.c.b16 %v758, %v757
      %v848 = vpack.c.b16 %v760, %v759
      %v849 = vpack.c.b16 %v762, %v761
      %v850 = vpack.c.b16 %v764, %v763
      %v851 = vpack.c.b16 %v766, %v765
      %v852 = vpack.c.b16 %v768, %v767
      %v853 = vpack.c.b16 %v770, %v769
      %v854 = vpack.c.b16 %v772, %v771
      %v855 = vpack.c.b16 %v774, %v773
      %v856 = vpack.c.b16 %v776, %v775
      %v857 = vpack.c.b16 %v778, %v777
      %v858 = vpack.c.b16 %v780, %v779
      %v859 = vpack.c.b16 %v782, %v781
      %v860 = vpack.c.b16 %v784, %v783
      %v861 = vpack.c.b16 %v786, %v785
      %v862 = vpack.c.b16 %v788, %v787
      %v863 = vpack.c.b16 %v790, %v789
      %v864 = vpack.c.b16 %v792, %v791
      %937 = vmatpush.bf16.msra.mxu0 %v800
      %938 = vmatpush.bf16.msra.mxu0 %v799
      %939 = vmatpush.bf16.msra.mxu0 %v798
      %940 = vmatpush.bf16.msra.mxu0 %v797
      %941 = vmatpush.bf16.msra.mxu0 %v796
      %942 = vmatpush.bf16.msra.mxu0 %v795
      %943 = vmatpush.bf16.msra.mxu0 %v794
      %944 = vmatpush.bf16.msra.mxu0 %v793
      %945 = vmatmul.bf16.gmra.mxu0 %v313
      %v946 = vpop.f32.mrf.mxu0
      %v947 = vadd.f32 %v503, %v946
      %v948 = vpop.f32.mrf.mxu0
      %v949 = vadd.f32 %v503, %v948
      %950 = vmatmul.bf16.gmra.mxu0 %v314
      %v951 = vpop.f32.mrf.mxu0
      %v952 = vadd.f32 %v503, %v951
      %v953 = vpop.f32.mrf.mxu0
      %v954 = vadd.f32 %v503, %v953
      %955 = vdwg.mxu0
      %956 = vmatpush.bf16.msra.mxu0 %v808
      %957 = vmatpush.bf16.msra.mxu0 %v807
      %958 = vmatpush.bf16.msra.mxu0 %v806
      %959 = vmatpush.bf16.msra.mxu0 %v805
      %960 = vmatpush.bf16.msra.mxu0 %v804
      %961 = vmatpush.bf16.msra.mxu0 %v803
      %962 = vmatpush.bf16.msra.mxu0 %v802
      %963 = vmatpush.bf16.msra.mxu0 %v801
      %964 = vmatmul.bf16.gmra.mxu0 %v321
      %v965 = vpop.f32.mrf.mxu0
      %v966 = vadd.f32 %v947, %v965
      %v967 = vpop.f32.mrf.mxu0
      %v968 = vadd.f32 %v949, %v967
      %969 = vmatmul.bf16.gmra.mxu0 %v322
      %v970 = vpop.f32.mrf.mxu0
      %v971 = vadd.f32 %v952, %v970
      %v972 = vpop.f32.mrf.mxu0
      %v973 = vadd.f32 %v954, %v972
      %974 = vdwg.mxu0
      %975 = vmatpush.bf16.msra.mxu0 %v816
      %976 = vmatpush.bf16.msra.mxu0 %v815
      %977 = vmatpush.bf16.msra.mxu0 %v814
      %978 = vmatpush.bf16.msra.mxu0 %v813
      %979 = vmatpush.bf16.msra.mxu0 %v812
      %980 = vmatpush.bf16.msra.mxu0 %v811
      %981 = vmatpush.bf16.msra.mxu0 %v810
      %982 = vmatpush.bf16.msra.mxu0 %v809
      %983 = vmatmul.bf16.gmra.mxu0 %v329
      %v984 = vpop.f32.mrf.mxu0
      %v985 = vadd.f32 %v966, %v984
      %v986 = vpop.f32.mrf.mxu0
      %v987 = vadd.f32 %v968, %v986
      %988 = vmatmul.bf16.gmra.mxu0 %v330
      %v989 = vpop.f32.mrf.mxu0
      %v990 = vadd.f32 %v971, %v989
      %v991 = vpop.f32.mrf.mxu0
      %v992 = vadd.f32 %v973, %v991
      %993 = vdwg.mxu0
      %994 = vmatpush.bf16.msra.mxu0 %v824
      %995 = vmatpush.bf16.msra.mxu0 %v823
      %996 = vmatpush.bf16.msra.mxu0 %v822
      %997 = vmatpush.bf16.msra.mxu0 %v821
      %998 = vmatpush.bf16.msra.mxu0 %v820
      %999 = vmatpush.bf16.msra.mxu0 %v819
      %1000 = vmatpush.bf16.msra.mxu0 %v818
      %1001 = vmatpush.bf16.msra.mxu0 %v817
      %1002 = vmatmul.bf16.gmra.mxu0 %v334
      %v1003 = vpop.f32.mrf.mxu0
      %v1004 = vadd.f32 %v985, %v1003
      %v1005 = vpop.f32.mrf.mxu0
      %v1006 = vadd.f32 %v987, %v1005
      %1007 = vmatmul.bf16.gmra.mxu0 %v335
      %v1008 = vpop.f32.mrf.mxu0
      %v1009 = vadd.f32 %v990, %v1008
      %v1010 = vpop.f32.mrf.mxu0
      %v1011 = vadd.f32 %v992, %v1010
      %1012 = vdwg.mxu0
      %1013 = vmatpush.bf16.msra.mxu0 %v832
      %1014 = vmatpush.bf16.msra.mxu0 %v831
      %1015 = vmatpush.bf16.msra.mxu0 %v830
      %1016 = vmatpush.bf16.msra.mxu0 %v829
      %1017 = vmatpush.bf16.msra.mxu0 %v828
      %1018 = vmatpush.bf16.msra.mxu0 %v827
      %1019 = vmatpush.bf16.msra.mxu0 %v826
      %1020 = vmatpush.bf16.msra.mxu0 %v825
      %1021 = vmatmul.bf16.gmra.mxu0 %v339
      %v1022 = vpop.f32.mrf.mxu0
      %v1023 = vadd.f32 %v1004, %v1022
      %v1024 = vpop.f32.mrf.mxu0
      %v1025 = vadd.f32 %v1006, %v1024
      %1026 = vmatmul.bf16.gmra.mxu0 %v340
      %v1027 = vpop.f32.mrf.mxu0
      %v1028 = vadd.f32 %v1009, %v1027
      %v1029 = vpop.f32.mrf.mxu0
      %v1030 = vadd.f32 %v1011, %v1029
      %1031 = vdwg.mxu0
      %1032 = vmatpush.bf16.msra.mxu0 %v840
      %1033 = vmatpush.bf16.msra.mxu0 %v839
      %1034 = vmatpush.bf16.msra.mxu0 %v838
      %1035 = vmatpush.bf16.msra.mxu0 %v837
      %1036 = vmatpush.bf16.msra.mxu0 %v836
      %1037 = vmatpush.bf16.msra.mxu0 %v835
      %1038 = vmatpush.bf16.msra.mxu0 %v834
      %1039 = vmatpush.bf16.msra.mxu0 %v833
      %1040 = vmatmul.bf16.gmra.mxu0 %v344
      %v1041 = vpop.f32.mrf.mxu0
      %v1042 = vadd.f32 %v1023, %v1041
      %v1043 = vpop.f32.mrf.mxu0
      %v1044 = vadd.f32 %v1025, %v1043
      %1045 = vmatmul.bf16.gmra.mxu0 %v345
      %v1046 = vpop.f32.mrf.mxu0
      %v1047 = vadd.f32 %v1028, %v1046
      %v1048 = vpop.f32.mrf.mxu0
      %v1049 = vadd.f32 %v1030, %v1048
      %1050 = vdwg.mxu0
      %1051 = vmatpush.bf16.msra.mxu0 %v848
      %1052 = vmatpush.bf16.msra.mxu0 %v847
      %1053 = vmatpush.bf16.msra.mxu0 %v846
      %1054 = vmatpush.bf16.msra.mxu0 %v845
      %1055 = vmatpush.bf16.msra.mxu0 %v844
      %1056 = vmatpush.bf16.msra.mxu0 %v843
      %1057 = vmatpush.bf16.msra.mxu0 %v842
      %1058 = vmatpush.bf16.msra.mxu0 %v841
      %1059 = vmatmul.bf16.gmra.mxu0 %v314
      %v1060 = vpop.f32.mrf.mxu0
      %v1061 = vadd.f32 %v1042, %v1060
      %v1062 = vpop.f32.mrf.mxu0
      %v1063 = vadd.f32 %v1044, %v1062
      %1064 = vmatmul.bf16.gmra.mxu0 %v349
      %v1065 = vpop.f32.mrf.mxu0
      %v1066 = vadd.f32 %v1047, %v1065
      %v1067 = vpop.f32.mrf.mxu0
      %v1068 = vadd.f32 %v1049, %v1067
      %1069 = vdwg.mxu0
      %1070 = vmatpush.bf16.msra.mxu0 %v856
      %1071 = vmatpush.bf16.msra.mxu0 %v855
      %1072 = vmatpush.bf16.msra.mxu0 %v854
      %1073 = vmatpush.bf16.msra.mxu0 %v853
      %1074 = vmatpush.bf16.msra.mxu0 %v852
      %1075 = vmatpush.bf16.msra.mxu0 %v851
      %1076 = vmatpush.bf16.msra.mxu0 %v850
      %1077 = vmatpush.bf16.msra.mxu0 %v849
      %1078 = vmatmul.bf16.gmra.mxu0 %v322
      %v1079 = vpop.f32.mrf.mxu0
      %v1080 = vadd.f32 %v1061, %v1079
      %v1081 = vpop.f32.mrf.mxu0
      %v1082 = vadd.f32 %v1063, %v1081
      %1083 = vmatmul.bf16.gmra.mxu0 %v352
      %v1084 = vpop.f32.mrf.mxu0
      %v1085 = vadd.f32 %v1066, %v1084
      %v1086 = vpop.f32.mrf.mxu0
      %v1087 = vadd.f32 %v1068, %v1086
      %1088 = vdwg.mxu0
      %1089 = vmatpush.bf16.msra.mxu0 %v864
      %1090 = vmatpush.bf16.msra.mxu0 %v863
      %1091 = vmatpush.bf16.msra.mxu0 %v862
      %1092 = vmatpush.bf16.msra.mxu0 %v861
      %1093 = vmatpush.bf16.msra.mxu0 %v860
      %1094 = vmatpush.bf16.msra.mxu0 %v859
      %1095 = vmatpush.bf16.msra.mxu0 %v858
      %1096 = vmatpush.bf16.msra.mxu0 %v857
      %1097 = vmatmul.bf16.gmra.mxu0 %v330
      %v1098 = vpop.f32.mrf.mxu0
      %v1099 = vadd.f32 %v1080, %v1098
      %v1100 = vpop.f32.mrf.mxu0
      %v1101 = vadd.f32 %v1082, %v1100
      %1102 = vmatmul.bf16.gmra.mxu0 %v355
      %v1103 = vpop.f32.mrf.mxu0
      %v1104 = vadd.f32 %v1085, %v1103
      %v1105 = vpop.f32.mrf.mxu0
      %v1106 = vadd.f32 %v1087, %v1105
      %1107 = vdwg.mxu0
      %v1108 = vpack.c.bf16 %v1099, %v1099
      %v1109 = vpack.c.bf16 %v1101, %v1101
      %v1110 = vpack.c.bf16 %v1104, %v1104
      %v1111 = vpack.c.bf16 %v1106, %v1106
      %1112 = vst [vmem:[%s170] sm:$0xf] %v1108
      %1113 = vst [vmem:[%s170 + $0x4] sm:$0xf] %v1109
      %1114 = vst [vmem:[%s170 + $0x8] sm:$0xf] %v1110
      %1115 = vst [vmem:[%s170 + $0xc] sm:$0xf] %v1111
      %p1116 = scmp.lt.s32.totalorder %s14, 3
      %s1117 = scalar_select %p1116, %s14, 3
      %s1118 = smul.addr %s1117, 4
      %s1119 = smul.addr %s1118, 4
      %s1120 = scalar_lea.vmem %s3, %s1119
      // Predicated region
      $region33: #{encoder_forward.5} parent=31 // pred_check
        %p1121 = pneg %p100
      $region34: #{encoder_forward.5} parent=31 // pred_check_branch
        %1123 = sbr.rel (%p1121) target = $region36
      $region35: #{encoder_forward.5} parent=31 // pred_region
        _
      $region36: #{encoder_forward.5} parent=31 // pred_fallthru
        _
    $region32: #{encoder_forward.5} parent=5 // pred_fallthru
      _
    %p1124 = scmp.le.s32.totalorder 2, %s9
    // Predicated region
    $region37: #{encoder_forward.5} parent=5 // pred_check
      %p1125 = pneg %p1124
    $region38: #{encoder_forward.5} parent=5 // pred_check_branch
      %1127 = sbr.rel (%p1125) target = $region40
    $region39: #{encoder_forward.5} parent=5 // pred_region
      %s1128 = ssub.s32 %s9, 2
      // Predicated region
      $region41: #{encoder_forward.5} parent=39 // pred_check
        %p1129 = pneg %p106
      $region42: #{encoder_forward.5} parent=39 // pred_check_branch
        %1131 = sbr.rel (%p1129) target = $region44
      $region43: #{encoder_forward.5} parent=39 // pred_region
        %p1132 = scmp.lt.s32.totalorder %s15, 3
        %s1133 = scalar_select %p1132, %s15, 3
        %s1134 = smul.addr %s1133, 4
        %s1135 = smul.addr %s1134, 4
        %s1136 = scalar_lea.vmem %s3, %s1135
      $region44: #{encoder_forward.5} parent=39 // pred_fallthru
        _
    $region40: #{encoder_forward.5} parent=5 // pred_fallthru
      _
  $region6: #{encoder_forward.5} parent=0 // loop_footer
    %s13 = sadd.s32 1, %s9
  $region7: #{encoder_forward.5} parent=0 // loop_footer_branch
    %8 = sbr.rel target = $region3
  $region8: #{encoder_forward.5} parent=0 // loop_exit
    _

// kernel: encoder_forward.6
$region0: #{encoder_forward.6}
  #allocation0 [shape = 'u32[]', space=smem, size = 0x4, offset = 0x4, fixed_abs, tag = 'smem constant byte address 0x4 - core index']
  #allocation1 [shape = 'u32[72,128]{1,0:T(1,128)}', space=vmem, size = 0x9000, scoped, tag = 'internal scratch']
  %s0 = inlined_call_operand.vmem [shape: bf16[4,6,10,128], index: 0, kind: input, shape index: {}]
  %s1 = inlined_call_operand.vmem [shape: bf16[1152,128], index: 1, kind: input, shape index: {}]
  %s2 = inlined_call_operand.vmem [shape: f32[1,128], index: 2, kind: input, shape index: {}]
  %s3 = inlined_call_operand.vmem [shape: bf16[128,128], index: 3, kind: input, shape index: {}]
  %s4 = inlined_call_operand.vmem [shape: f32[1,128], index: 4, kind: input, shape index: {}]
  %s5 = inlined_call_operand.vmem [shape: bf16[4,4,8,128], index: 5, kind: output, shape index: {}]
  %s6 = sld [smem:[#allocation0]]
  $region53: #{encoder_forward.6} parent=0
    _
  %s8 = ssub.s32 1, %s6
  %s9 = scalar_select 0, %s8, %s6
  loop: start=0, step=1, limit=6
  $region2: #{encoder_forward.6} parent=0 // loop_pre_header
    _
  $region3: #{encoder_forward.6} parent=0 // loop_header
    %s11 = sphi 0, %s15
    %p12 = scmp.ge.s32.totalorder %s11, 6
    %s21 = sphi 0, %s23
    %s24 = sphi 0, %s21
    %s25 = sphi 0, %s24
    %s41 = sphi 0, %s25
    %s45 = sphi 0, %s45
    %s47 = sphi 0, %s45
    %s48 = sphi 0, %s47
    %s62 = sphi 0, %s48
    %s66 = sphi 0, %s66
    %s68 = sphi 0, %s66
    %s69 = sphi 0, %s68
    %s83 = sphi 0, %s69
    %s87 = sphi 0, %s87
    %s89 = sphi 0, %s87
    %s90 = sphi 0, %s89
    %s104 = sphi 0, %s90
    %s108 = sphi 0, %s108
    %s110 = sphi 0, %s108
    %s111 = sphi 0, %s110
    %s125 = sphi 0, %s111
    %s131 = sphi 0, %s133
    %s134 = sphi 0, %s131
    %s135 = sphi 0, %s134
    %s151 = sphi 0, %s135
  $region4: #{encoder_forward.6} parent=0 // loop_header_branch
    %14 = sbr.rel (%p12) target = $region8
  $region5: #{encoder_forward.6} parent=0 // loop_body
    %s16 = ssub.s32 %s11, 1
    %s17 = ssub.s32 %s11, 2
    %s18 = sadd.s32 %s11, 1
    %s19 = ssub.s32 %s11, %s18
    %p20 = scmp.eq.s32.totalorder %s19, 0
    %s22 = sadd.s32 %s21, 1
    %s23 = scalar_select %p20, %s21, %s22
    %p26 = pneg %p20
    %p27 = scmp.eq.s32.totalorder %s11, 3
    %p28 = por %p26, %p27
    %p29 = scmp.ne.s32.totalorder %s21, %s24
    %p30 = scmp.eq.s32.totalorder %s11, 0
    %p31 = por %p29, %p30
    %p32 = scmp.ne.s32.totalorder %s21, %s24
    %p33 = scmp.eq.s32.totalorder %s16, 3
    %p34 = por %p32, %p33
    %p35 = scmp.ne.s32.totalorder %s24, %s25
    %p36 = scmp.eq.s32.totalorder %s16, 0
    %p37 = por %p35, %p36
    %p38 = scmp.ne.s32.totalorder %s24, %s25
    %p39 = scmp.eq.s32.totalorder %s17, 3
    %p40 = por %p38, %p39
    %p42 = scmp.ne.s32.totalorder %s25, %s41
    %p43 = scmp.eq.s32.totalorder %s17, 0
    %p44 = por %p42, %p43
    %s46 = sadd.s32 %s45, 1
    %p49 = scmp.eq.s32.totalorder %s11, 3
    %p50 = scmp.ne.s32.totalorder %s45, %s47
    %p51 = scmp.eq.s32.totalorder %s11, 0
    %p52 = por %p50, %p51
    %p53 = scmp.ne.s32.totalorder %s45, %s47
    %p54 = scmp.eq.s32.totalorder %s16, 3
    %p55 = por %p53, %p54
    %p56 = scmp.ne.s32.totalorder %s47, %s48
    %p57 = scmp.eq.s32.totalorder %s16, 0
    %p58 = por %p56, %p57
    %p59 = scmp.ne.s32.totalorder %s47, %s48
    %p60 = scmp.eq.s32.totalorder %s17, 3
    %p61 = por %p59, %p60
    %p63 = scmp.ne.s32.totalorder %s48, %s62
    %p64 = scmp.eq.s32.totalorder %s17, 0
    %p65 = por %p63, %p64
    %s67 = sadd.s32 %s66, 1
    %p70 = scmp.eq.s32.totalorder %s11, 3
    %p71 = scmp.ne.s32.totalorder %s66, %s68
    %p72 = scmp.eq.s32.totalorder %s11, 0
    %p73 = por %p71, %p72
    %p74 = scmp.ne.s32.totalorder %s66, %s68
    %p75 = scmp.eq.s32.totalorder %s16, 3
    %p76 = por %p74, %p75
    %p77 = scmp.ne.s32.totalorder %s68, %s69
    %p78 = scmp.eq.s32.totalorder %s16, 0
    %p79 = por %p77, %p78
    %p80 = scmp.ne.s32.totalorder %s68, %s69
    %p81 = scmp.eq.s32.totalorder %s17, 3
    %p82 = por %p80, %p81
    %p84 = scmp.ne.s32.totalorder %s69, %s83
    %p85 = scmp.eq.s32.totalorder %s17, 0
    %p86 = por %p84, %p85
    %s88 = sadd.s32 %s87, 1
    %p91 = scmp.eq.s32.totalorder %s11, 3
    %p92 = scmp.ne.s32.totalorder %s87, %s89
    %p93 = scmp.eq.s32.totalorder %s11, 0
    %p94 = por %p92, %p93
    %p95 = scmp.ne.s32.totalorder %s87, %s89
    %p96 = scmp.eq.s32.totalorder %s16, 3
    %p97 = por %p95, %p96
    %p98 = scmp.ne.s32.totalorder %s89, %s90
    %p99 = scmp.eq.s32.totalorder %s16, 0
    %p100 = por %p98, %p99
    %p101 = scmp.ne.s32.totalorder %s89, %s90
    %p102 = scmp.eq.s32.totalorder %s17, 3
    %p103 = por %p101, %p102
    %p105 = scmp.ne.s32.totalorder %s90, %s104
    %p106 = scmp.eq.s32.totalorder %s17, 0
    %p107 = por %p105, %p106
    %s109 = sadd.s32 %s108, 1
    %p112 = scmp.eq.s32.totalorder %s11, 3
    %p113 = scmp.ne.s32.totalorder %s108, %s110
    %p114 = scmp.eq.s32.totalorder %s11, 0
    %p115 = por %p113, %p114
    %p116 = scmp.ne.s32.totalorder %s108, %s110
    %p117 = scmp.eq.s32.totalorder %s16, 3
    %p118 = por %p116, %p117
    %p119 = scmp.ne.s32.totalorder %s110, %s111
    %p120 = scmp.eq.s32.totalorder %s16, 0
    %p121 = por %p119, %p120
    %p122 = scmp.ne.s32.totalorder %s110, %s111
    %p123 = scmp.eq.s32.totalorder %s17, 3
    %p124 = por %p122, %p123
    %p126 = scmp.ne.s32.totalorder %s111, %s125
    %p127 = scmp.eq.s32.totalorder %s17, 0
    %p128 = por %p126, %p127
    %s129 = ssub.s32 %s11, %s18
    %p130 = scmp.eq.s32.totalorder %s129, 0
    %s132 = sadd.s32 %s131, 1
    %s133 = scalar_select %p130, %s131, %s132
    %p136 = pneg %p130
    %p137 = scmp.eq.s32.totalorder %s11, 3
    %p138 = por %p136, %p137
    %p139 = scmp.ne.s32.totalorder %s131, %s134
    %p140 = scmp.eq.s32.totalorder %s11, 0
    %p141 = por %p139, %p140
    %p142 = scmp.ne.s32.totalorder %s131, %s134
    %p143 = scmp.eq.s32.totalorder %s16, 3
    %p144 = por %p142, %p143
    %p145 = scmp.ne.s32.totalorder %s134, %s135
    %p146 = scmp.eq.s32.totalorder %s16, 0
    %p147 = por %p145, %p146
    %p148 = scmp.ne.s32.totalorder %s134, %s135
    %p149 = scmp.eq.s32.totalorder %s17, 3
    %p150 = por %p148, %p149
    %p152 = scmp.ne.s32.totalorder %s135, %s151
    %p153 = scmp.eq.s32.totalorder %s17, 0
    %p154 = por %p152, %p153
    %p155 = scmp.le.s32.totalorder 1, %s11
    %p156 = scmp.lt.s32.totalorder %s11, 5
    %p157 = pnand %p155, %p156
    %p158 = pneg %p157
    // Predicated region
    $region9: #{encoder_forward.6} parent=5 // pred_check
      _
    $region10: #{encoder_forward.6} parent=5 // pred_check_branch
      %160 = sbr.rel (%p157) target = $region12
    $region11: #{encoder_forward.6} parent=5 // pred_region
      %s161 = ssub.s32 %s11, 1
      // Predicated region
      $region13: #{encoder_forward.6} parent=11 // pred_check
        %p162 = pneg %p58
      $region14: #{encoder_forward.6} parent=11 // pred_check_branch
        %164 = sbr.rel (%p162) target = $region16
      $region15: #{encoder_forward.6} parent=11 // pred_region
        _
      $region16: #{encoder_forward.6} parent=11 // pred_fallthru
        _
      // Predicated region
      $region17: #{encoder_forward.6} parent=11 // pred_check
        %p165 = pneg %p79
      $region18: #{encoder_forward.6} parent=11 // pred_check_branch
        %167 = sbr.rel (%p165) target = $region20
      $region19: #{encoder_forward.6} parent=11 // pred_region
        _
      $region20: #{encoder_forward.6} parent=11 // pred_fallthru
        _
      // Predicated region
      $region21: #{encoder_forward.6} parent=11 // pred_check
        %p168 = pneg %p100
      $region22: #{encoder_forward.6} parent=11 // pred_check_branch
        %170 = sbr.rel (%p168) target = $region24
      $region23: #{encoder_forward.6} parent=11 // pred_region
        _
      $region24: #{encoder_forward.6} parent=11 // pred_fallthru
        _
      // Predicated region
      $region25: #{encoder_forward.6} parent=11 // pred_check
        %p171 = pneg %p121
      $region26: #{encoder_forward.6} parent=11 // pred_check_branch
        %173 = sbr.rel (%p171) target = $region28
      $region27: #{encoder_forward.6} parent=11 // pred_region
        _
      $region28: #{encoder_forward.6} parent=11 // pred_fallthru
        _
    $region12: #{encoder_forward.6} parent=5 // pred_fallthru
      _
    %p174 = scmp.lt.s32.totalorder %s11, 4
    // Predicated region
    $region29: #{encoder_forward.6} parent=5 // pred_check
      %p175 = pneg %p174
    $region30: #{encoder_forward.6} parent=5 // pred_check_branch
      %177 = sbr.rel (%p175) target = $region32
    $region31: #{encoder_forward.6} parent=5 // pred_region
      // Predicated region
      $region33: #{encoder_forward.6} parent=31 // pred_check
        %p178 = pneg %p31
      $region34: #{encoder_forward.6} parent=31 // pred_check_branch
        %180 = sbr.rel (%p178) target = $region36
      $region35: #{encoder_forward.6} parent=31 // pred_region
        %p181 = scmp.lt.s32.totalorder %s11, 3
        %s182 = scalar_select %p181, %s11, 3
        %s183 = smul.addr %s182, 12
        %s184 = smul.addr %s183, 4
        %s185 = scalar_lea.vmem %s0, %s184
      $region36: #{encoder_forward.6} parent=31 // pred_fallthru
        _
    $region32: #{encoder_forward.6} parent=5 // pred_fallthru
      _
    %p186 = scmp.le.s32.totalorder 1, %s11
    %p187 = scmp.lt.s32.totalorder %s11, 5
    %p188 = pnand %p186, %p187
    %p189 = pneg %p188
    // Predicated region
    $region37: #{encoder_forward.6} parent=5 // pred_check
      _
    $region38: #{encoder_forward.6} parent=5 // pred_check_branch
      %191 = sbr.rel (%p188) target = $region40
    $region39: #{encoder_forward.6} parent=5 // pred_region
      %s192 = ssub.s32 %s11, 1
      %p193 = scmp.lt.s32.totalorder %s16, 3
      %s194 = scalar_select %p193, %s16, 3
      %s195 = smul.addr %s194, 12
      %s196 = smul.addr %s195, 4
      %s197 = scalar_lea.vmem %s0, %s196
      %p198 = pneg %p37
      %p199 = pneg %p34
      %p200 = pneg %p58
      %p201 = pneg %p55
      %p202 = pneg %p79
      %p203 = pneg %p76
      %p204 = pneg %p100
      %p205 = pneg %p97
      %p206 = pneg %p121
      %p207 = pneg %p118
      %p208 = pneg %p147
      %p209 = pneg %p144
      %p210 = scmp.lt.s32.totalorder %s16, 3
      %s211 = scalar_select %p210, %s16, 3
      %s212 = smul.addr %s211, 4
      %s213 = smul.addr %s212, 4
      %s214 = scalar_lea.vmem %s5, %s213
      %p215 = scmp.lt.s32.totalorder %s16, 3
      %s216 = scalar_select %p215, %s16, 3
      %s217 = smul.addr %s216, 12
      %s218 = smul.addr %s217, 4
      %s219 = scalar_lea.vmem %s0, %s218
      %p220 = scmp.lt.s32.totalorder %s16, 3
      %s221 = scalar_select %p220, %s16, 3
      %s222 = smul.addr %s221, 4
      %s223 = smul.addr %s222, 4
      %s224 = scalar_lea.vmem %s5, %s223
      %v225 = vld [vmem:[%s219] sm:$0xf]
      %v226 = vld [vmem:[%s219 + $0x4] sm:$0x1]
      %v227 = vld [vmem:[%s219 + $0x8] sm:$0xf]
      %v228 = vld [vmem:[%s219 + $0xc] sm:$0x1]
      %v229 = vld [vmem:[%s219 + $0x10] sm:$0xf]
      %v230 = vld [vmem:[%s219 + $0x14] sm:$0x1]
      %v231 = vld [vmem:[%s219 + $0x18] sm:$0xf]
      %v232 = vld [vmem:[%s219 + $0x1c] sm:$0x1]
      %v233 = vld [vmem:[%s219 + $0x20] sm:$0xf]
      %v234 = vld [vmem:[%s219 + $0x24] sm:$0x1]
      %v235 = vld [vmem:[%s219 + $0x28] sm:$0xf]
      %v236 = vld [vmem:[%s219 + $0x2c] sm:$0x1]
      %vm237 = vsmask.f32 3328
      %vm238 = vsmask.f32 7440
      %vm239 = vmor %vm237, %vm238
      %v241 = vshrl.u32 %v227, 16
      %v243 = vrot.slane %v241, 4
      %v244 = vshll.u32 %v227, 16
      %v246 = vrot.slane %v244, 5
      %v247 = vor.u32 %v243, %v246
      %v248 = vrot.slane %v247, 4
      %v250 = vshll.u32 %v228, 16
      %v252 = vrot.slane %v250, 5
      %v253 = vsel %vm239, %v248, %v252
      %v255 = vshrl.u32 %v229, 16
      %v257 = vrot.slane %v255, 4
      %v258 = vshll.u32 %v229, 16
      %v260 = vrot.slane %v258, 5
      %v261 = vor.u32 %v257, %v260
      %v262 = vrot.slane %v261, 4
      %v264 = vshll.u32 %v230, 16
      %v266 = vrot.slane %v264, 5
      %v267 = vsel %vm239, %v262, %v266
      %v269 = vshrl.u32 %v231, 16
      %v271 = vrot.slane %v269, 4
      %v272 = vshll.u32 %v231, 16
      %v274 = vrot.slane %v272, 5
      %v275 = vor.u32 %v271, %v274
      %v276 = vrot.slane %v275, 4
      %v278 = vshll.u32 %v232, 16
      %v280 = vrot.slane %v278, 5
      %v281 = vsel %vm239, %v276, %v280
      %v283 = vshrl.u32 %v233, 16
      %v285 = vrot.slane %v283, 4
      %v286 = vshll.u32 %v233, 16
      %v288 = vrot.slane %v286, 5
      %v289 = vor.u32 %v285, %v288
      %v290 = vrot.slane %v289, 4
      %v292 = vshll.u32 %v234, 16
      %v294 = vrot.slane %v292, 5
      %v295 = vsel %vm239, %v290, %v294
      %v300 = vunpack.c.l.bf16 %v253
      %v301 = vunpack.c.l.bf16 %v267
      %v302 = vunpack.c.l.bf16 %v281
      %v303 = vunpack.c.l.bf16 %v295
      %v304 = vunpack.c.l.bf16 %v225
      %v305 = vunpack.c.l.bf16 %v226
      %v306 = vunpack.c.l.bf16 %v227
      %v307 = vunpack.c.l.bf16 %v228
      %v308 = vunpack.c.l.bf16 %v229
      %v309 = vunpack.c.l.bf16 %v230
      %v310 = vunpack.c.l.bf16 %v231
      %v311 = vunpack.c.l.bf16 %v232
      %v312 = vunpack.c.l.bf16 %v233
      %v313 = vunpack.c.l.bf16 %v234
      %v314 = vunpack.c.l.bf16 %v235
      %v315 = vunpack.c.l.bf16 %v236
      %v316 = vmax.f32 %v304, 0.0
      %v317 = vmax.f32 %v305, 0.0
      %v318 = vmax.f32 %v306, 0.0
      %v319 = vmax.f32 %v307, 0.0
      %v320 = vmax.f32 %v308, 0.0
      %v321 = vmax.f32 %v309, 0.0
      %v322 = vmax.f32 %v310, 0.0
      %v323 = vmax.f32 %v311, 0.0
      %v324 = vmax.f32 %v312, 0.0
      %v325 = vmax.f32 %v313, 0.0
      %v326 = vmax.f32 %v314, 0.0
      %v327 = vmax.f32 %v315, 0.0
      %v328 = vpack.c.bf16 %v316, %v316
      %v329 = vpack.c.bf16 %v317, %v317
      %v330 = vpack.c.bf16 %v318, %v318
      %v331 = vpack.c.bf16 %v319, %v319
      %v332 = vpack.c.bf16 %v320, %v320
      %v333 = vpack.c.bf16 %v321, %v321
      %v334 = vpack.c.bf16 %v322, %v322
      %v335 = vpack.c.bf16 %v323, %v323
      %v336 = vpack.c.bf16 %v324, %v324
      %v337 = vpack.c.bf16 %v325, %v325
      %v338 = vpack.c.bf16 %v326, %v326
      %v339 = vpack.c.bf16 %v327, %v327
      %v341 = vshrl.u32 %v328, 16
      %v343 = vrot.slane %v341, 4
      %v344 = vshll.u32 %v328, 16
      %v346 = vrot.slane %v344, 5
      %v347 = vor.u32 %v343, %v346
      %v348 = vrot.slane %v347, 4
      %v350 = vshll.u32 %v329, 16
      %v352 = vrot.slane %v350, 5
      %v353 = vsel %vm239, %v348, %v352
      %v355 = vshrl.u32 %v330, 16
      %v357 = vrot.slane %v355, 4
      %v358 = vshll.u32 %v330, 16
      %v360 = vrot.slane %v358, 5
      %v361 = vor.u32 %v357, %v360
      %v362 = vrot.slane %v361, 4
      %v364 = vshll.u32 %v331, 16
      %v366 = vrot.slane %v364, 5
      %v367 = vsel %vm239, %v362, %v366
      %v369 = vshrl.u32 %v332, 16
      %v371 = vrot.slane %v369, 4
      %v372 = vshll.u32 %v332, 16
      %v374 = vrot.slane %v372, 5
      %v375 = vor.u32 %v371, %v374
      %v376 = vrot.slane %v375, 4
      %v378 = vshll.u32 %v333, 16
      %v380 = vrot.slane %v378, 5
      %v381 = vsel %vm239, %v376, %v380
      %v383 = vshrl.u32 %v334, 16
      %v385 = vrot.slane %v383, 4
      %v386 = vshll.u32 %v334, 16
      %v388 = vrot.slane %v386, 5
      %v389 = vor.u32 %v385, %v388
      %v390 = vrot.slane %v389, 4
      %v392 = vshll.u32 %v335, 16
      %v394 = vrot.slane %v392, 5
      %v395 = vsel %vm239, %v390, %v394
      %v397 = vshrl.u32 %v336, 16
      %v399 = vrot.slane %v397, 4
      %v400 = vshll.u32 %v336, 16
      %v402 = vrot.slane %v400, 5
      %v403 = vor.u32 %v399, %v402
      %v404 = vrot.slane %v403, 4
      %v406 = vshll.u32 %v337, 16
      %v408 = vrot.slane %v406, 5
      %v409 = vsel %vm239, %v404, %v408
      %v411 = vshrl.u32 %v338, 16
      %v413 = vrot.slane %v411, 4
      %v414 = vshll.u32 %v338, 16
      %v416 = vrot.slane %v414, 5
      %v417 = vor.u32 %v413, %v416
      %v418 = vrot.slane %v417, 4
      %v420 = vshll.u32 %v339, 16
      %v422 = vrot.slane %v420, 5
      %v423 = vsel %vm239, %v418, %v422
      %vm436 = vcmask 1042432
      %vm437 = vcmask 1046532
      %vm438 = vmor %vm436, %vm437
      %v439 = vrot.slane %v328, 5
      %v440 = vrot.slane %v439, 4
      %v441 = vrot.slane %v329, 5
      %v442 = vsel %vm438, %v440, %v441
      %v443 = vrot.slane %v330, 5
      %v444 = vrot.slane %v443, 4
      %v445 = vrot.slane %v331, 5
      %v446 = vsel %vm438, %v444, %v445
      %v447 = vrot.slane %v332, 5
      %v448 = vrot.slane %v447, 4
      %v449 = vrot.slane %v333, 5
      %v450 = vsel %vm438, %v448, %v449
      %v451 = vrot.slane %v334, 5
      %v452 = vrot.slane %v451, 4
      %v453 = vrot.slane %v335, 5
      %v454 = vsel %vm438, %v452, %v453
      %v455 = vrot.slane %v336, 5
      %v456 = vrot.slane %v455, 4
      %v457 = vrot.slane %v337, 5
      %v458 = vsel %vm438, %v456, %v457
      %v459 = vrot.slane %v338, 5
      %v460 = vrot.slane %v459, 4
      %v461 = vrot.slane %v339, 5
      %v462 = vsel %vm438, %v460, %v461
      %v463 = vunpack.c.l.b16 %v328
      %v464 = vunpack.c.l.b16 %v330
      %v465 = vunpack.c.l.b16 %v332
      %v466 = vunpack.c.l.b16 %v334
      %v467 = vpack.c.b16 %v464, %v463
      %v468 = vpack.c.b16 %v466, %v465
      %v471 = vunpack.c.l.b16 %v353
      %v472 = vunpack.c.l.b16 %v367
      %v473 = vunpack.c.l.b16 %v381
      %v474 = vunpack.c.l.b16 %v395
      %v475 = vpack.c.b16 %v472, %v471
      %v476 = vpack.c.b16 %v474, %v473
      %v479 = vunpack.c.l.b16 %v442
      %v480 = vunpack.c.l.b16 %v446
      %v481 = vunpack.c.l.b16 %v450
      %v482 = vunpack.c.l.b16 %v454
      %v483 = vpack.c.b16 %v480, %v479
      %v484 = vpack.c.b16 %v482, %v481
      %v487 = vunpack.c.l.b16 %v336
      %v488 = vpack.c.b16 %v465, %v464
      %v489 = vpack.c.b16 %v487, %v466
      %v492 = vunpack.c.l.b16 %v409
      %v493 = vpack.c.b16 %v473, %v472
      %v494 = vpack.c.b16 %v492, %v474
      %v497 = vunpack.c.l.b16 %v458
      %v498 = vpack.c.b16 %v481, %v480
      %v499 = vpack.c.b16 %v497, %v482
      %v502 = vunpack.c.l.b16 %v338
      %v503 = vpack.c.b16 %v502, %v487
      %v505 = vunpack.c.l.b16 %v423
      %v506 = vpack.c.b16 %v505, %v492
      %v508 = vunpack.c.l.b16 %v462
      %v509 = vpack.c.b16 %v508, %v497
      %v511 = vld [vmem:[%s1] sm:$0xf]
      %v512 = vld [vmem:[%s1 + $0x4] sm:$0xf]
      %v513 = vld [vmem:[%s1 + $0x8] sm:$0xf]
      %v514 = vld [vmem:[%s1 + $0xc] sm:$0xf]
      %v515 = vld [vmem:[%s1 + $0x10] sm:$0xf]
      %v516 = vld [vmem:[%s1 + $0x14] sm:$0xf]
      %v517 = vld [vmem:[%s1 + $0x18] sm:$0xf]
      %v518 = vld [vmem:[%s1 + $0x1c] sm:$0xf]
      %v519 = vld [vmem:[%s1 + $0x20] sm:$0xf]
      %v520 = vld [vmem:[%s1 + $0x24] sm:$0xf]
      %v521 = vld [vmem:[%s1 + $0x28] sm:$0xf]
      %v522 = vld [vmem:[%s1 + $0x2c] sm:$0xf]
      %v523 = vld [vmem:[%s1 + $0x30] sm:$0xf]
      %v524 = vld [vmem:[%s1 + $0x34] sm:$0xf]
      %v525 = vld [vmem:[%s1 + $0x38] sm:$0xf]
      %v526 = vld [vmem:[%s1 + $0x3c] sm:$0xf]
      %v527 = vld [vmem:[%s1 + $0x40] sm:$0xf]
      %v528 = vld [vmem:[%s1 + $0x44] sm:$0xf]
      %v529 = vld [vmem:[%s1 + $0x48] sm:$0xf]
      %v530 = vld [vmem:[%s1 + $0x4c] sm:$0xf]
      %v531 = vld [vmem:[%s1 + $0x50] sm:$0xf]
      %v532 = vld [vmem:[%s1 + $0x54] sm:$0xf]
      %v533 = vld [vmem:[%s1 + $0x58] sm:$0xf]
      %v534 = vld [vmem:[%s1 + $0x5c] sm:$0xf]
      %v535 = vld [vmem:[%s1 + $0x60] sm:$0xf]
      %v536 = vld [vmem:[%s1 + $0x64] sm:$0xf]
      %v537 = vld [vmem:[%s1 + $0x68] sm:$0xf]
      %v538 = vld [vmem:[%s1 + $0x6c] sm:$0xf]
      %v539 = vld [vmem:[%s1 + $0x70] sm:$0xf]
      %v540 = vld [vmem:[%s1 + $0x74] sm:$0xf]
      %v541 = vld [vmem:[%s1 + $0x78] sm:$0xf]
      %v542 = vld [vmem:[%s1 + $0x7c] sm:$0xf]
      %v543 = vld [vmem:[%s1 + $0x80] sm:$0xf]
      %v544 = vld [vmem:[%s1 + $0x84] sm:$0xf]
      %v545 = vld [vmem:[%s1 + $0x88] sm:$0xf]
      %v546 = vld [vmem:[%s1 + $0x8c] sm:$0xf]
      %v547 = vld [vmem:[%s1 + $0x90] sm:$0xf]
      %v548 = vld [vmem:[%s1 + $0x94] sm:$0xf]
      %v549 = vld [vmem:[%s1 + $0x98] sm:$0xf]
      %v550 = vld [vmem:[%s1 + $0x9c] sm:$0xf]
      %v551 = vld [vmem:[%s1 + $0xa0] sm:$0xf]
      %v552 = vld [vmem:[%s1 + $0xa4] sm:$0xf]
      %v553 = vld [vmem:[%s1 + $0xa8] sm:$0xf]
      %v554 = vld [vmem:[%s1 + $0xac] sm:$0xf]
      %v555 = vld [vmem:[%s1 + $0xb0] sm:$0xf]
      %v556 = vld [vmem:[%s1 + $0xb4] sm:$0xf]
      %v557 = vld [vmem:[%s1 + $0xb8] sm:$0xf]
      %v558 = vld [vmem:[%s1 + $0xbc] sm:$0xf]
      %v559 = vld [vmem:[%s1 + $0xc0] sm:$0xf]
      %v560 = vld [vmem:[%s1 + $0xc4] sm:$0xf]
      %v561 = vld [vmem:[%s1 + $0xc8] sm:$0xf]
      %v562 = vld [vmem:[%s1 + $0xcc] sm:$0xf]
      %v563 = vld [vmem:[%s1 + $0xd0] sm:$0xf]
      %v564 = vld [vmem:[%s1 + $0xd4] sm:$0xf]
      %v565 = vld [vmem:[%s1 + $0xd8] sm:$0xf]
      %v566 = vld [vmem:[%s1 + $0xdc] sm:$0xf]
      %v567 = vld [vmem:[%s1 + $0xe0] sm:$0xf]
      %v568 = vld [vmem:[%s1 + $0xe4] sm:$0xf]
      %v569 = vld [vmem:[%s1 + $0xe8] sm:$0xf]
      %v570 = vld [vmem:[%s1 + $0xec] sm:$0xf]
      %v571 = vld [vmem:[%s1 + $0xf0] sm:$0xf]
      %v572 = vld [vmem:[%s1 + $0xf4] sm:$0xf]
      %v573 = vld [vmem:[%s1 + $0xf8] sm:$0xf]
      %v574 = vld [vmem:[%s1 + $0xfc] sm:$0xf]
      %v575 = vld [vmem:[%s1 + $0x100] sm:$0xf]
      %v576 = vld [vmem:[%s1 + $0x104] sm:$0xf]
      %v577 = vld [vmem:[%s1 + $0x108] sm:$0xf]
      %v578 = vld [vmem:[%s1 + $0x10c] sm:$0xf]
      %v579 = vld [vmem:[%s1 + $0x110] sm:$0xf]
      %v580 = vld [vmem:[%s1 + $0x114] sm:$0xf]
      %v581 = vld [vmem:[%s1 + $0x118] sm:$0xf]
      %v582 = vld [vmem:[%s1 + $0x11c] sm:$0xf]
      %v583 = vld [vmem:[%s1 + $0x120] sm:$0xf]
      %v584 = vld [vmem:[%s1 + $0x124] sm:$0xf]
      %v585 = vld [vmem:[%s1 + $0x128] sm:$0xf]
      %v586 = vld [vmem:[%s1 + $0x12c] sm:$0xf]
      %v587 = vld [vmem:[%s1 + $0x130] sm:$0xf]
      %v588 = vld [vmem:[%s1 + $0x134] sm:$0xf]
      %v589 = vld [vmem:[%s1 + $0x138] sm:$0xf]
      %v590 = vld [vmem:[%s1 + $0x13c] sm:$0xf]
      %v591 = vld [vmem:[%s1 + $0x140] sm:$0xf]
      %v592 = vld [vmem:[%s1 + $0x144] sm:$0xf]
      %v593 = vld [vmem:[%s1 + $0x148] sm:$0xf]
      %v594 = vld [vmem:[%s1 + $0x14c] sm:$0xf]
      %v595 = vld [vmem:[%s1 + $0x150] sm:$0xf]
      %v596 = vld [vmem:[%s1 + $0x154] sm:$0xf]
      %v597 = vld [vmem:[%s1 + $0x158] sm:$0xf]
      %v598 = vld [vmem:[%s1 + $0x15c] sm:$0xf]
      %v599 = vld [vmem:[%s1 + $0x160] sm:$0xf]
      %v600 = vld [vmem:[%s1 + $0x164] sm:$0xf]
      %v601 = vld [vmem:[%s1 + $0x168] sm:$0xf]
      %v602 = vld [vmem:[%s1 + $0x16c] sm:$0xf]
      %v603 = vld [vmem:[%s1 + $0x170] sm:$0xf]
      %v604 = vld [vmem:[%s1 + $0x174] sm:$0xf]
      %v605 = vld [vmem:[%s1 + $0x178] sm:$0xf]
      %v606 = vld [vmem:[%s1 + $0x17c] sm:$0xf]
      %v607 = vld [vmem:[%s1 + $0x180] sm:$0xf]
      %v608 = vld [vmem:[%s1 + $0x184] sm:$0xf]
      %v609 = vld [vmem:[%s1 + $0x188] sm:$0xf]
      %v610 = vld [vmem:[%s1 + $0x18c] sm:$0xf]
      %v611 = vld [vmem:[%s1 + $0x190] sm:$0xf]
      %v612 = vld [vmem:[%s1 + $0x194] sm:$0xf]
      %v613 = vld [vmem:[%s1 + $0x198] sm:$0xf]
      %v614 = vld [vmem:[%s1 + $0x19c] sm:$0xf]
      %v615 = vld [vmem:[%s1 + $0x1a0] sm:$0xf]
      %v616 = vld [vmem:[%s1 + $0x1a4] sm:$0xf]
      %v617 = vld [vmem:[%s1 + $0x1a8] sm:$0xf]
      %v618 = vld [vmem:[%s1 + $0x1ac] sm:$0xf]
      %v619 = vld [vmem:[%s1 + $0x1b0] sm:$0xf]
      %v620 = vld [vmem:[%s1 + $0x1b4] sm:$0xf]
      %v621 = vld [vmem:[%s1 + $0x1b8] sm:$0xf]
      %v622 = vld [vmem:[%s1 + $0x1bc] sm:$0xf]
      %v623 = vld [vmem:[%s1 + $0x1c0] sm:$0xf]
      %v624 = vld [vmem:[%s1 + $0x1c4] sm:$0xf]
      %v625 = vld [vmem:[%s1 + $0x1c8] sm:$0xf]
      %v626 = vld [vmem:[%s1 + $0x1cc] sm:$0xf]
      %v627 = vld [vmem:[%s1 + $0x1d0] sm:$0xf]
      %v628 = vld [vmem:[%s1 + $0x1d4] sm:$0xf]
      %v629 = vld [vmem:[%s1 + $0x1d8] sm:$0xf]
      %v630 = vld [vmem:[%s1 + $0x1dc] sm:$0xf]
      %v631 = vld [vmem:[%s1 + $0x1e0] sm:$0xf]
      %v632 = vld [vmem:[%s1 + $0x1e4] sm:$0xf]
      %v633 = vld [vmem:[%s1 + $0x1e8] sm:$0xf]
      %v634 = vld [vmem:[%s1 + $0x1ec] sm:$0xf]
      %v635 = vld [vmem:[%s1 + $0x1f0] sm:$0xf]
      %v636 = vld [vmem:[%s1 + $0x1f4] sm:$0xf]
      %v637 = vld [vmem:[%s1 + $0x1f8] sm:$0xf]
      %v638 = vld [vmem:[%s1 + $0x1fc] sm:$0xf]
      %v639 = vld [vmem:[%s1 + $0x200] sm:$0xf]
      %v640 = vld [vmem:[%s1 + $0x204] sm:$0xf]
      %v641 = vld [vmem:[%s1 + $0x208] sm:$0xf]
      %v642 = vld [vmem:[%s1 + $0x20c] sm:$0xf]
      %v643 = vld [vmem:[%s1 + $0x210] sm:$0xf]
      %v644 = vld [vmem:[%s1 + $0x214] sm:$0xf]
      %v645 = vld [vmem:[%s1 + $0x218] sm:$0xf]
      %v646 = vld [vmem:[%s1 + $0x21c] sm:$0xf]
      %v647 = vld [vmem:[%s1 + $0x220] sm:$0xf]
      %v648 = vld [vmem:[%s1 + $0x224] sm:$0xf]
      %v649 = vld [vmem:[%s1 + $0x228] sm:$0xf]
      %v650 = vld [vmem:[%s1 + $0x22c] sm:$0xf]
      %v651 = vld [vmem:[%s1 + $0x230] sm:$0xf]
      %v652 = vld [vmem:[%s1 + $0x234] sm:$0xf]
      %v653 = vld [vmem:[%s1 + $0x238] sm:$0xf]
      %v654 = vld [vmem:[%s1 + $0x23c] sm:$0xf]
      %v655 = vld [vmem:[%s2] sm:$0x1]
      %v657 = vperm.slane %v655, 0
      %v803 = vunpack.c.l.b16 %v511
      %v804 = vunpack.c.l.b16 %v512
      %v805 = vunpack.c.l.b16 %v513
      %v806 = vunpack.c.l.b16 %v514
      %v807 = vunpack.c.l.b16 %v515
      %v808 = vunpack.c.l.b16 %v516
      %v809 = vunpack.c.l.b16 %v517
      %v810 = vunpack.c.l.b16 %v518
      %v811 = vunpack.c.l.b16 %v519
      %v812 = vunpack.c.l.b16 %v520
      %v813 = vunpack.c.l.b16 %v521
      %v814 = vunpack.c.l.b16 %v522
      %v815 = vunpack.c.l.b16 %v523
      %v816 = vunpack.c.l.b16 %v524
      %v817 = vunpack.c.l.b16 %v525
      %v818 = vunpack.c.l.b16 %v526
      %v819 = vunpack.c.l.b16 %v527
      %v820 = vunpack.c.l.b16 %v528
      %v821 = vunpack.c.l.b16 %v529
      %v822 = vunpack.c.l.b16 %v530
      %v823 = vunpack.c.l.b16 %v531
      %v824 = vunpack.c.l.b16 %v532
      %v825 = vunpack.c.l.b16 %v533
      %v826 = vunpack.c.l.b16 %v534
      %v827 = vunpack.c.l.b16 %v535
      %v828 = vunpack.c.l.b16 %v536
      %v829 = vunpack.c.l.b16 %v537
      %v830 = vunpack.c.l.b16 %v538
      %v831 = vunpack.c.l.b16 %v539
      %v832 = vunpack.c.l.b16 %v540
      %v833 = vunpack.c.l.b16 %v541
      %v834 = vunpack.c.l.b16 %v542
      %v835 = vunpack.c.l.b16 %v543
      %v836 = vunpack.c.l.b16 %v544
      %v837 = vunpack.c.l.b16 %v545
      %v838 = vunpack.c.l.b16 %v546
      %v839 = vunpack.c.l.b16 %v547
      %v840 = vunpack.c.l.b16 %v548
      %v841 = vunpack.c.l.b16 %v549
      %v842 = vunpack.c.l.b16 %v550
      %v843 = vunpack.c.l.b16 %v551
      %v844 = vunpack.c.l.b16 %v552
      %v845 = vunpack.c.l.b16 %v553
      %v846 = vunpack.c.l.b16 %v554
      %v847 = vunpack.c.l.b16 %v555
      %v848 = vunpack.c.l.b16 %v556
      %v849 = vunpack.c.l.b16 %v557
      %v850 = vunpack.c.l.b16 %v558
      %v851 = vunpack.c.l.b16 %v559
      %v852 = vunpack.c.l.b16 %v560
      %v853 = vunpack.c.l.b16 %v561
      %v854 = vunpack.c.l.b16 %v562
      %v855 = vunpack.c.l.b16 %v563
      %v856 = vunpack.c.l.b16 %v564
      %v857 = vunpack.c.l.b16 %v565
      %v858 = vunpack.c.l.b16 %v566
      %v859 = vunpack.c.l.b16 %v567
      %v860 = vunpack.c.l.b16 %v568
      %v861 = vunpack.c.l.b16 %v569
      %v862 = vunpack.c.l.b16 %v570
      %v863 = vunpack.c.l.b16 %v571
      %v864 = vunpack.c.l.b16 %v572
      %v865 = vunpack.c.l.b16 %v573
      %v866 = vunpack.c.l.b16 %v574
      %v867 = vunpack.c.l.b16 %v575
      %v868 = vunpack.c.l.b16 %v576
      %v869 = vunpack.c.l.b16 %v577
      %v870 = vunpack.c.l.b16 %v578
      %v871 = vunpack.c.l.b16 %v579
      %v872 = vunpack.c.l.b16 %v580
      %v873 = vunpack.c.l.b16 %v581
      %v874 = vunpack.c.l.b16 %v582
      %v875 = vunpack.c.l.b16 %v583
      %v876 = vunpack.c.l.b16 %v584
      %v877 = vunpack.c.l.b16 %v585
      %v878 = vunpack.c.l.b16 %v586
      %v879 = vunpack.c.l.b16 %v587
      %v880 = vunpack.c.l.b16 %v588
      %v881 = vunpack.c.l.b16 %v589
      %v882 = vunpack.c.l.b16 %v590
      %v883 = vunpack.c.l.b16 %v591
      %v884 = vunpack.c.l.b16 %v592
      %v885 = vunpack.c.l.b16 %v593
      %v886 = vunpack.c.l.b16 %v594
      %v887 = vunpack.c.l.b16 %v595
      %v888 = vunpack.c.l.b16 %v596
      %v889 = vunpack.c.l.b16 %v597
      %v890 = vunpack.c.l.b16 %v598
      %v891 = vunpack.c.l.b16 %v599
      %v892 = vunpack.c.l.b16 %v600
      %v893 = vunpack.c.l.b16 %v601
      %v894 = vunpack.c.l.b16 %v602
      %v895 = vunpack.c.l.b16 %v603
      %v896 = vunpack.c.l.b16 %v604
      %v897 = vunpack.c.l.b16 %v605
      %v898 = vunpack.c.l.b16 %v606
      %v899 = vunpack.c.l.b16 %v607
      %v900 = vunpack.c.l.b16 %v608
      %v901 = vunpack.c.l.b16 %v609
      %v902 = vunpack.c.l.b16 %v610
      %v903 = vunpack.c.l.b16 %v611
      %v904 = vunpack.c.l.b16 %v612
      %v905 = vunpack.c.l.b16 %v613
      %v906 = vunpack.c.l.b16 %v614
      %v907 = vunpack.c.l.b16 %v615
      %v908 = vunpack.c.l.b16 %v616
      %v909 = vunpack.c.l.b16 %v617
      %v910 = vunpack.c.l.b16 %v618
      %v911 = vunpack.c.l.b16 %v619
      %v912 = vunpack.c.l.b16 %v620
      %v913 = vunpack.c.l.b16 %v621
      %v914 = vunpack.c.l.b16 %v622
      %v915 = vunpack.c.l.b16 %v623
      %v916 = vunpack.c.l.b16 %v624
      %v917 = vunpack.c.l.b16 %v625
      %v918 = vunpack.c.l.b16 %v626
      %v919 = vunpack.c.l.b16 %v627
      %v920 = vunpack.c.l.b16 %v628
      %v921 = vunpack.c.l.b16 %v629
      %v922 = vunpack.c.l.b16 %v630
      %v923 = vunpack.c.l.b16 %v631
      %v924 = vunpack.c.l.b16 %v632
      %v925 = vunpack.c.l.b16 %v633
      %v926 = vunpack.c.l.b16 %v634
      %v927 = vunpack.c.l.b16 %v635
      %v928 = vunpack.c.l.b16 %v636
      %v929 = vunpack.c.l.b16 %v637
      %v930 = vunpack.c.l.b16 %v638
      %v931 = vunpack.c.l.b16 %v639
      %v932 = vunpack.c.l.b16 %v640
      %v933 = vunpack.c.l.b16 %v641
      %v934 = vunpack.c.l.b16 %v642
      %v935 = vunpack.c.l.b16 %v643
      %v936 = vunpack.c.l.b16 %v644
      %v937 = vunpack.c.l.b16 %v645
      %v938 = vunpack.c.l.b16 %v646
      %v939 = vunpack.c.l.b16 %v647
      %v940 = vunpack.c.l.b16 %v648
      %v941 = vunpack.c.l.b16 %v649
      %v942 = vunpack.c.l.b16 %v650
      %v943 = vunpack.c.l.b16 %v651
      %v944 = vunpack.c.l.b16 %v652
      %v945 = vunpack.c.l.b16 %v653
      %v946 = vunpack.c.l.b16 %v654
      %v947 = vpack.c.b16 %v804, %v803
      %v948 = vpack.c.b16 %v806, %v805
      %v949 = vpack.c.b16 %v808, %v807
      %v950 = vpack.c.b16 %v810, %v809
      %v951 = vpack.c.b16 %v812, %v811
      %v952 = vpack.c.b16 %v814, %v813
      %v953 = vpack.c.b16 %v816, %v815
      %v954 = vpack.c.b16 %v818, %v817
      %v955 = vpack.c.b16 %v820, %v819
      %v956 = vpack.c.b16 %v822, %v821
      %v957 = vpack.c.b16 %v824, %v823
      %v958 = vpack.c.b16 %v826, %v825
      %v959 = vpack.c.b16 %v828, %v827
      %v960 = vpack.c.b16 %v830, %v829
      %v961 = vpack.c.b16 %v832, %v831
      %v962 = vpack.c.b16 %v834, %v833
      %v963 = vpack.c.b16 %v836, %v835
      %v964 = vpack.c.b16 %v838, %v837
      %v965 = vpack.c.b16 %v840, %v839
      %v966 = vpack.c.b16 %v842, %v841
      %v967 = vpack.c.b16 %v844, %v843
      %v968 = vpack.c.b16 %v846, %v845
      %v969 = vpack.c.b16 %v848, %v847
      %v970 = vpack.c.b16 %v850, %v849
      %v971 = vpack.c.b16 %v852, %v851
      %v972 = vpack.c.b16 %v854, %v853
      %v973 = vpack.c.b16 %v856, %v855
      %v974 = vpack.c.b16 %v858, %v857
      %v975 = vpack.c.b16 %v860, %v859
      %v976 = vpack.c.b16 %v862, %v861
      %v977 = vpack.c.b16 %v864, %v863
      %v978 = vpack.c.b16 %v866, %v865
      %v979 = vpack.c.b16 %v868, %v867
      %v980 = vpack.c.b16 %v870, %v869
      %v981 = vpack.c.b16 %v872, %v871
      %v982 = vpack.c.b16 %v874, %v873
      %v983 = vpack.c.b16 %v876, %v875
      %v984 = vpack.c.b16 %v878, %v877
      %v985 = vpack.c.b16 %v880, %v879
      %v986 = vpack.c.b16 %v882, %v881
      %v987 = vpack.c.b16 %v884, %v883
      %v988 = vpack.c.b16 %v886, %v885
      %v989 = vpack.c.b16 %v888, %v887
      %v990 = vpack.c.b16 %v890, %v889
      %v991 = vpack.c.b16 %v892, %v891
      %v992 = vpack.c.b16 %v894, %v893
      %v993 = vpack.c.b16 %v896, %v895
      %v994 = vpack.c.b16 %v898, %v897
      %v995 = vpack.c.b16 %v900, %v899
      %v996 = vpack.c.b16 %v902, %v901
      %v997 = vpack.c.b16 %v904, %v903
      %v998 = vpack.c.b16 %v906, %v905
      %v999 = vpack.c.b16 %v908, %v907
      %v1000 = vpack.c.b16 %v910, %v909
      %v1001 = vpack.c.b16 %v912, %v911
      %v1002 = vpack.c.b16 %v914, %v913
      %v1003 = vpack.c.b16 %v916, %v915
      %v1004 = vpack.c.b16 %v918, %v917
      %v1005 = vpack.c.b16 %v920, %v919
      %v1006 = vpack.c.b16 %v922, %v921
      %v1007 = vpack.c.b16 %v924, %v923
      %v1008 = vpack.c.b16 %v926, %v925
      %v1009 = vpack.c.b16 %v928, %v927
      %v1010 = vpack.c.b16 %v930, %v929
      %v1011 = vpack.c.b16 %v932, %v931
      %v1012 = vpack.c.b16 %v934, %v933
      %v1013 = vpack.c.b16 %v936, %v935
      %v1014 = vpack.c.b16 %v938, %v937
      %v1015 = vpack.c.b16 %v940, %v939
      %v1016 = vpack.c.b16 %v942, %v941
      %v1017 = vpack.c.b16 %v944, %v943
      %v1018 = vpack.c.b16 %v946, %v945
      %1091 = vmatpush.bf16.msra.mxu0 %v954
      %1092 = vmatpush.bf16.msra.mxu0 %v953
      %1093 = vmatpush.bf16.msra.mxu0 %v952
      %1094 = vmatpush.bf16.msra.mxu0 %v951
      %1095 = vmatpush.bf16.msra.mxu0 %v950
      %1096 = vmatpush.bf16.msra.mxu0 %v949
      %1097 = vmatpush.bf16.msra.mxu0 %v948
      %1098 = vmatpush.bf16.msra.mxu0 %v947
      %1099 = vmatmul.bf16.gmra.mxu0 %v467
      %v1100 = vpop.f32.mrf.mxu0
      %v1101 = vadd.f32 %v657, %v1100
      %v1102 = vpop.f32.mrf.mxu0
      %v1103 = vadd.f32 %v657, %v1102
      %1104 = vmatmul.bf16.gmra.mxu0 %v468
      %v1105 = vpop.f32.mrf.mxu0
      %v1106 = vadd.f32 %v657, %v1105
      %v1107 = vpop.f32.mrf.mxu0
      %v1108 = vadd.f32 %v657, %v1107
      %1109 = vdwg.mxu0
      %1110 = vmatpush.bf16.msra.mxu0 %v962
      %1111 = vmatpush.bf16.msra.mxu0 %v961
      %1112 = vmatpush.bf16.msra.mxu0 %v960
      %1113 = vmatpush.bf16.msra.mxu0 %v959
      %1114 = vmatpush.bf16.msra.mxu0 %v958
      %1115 = vmatpush.bf16.msra.mxu0 %v957
      %1116 = vmatpush.bf16.msra.mxu0 %v956
      %1117 = vmatpush.bf16.msra.mxu0 %v955
      %1118 = vmatmul.bf16.gmra.mxu0 %v475
      %v1119 = vpop.f32.mrf.mxu0
      %v1120 = vadd.f32 %v1101, %v1119
      %v1121 = vpop.f32.mrf.mxu0
      %v1122 = vadd.f32 %v1103, %v1121
      %1123 = vmatmul.bf16.gmra.mxu0 %v476
      %v1124 = vpop.f32.mrf.mxu0
      %v1125 = vadd.f32 %v1106, %v1124
      %v1126 = vpop.f32.mrf.mxu0
      %v1127 = vadd.f32 %v1108, %v1126
      %1128 = vdwg.mxu0
      %1129 = vmatpush.bf16.msra.mxu0 %v970
      %1130 = vmatpush.bf16.msra.mxu0 %v969
      %1131 = vmatpush.bf16.msra.mxu0 %v968
      %1132 = vmatpush.bf16.msra.mxu0 %v967
      %1133 = vmatpush.bf16.msra.mxu0 %v966
      %1134 = vmatpush.bf16.msra.mxu0 %v965
      %1135 = vmatpush.bf16.msra.mxu0 %v964
      %1136 = vmatpush.bf16.msra.mxu0 %v963
      %1137 = vmatmul.bf16.gmra.mxu0 %v483
      %v1138 = vpop.f32.mrf.mxu0
      %v1139 = vadd.f32 %v1120, %v1138
      %v1140 = vpop.f32.mrf.mxu0
      %v1141 = vadd.f32 %v1122, %v1140
      %1142 = vmatmul.bf16.gmra.mxu0 %v484
      %v1143 = vpop.f32.mrf.mxu0
      %v1144 = vadd.f32 %v1125, %v1143
      %v1145 = vpop.f32.mrf.mxu0
      %v1146 = vadd.f32 %v1127, %v1145
      %1147 = vdwg.mxu0
      %1148 = vmatpush.bf16.msra.mxu0 %v978
      %1149 = vmatpush.bf16.msra.mxu0 %v977
      %1150 = vmatpush.bf16.msra.mxu0 %v976
      %1151 = vmatpush.bf16.msra.mxu0 %v975
      %1152 = vmatpush.bf16.msra.mxu0 %v974
      %1153 = vmatpush.bf16.msra.mxu0 %v973
      %1154 = vmatpush.bf16.msra.mxu0 %v972
      %1155 = vmatpush.bf16.msra.mxu0 %v971
      %1156 = vmatmul.bf16.gmra.mxu0 %v488
      %v1157 = vpop.f32.mrf.mxu0
      %v1158 = vadd.f32 %v1139, %v1157
      %v1159 = vpop.f32.mrf.mxu0
      %v1160 = vadd.f32 %v1141, %v1159
      %1161 = vmatmul.bf16.gmra.mxu0 %v489
      %v1162 = vpop.f32.mrf.mxu0
      %v1163 = vadd.f32 %v1144, %v1162
      %v1164 = vpop.f32.mrf.mxu0
      %v1165 = vadd.f32 %v1146, %v1164
      %1166 = vdwg.mxu0
      %1167 = vmatpush.bf16.msra.mxu0 %v986
      %1168 = vmatpush.bf16.msra.mxu0 %v985
      %1169 = vmatpush.bf16.msra.mxu0 %v984
      %1170 = vmatpush.bf16.msra.mxu0 %v983
      %1171 = vmatpush.bf16.msra.mxu0 %v982
      %1172 = vmatpush.bf16.msra.mxu0 %v981
      %1173 = vmatpush.bf16.msra.mxu0 %v980
      %1174 = vmatpush.bf16.msra.mxu0 %v979
      %1175 = vmatmul.bf16.gmra.mxu0 %v493
      %v1176 = vpop.f32.mrf.mxu0
      %v1177 = vadd.f32 %v1158, %v1176
      %v1178 = vpop.f32.mrf.mxu0
      %v1179 = vadd.f32 %v1160, %v1178
      %1180 = vmatmul.bf16.gmra.mxu0 %v494
      %v1181 = vpop.f32.mrf.mxu0
      %v1182 = vadd.f32 %v1163, %v1181
      %v1183 = vpop.f32.mrf.mxu0
      %v1184 = vadd.f32 %v1165, %v1183
      %1185 = vdwg.mxu0
      %1186 = vmatpush.bf16.msra.mxu0 %v994
      %1187 = vmatpush.bf16.msra.mxu0 %v993
      %1188 = vmatpush.bf16.msra.mxu0 %v992
      %1189 = vmatpush.bf16.msra.mxu0 %v991
      %1190 = vmatpush.bf16.msra.mxu0 %v990
      %1191 = vmatpush.bf16.msra.mxu0 %v989
      %1192 = vmatpush.bf16.msra.mxu0 %v988
      %1193 = vmatpush.bf16.msra.mxu0 %v987
      %1194 = vmatmul.bf16.gmra.mxu0 %v498
      %v1195 = vpop.f32.mrf.mxu0
      %v1196 = vadd.f32 %v1177, %v1195
      %v1197 = vpop.f32.mrf.mxu0
      %v1198 = vadd.f32 %v1179, %v1197
      %1199 = vmatmul.bf16.gmra.mxu0 %v499
      %v1200 = vpop.f32.mrf.mxu0
      %v1201 = vadd.f32 %v1182, %v1200
      %v1202 = vpop.f32.mrf.mxu0
      %v1203 = vadd.f32 %v1184, %v1202
      %1204 = vdwg.mxu0
      %1205 = vmatpush.bf16.msra.mxu0 %v1002
      %1206 = vmatpush.bf16.msra.mxu0 %v1001
      %1207 = vmatpush.bf16.msra.mxu0 %v1000
      %1208 = vmatpush.bf16.msra.mxu0 %v999
      %1209 = vmatpush.bf16.msra.mxu0 %v998
      %1210 = vmatpush.bf16.msra.mxu0 %v997
      %1211 = vmatpush.bf16.msra.mxu0 %v996
      %1212 = vmatpush.bf16.msra.mxu0 %v995
      %1213 = vmatmul.bf16.gmra.mxu0 %v468
      %v1214 = vpop.f32.mrf.mxu0
      %v1215 = vadd.f32 %v1196, %v1214
      %v1216 = vpop.f32.mrf.mxu0
      %v1217 = vadd.f32 %v1198, %v1216
      %1218 = vmatmul.bf16.gmra.mxu0 %v503
      %v1219 = vpop.f32.mrf.mxu0
      %v1220 = vadd.f32 %v1201, %v1219
      %v1221 = vpop.f32.mrf.mxu0
      %v1222 = vadd.f32 %v1203, %v1221
      %1223 = vdwg.mxu0
      %1224 = vmatpush.bf16.msra.mxu0 %v1010
      %1225 = vmatpush.bf16.msra.mxu0 %v1009
      %1226 = vmatpush.bf16.msra.mxu0 %v1008
      %1227 = vmatpush.bf16.msra.mxu0 %v1007
      %1228 = vmatpush.bf16.msra.mxu0 %v1006
      %1229 = vmatpush.bf16.msra.mxu0 %v1005
      %1230 = vmatpush.bf16.msra.mxu0 %v1004
      %1231 = vmatpush.bf16.msra.mxu0 %v1003
      %1232 = vmatmul.bf16.gmra.mxu0 %v476
      %v1233 = vpop.f32.mrf.mxu0
      %v1234 = vadd.f32 %v1215, %v1233
      %v1235 = vpop.f32.mrf.mxu0
      %v1236 = vadd.f32 %v1217, %v1235
      %1237 = vmatmul.bf16.gmra.mxu0 %v506
      %v1238 = vpop.f32.mrf.mxu0
      %v1239 = vadd.f32 %v1220, %v1238
      %v1240 = vpop.f32.mrf.mxu0
      %v1241 = vadd.f32 %v1222, %v1240
      %1242 = vdwg.mxu0
      %1243 = vmatpush.bf16.msra.mxu0 %v1018
      %1244 = vmatpush.bf16.msra.mxu0 %v1017
      %1245 = vmatpush.bf16.msra.mxu0 %v1016
      %1246 = vmatpush.bf16.msra.mxu0 %v1015
      %1247 = vmatpush.bf16.msra.mxu0 %v1014
      %1248 = vmatpush.bf16.msra.mxu0 %v1013
      %1249 = vmatpush.bf16.msra.mxu0 %v1012
      %1250 = vmatpush.bf16.msra.mxu0 %v1011
      %1251 = vmatmul.bf16.gmra.mxu0 %v484
      %v1252 = vpop.f32.mrf.mxu0
      %v1253 = vadd.f32 %v1234, %v1252
      %v1254 = vpop.f32.mrf.mxu0
      %v1255 = vadd.f32 %v1236, %v1254
      %1256 = vmatmul.bf16.gmra.mxu0 %v509
      %v1257 = vpop.f32.mrf.mxu0
      %v1258 = vadd.f32 %v1239, %v1257
      %v1259 = vpop.f32.mrf.mxu0
      %v1260 = vadd.f32 %v1241, %v1259
      %1261 = vdwg.mxu0
      %v1262 = vmax.f32 %v1253, 0.0
      %v1263 = vmax.f32 %v1255, 0.0
      %v1264 = vmax.f32 %v1258, 0.0
      %v1265 = vmax.f32 %v1260, 0.0
      %v1266 = vpack.c.bf16 %v1263, %v1262
      %v1267 = vpack.c.bf16 %v1265, %v1264
      %v1268 = vld [vmem:[%s3] sm:$0xf]
      %v1269 = vld [vmem:[%s3 + $0x4] sm:$0xf]
      %v1270 = vld [vmem:[%s3 + $0x8] sm:$0xf]
      %v1271 = vld [vmem:[%s3 + $0xc] sm:$0xf]
      %v1272 = vld [vmem:[%s3 + $0x10] sm:$0xf]
      %v1273 = vld [vmem:[%s3 + $0x14] sm:$0xf]
      %v1274 = vld [vmem:[%s3 + $0x18] sm:$0xf]
      %v1275 = vld [vmem:[%s3 + $0x1c] sm:$0xf]
      %v1276 = vld [vmem:[%s3 + $0x20] sm:$0xf]
      %v1277 = vld [vmem:[%s3 + $0x24] sm:$0xf]
      %v1278 = vld [vmem:[%s3 + $0x28] sm:$0xf]
      %v1279 = vld [vmem:[%s3 + $0x2c] sm:$0xf]
      %v1280 = vld [vmem:[%s3 + $0x30] sm:$0xf]
      %v1281 = vld [vmem:[%s3 + $0x34] sm:$0xf]
      %v1282 = vld [vmem:[%s3 + $0x38] sm:$0xf]
      %v1283 = vld [vmem:[%s3 + $0x3c] sm:$0xf]
      %v1284 = vld [vmem:[%s4] sm:$0x1]
      %v1286 = vperm.slane %v1284, 0
      %v1304 = vunpack.c.l.b16 %v1268
      %v1305 = vunpack.c.l.b16 %v1269
      %v1306 = vunpack.c.l.b16 %v1270
      %v1307 = vunpack.c.l.b16 %v1271
      %v1308 = vunpack.c.l.b16 %v1272
      %v1309 = vunpack.c.l.b16 %v1273
      %v1310 = vunpack.c.l.b16 %v1274
      %v1311 = vunpack.c.l.b16 %v1275
      %v1312 = vunpack.c.l.b16 %v1276
      %v1313 = vunpack.c.l.b16 %v1277
      %v1314 = vunpack.c.l.b16 %v1278
      %v1315 = vunpack.c.l.b16 %v1279
      %v1316 = vunpack.c.l.b16 %v1280
      %v1317 = vunpack.c.l.b16 %v1281
      %v1318 = vunpack.c.l.b16 %v1282
      %v1319 = vunpack.c.l.b16 %v1283
      %v1320 = vpack.c.b16 %v1305, %v1304
      %v1321 = vpack.c.b16 %v1307, %v1306
      %v1322 = vpack.c.b16 %v1309, %v1308
      %v1323 = vpack.c.b16 %v1311, %v1310
      %v1324 = vpack.c.b16 %v1313, %v1312
      %v1325 = vpack.c.b16 %v1315, %v1314
      %v1326 = vpack.c.b16 %v1317, %v1316
      %v1327 = vpack.c.b16 %v1319, %v1318
      %1336 = vmatpush.bf16.msra.mxu0 %v1327
      %1337 = vmatpush.bf16.msra.mxu0 %v1326
      %1338 = vmatpush.bf16.msra.mxu0 %v1325
      %1339 = vmatpush.bf16.msra.mxu0 %v1324
      %1340 = vmatpush.bf16.msra.mxu0 %v1323
      %1341 = vmatpush.bf16.msra.mxu0 %v1322
      %1342 = vmatpush.bf16.msra.mxu0 %v1321
      %1343 = vmatpush.bf16.msra.mxu0 %v1320
      %1344 = vmatmul.bf16.gmra.mxu0 %v1266
      %v1345 = vpop.f32.mrf.mxu0
      %v1346 = vadd.f32 %v1286, %v1345
      %v1347 = vpop.f32.mrf.mxu0
      %v1348 = vadd.f32 %v1286, %v1347
      %1349 = vmatmul.bf16.gmra.mxu0 %v1267
      %v1350 = vpop.f32.mrf.mxu0
      %v1351 = vadd.f32 %v1286, %v1350
      %v1352 = vpop.f32.mrf.mxu0
      %v1353 = vadd.f32 %v1286, %v1352
      %1354 = vdwg.mxu0
      %v1355 = vadd.f32 %v1346, %v300
      %v1356 = vadd.f32 %v1348, %v301
      %v1357 = vadd.f32 %v1351, %v302
      %v1358 = vadd.f32 %v1353, %v303
      %v1359 = vpack.c.bf16 %v1355, %v1355
      %v1360 = vpack.c.bf16 %v1356, %v1356
      %v1361 = vpack.c.bf16 %v1357, %v1357
      %v1362 = vpack.c.bf16 %v1358, %v1358
      %1363 = vst [vmem:[%s224] sm:$0xf] %v1359
      %1364 = vst [vmem:[%s224 + $0x4] sm:$0xf] %v1360
      %1365 = vst [vmem:[%s224 + $0x8] sm:$0xf] %v1361
      %1366 = vst [vmem:[%s224 + $0xc] sm:$0xf] %v1362
      %p1367 = scmp.lt.s32.totalorder %s16, 3
      %s1368 = scalar_select %p1367, %s16, 3
      %s1369 = smul.addr %s1368, 4
      %s1370 = smul.addr %s1369, 4
      %s1371 = scalar_lea.vmem %s5, %s1370
      // Predicated region
      $region41: #{encoder_forward.6} parent=39 // pred_check
        %p1372 = pneg %p144
      $region42: #{encoder_forward.6} parent=39 // pred_check_branch
        %1374 = sbr.rel (%p1372) target = $region44
      $region43: #{encoder_forward.6} parent=39 // pred_region
        _
      $region44: #{encoder_forward.6} parent=39 // pred_fallthru
        _
    $region40: #{encoder_forward.6} parent=5 // pred_fallthru
      _
    %p1375 = scmp.le.s32.totalorder 2, %s11
    // Predicated region
    $region45: #{encoder_forward.6} parent=5 // pred_check
      %p1376 = pneg %p1375
    $region46: #{encoder_forward.6} parent=5 // pred_check_branch
      %1378 = sbr.rel (%p1376) target = $region48
    $region47: #{encoder_forward.6} parent=5 // pred_region
      %s1379 = ssub.s32 %s11, 2
      // Predicated region
      $region49: #{encoder_forward.6} parent=47 // pred_check
        %p1380 = pneg %p150
      $region50: #{encoder_forward.6} parent=47 // pred_check_branch
        %1382 = sbr.rel (%p1380) target = $region52
      $region51: #{encoder_forward.6} parent=47 // pred_region
        %p1383 = scmp.lt.s32.totalorder %s17, 3
        %s1384 = scalar_select %p1383, %s17, 3
        %s1385 = smul.addr %s1384, 4
        %s1386 = smul.addr %s1385, 4
        %s1387 = scalar_lea.vmem %s5, %s1386
      $region52: #{encoder_forward.6} parent=47 // pred_fallthru
        _
    $region48: #{encoder_forward.6} parent=5 // pred_fallthru
      _
  $region6: #{encoder_forward.6} parent=0 // loop_footer
    %s15 = sadd.s32 1, %s11
  $region7: #{encoder_forward.6} parent=0 // loop_footer_branch
    %10 = sbr.rel target = $region3
  $region8: #{encoder_forward.6} parent=0 // loop_exit
    _

// kernel: encoder_forward.7
$region0: #{encoder_forward.7}
  #allocation0 [shape = 'u32[]', space=smem, size = 0x4, offset = 0x4, fixed_abs, tag = 'smem constant byte address 0x4 - core index']
  #allocation1 [shape = 'u32[72,128]{1,0:T(1,128)}', space=vmem, size = 0x9000, scoped, tag = 'internal scratch']
  %s0 = inlined_call_operand.vmem [shape: bf16[4,6,10,128], index: 0, kind: input, shape index: {}]
  %s1 = inlined_call_operand.vmem [shape: bf16[1152,128], index: 1, kind: input, shape index: {}]
  %s2 = inlined_call_operand.vmem [shape: f32[1,128], index: 2, kind: input, shape index: {}]
  %s3 = inlined_call_operand.vmem [shape: bf16[128,128], index: 3, kind: input, shape index: {}]
  %s4 = inlined_call_operand.vmem [shape: f32[1,128], index: 4, kind: input, shape index: {}]
  %s5 = inlined_call_operand.vmem [shape: bf16[4,4,8,128], index: 5, kind: output, shape index: {}]
  %s6 = sld [smem:[#allocation0]]
  $region53: #{encoder_forward.7} parent=0
    _
  %s8 = ssub.s32 1, %s6
  %s9 = scalar_select 0, %s8, %s6
  loop: start=0, step=1, limit=6
  $region2: #{encoder_forward.7} parent=0 // loop_pre_header
    _
  $region3: #{encoder_forward.7} parent=0 // loop_header
    %s11 = sphi 0, %s15
    %p12 = scmp.ge.s32.totalorder %s11, 6
    %s21 = sphi 0, %s23
    %s24 = sphi 0, %s21
    %s25 = sphi 0, %s24
    %s41 = sphi 0, %s25
    %s45 = sphi 0, %s45
    %s47 = sphi 0, %s45
    %s48 = sphi 0, %s47
    %s62 = sphi 0, %s48
    %s66 = sphi 0, %s66
    %s68 = sphi 0, %s66
    %s69 = sphi 0, %s68
    %s83 = sphi 0, %s69
    %s87 = sphi 0, %s87
    %s89 = sphi 0, %s87
    %s90 = sphi 0, %s89
    %s104 = sphi 0, %s90
    %s108 = sphi 0, %s108
    %s110 = sphi 0, %s108
    %s111 = sphi 0, %s110
    %s125 = sphi 0, %s111
    %s131 = sphi 0, %s133
    %s134 = sphi 0, %s131
    %s135 = sphi 0, %s134
    %s151 = sphi 0, %s135
  $region4: #{encoder_forward.7} parent=0 // loop_header_branch
    %14 = sbr.rel (%p12) target = $region8
  $region5: #{encoder_forward.7} parent=0 // loop_body
    %s16 = ssub.s32 %s11, 1
    %s17 = ssub.s32 %s11, 2
    %s18 = sadd.s32 %s11, 1
    %s19 = ssub.s32 %s11, %s18
    %p20 = scmp.eq.s32.totalorder %s19, 0
    %s22 = sadd.s32 %s21, 1
    %s23 = scalar_select %p20, %s21, %s22
    %p26 = pneg %p20
    %p27 = scmp.eq.s32.totalorder %s11, 3
    %p28 = por %p26, %p27
    %p29 = scmp.ne.s32.totalorder %s21, %s24
    %p30 = scmp.eq.s32.totalorder %s11, 0
    %p31 = por %p29, %p30
    %p32 = scmp.ne.s32.totalorder %s21, %s24
    %p33 = scmp.eq.s32.totalorder %s16, 3
    %p34 = por %p32, %p33
    %p35 = scmp.ne.s32.totalorder %s24, %s25
    %p36 = scmp.eq.s32.totalorder %s16, 0
    %p37 = por %p35, %p36
    %p38 = scmp.ne.s32.totalorder %s24, %s25
    %p39 = scmp.eq.s32.totalorder %s17, 3
    %p40 = por %p38, %p39
    %p42 = scmp.ne.s32.totalorder %s25, %s41
    %p43 = scmp.eq.s32.totalorder %s17, 0
    %p44 = por %p42, %p43
    %s46 = sadd.s32 %s45, 1
    %p49 = scmp.eq.s32.totalorder %s11, 3
    %p50 = scmp.ne.s32.totalorder %s45, %s47
    %p51 = scmp.eq.s32.totalorder %s11, 0
    %p52 = por %p50, %p51
    %p53 = scmp.ne.s32.totalorder %s45, %s47
    %p54 = scmp.eq.s32.totalorder %s16, 3
    %p55 = por %p53, %p54
    %p56 = scmp.ne.s32.totalorder %s47, %s48
    %p57 = scmp.eq.s32.totalorder %s16, 0
    %p58 = por %p56, %p57
    %p59 = scmp.ne.s32.totalorder %s47, %s48
    %p60 = scmp.eq.s32.totalorder %s17, 3
    %p61 = por %p59, %p60
    %p63 = scmp.ne.s32.totalorder %s48, %s62
    %p64 = scmp.eq.s32.totalorder %s17, 0
    %p65 = por %p63, %p64
    %s67 = sadd.s32 %s66, 1
    %p70 = scmp.eq.s32.totalorder %s11, 3
    %p71 = scmp.ne.s32.totalorder %s66, %s68
    %p72 = scmp.eq.s32.totalorder %s11, 0
    %p73 = por %p71, %p72
    %p74 = scmp.ne.s32.totalorder %s66, %s68
    %p75 = scmp.eq.s32.totalorder %s16, 3
    %p76 = por %p74, %p75
    %p77 = scmp.ne.s32.totalorder %s68, %s69
    %p78 = scmp.eq.s32.totalorder %s16, 0
    %p79 = por %p77, %p78
    %p80 = scmp.ne.s32.totalorder %s68, %s69
    %p81 = scmp.eq.s32.totalorder %s17, 3
    %p82 = por %p80, %p81
    %p84 = scmp.ne.s32.totalorder %s69, %s83
    %p85 = scmp.eq.s32.totalorder %s17, 0
    %p86 = por %p84, %p85
    %s88 = sadd.s32 %s87, 1
    %p91 = scmp.eq.s32.totalorder %s11, 3
    %p92 = scmp.ne.s32.totalorder %s87, %s89
    %p93 = scmp.eq.s32.totalorder %s11, 0
    %p94 = por %p92, %p93
    %p95 = scmp.ne.s32.totalorder %s87, %s89
    %p96 = scmp.eq.s32.totalorder %s16, 3
    %p97 = por %p95, %p96
    %p98 = scmp.ne.s32.totalorder %s89, %s90
    %p99 = scmp.eq.s32.totalorder %s16, 0
    %p100 = por %p98, %p99
    %p101 = scmp.ne.s32.totalorder %s89, %s90
    %p102 = scmp.eq.s32.totalorder %s17, 3
    %p103 = por %p101, %p102
    %p105 = scmp.ne.s32.totalorder %s90, %s104
    %p106 = scmp.eq.s32.totalorder %s17, 0
    %p107 = por %p105, %p106
    %s109 = sadd.s32 %s108, 1
    %p112 = scmp.eq.s32.totalorder %s11, 3
    %p113 = scmp.ne.s32.totalorder %s108, %s110
    %p114 = scmp.eq.s32.totalorder %s11, 0
    %p115 = por %p113, %p114
    %p116 = scmp.ne.s32.totalorder %s108, %s110
    %p117 = scmp.eq.s32.totalorder %s16, 3
    %p118 = por %p116, %p117
    %p119 = scmp.ne.s32.totalorder %s110, %s111
    %p120 = scmp.eq.s32.totalorder %s16, 0
    %p121 = por %p119, %p120
    %p122 = scmp.ne.s32.totalorder %s110, %s111
    %p123 = scmp.eq.s32.totalorder %s17, 3
    %p124 = por %p122, %p123
    %p126 = scmp.ne.s32.totalorder %s111, %s125
    %p127 = scmp.eq.s32.totalorder %s17, 0
    %p128 = por %p126, %p127
    %s129 = ssub.s32 %s11, %s18
    %p130 = scmp.eq.s32.totalorder %s129, 0
    %s132 = sadd.s32 %s131, 1
    %s133 = scalar_select %p130, %s131, %s132
    %p136 = pneg %p130
    %p137 = scmp.eq.s32.totalorder %s11, 3
    %p138 = por %p136, %p137
    %p139 = scmp.ne.s32.totalorder %s131, %s134
    %p140 = scmp.eq.s32.totalorder %s11, 0
    %p141 = por %p139, %p140
    %p142 = scmp.ne.s32.totalorder %s131, %s134
    %p143 = scmp.eq.s32.totalorder %s16, 3
    %p144 = por %p142, %p143
    %p145 = scmp.ne.s32.totalorder %s134, %s135
    %p146 = scmp.eq.s32.totalorder %s16, 0
    %p147 = por %p145, %p146
    %p148 = scmp.ne.s32.totalorder %s134, %s135
    %p149 = scmp.eq.s32.totalorder %s17, 3
    %p150 = por %p148, %p149
    %p152 = scmp.ne.s32.totalorder %s135, %s151
    %p153 = scmp.eq.s32.totalorder %s17, 0
    %p154 = por %p152, %p153
    %p155 = scmp.le.s32.totalorder 1, %s11
    %p156 = scmp.lt.s32.totalorder %s11, 5
    %p157 = pnand %p155, %p156
    %p158 = pneg %p157
    // Predicated region
    $region9: #{encoder_forward.7} parent=5 // pred_check
      _
    $region10: #{encoder_forward.7} parent=5 // pred_check_branch
      %160 = sbr.rel (%p157) target = $region12
    $region11: #{encoder_forward.7} parent=5 // pred_region
      %s161 = ssub.s32 %s11, 1
      // Predicated region
      $region13: #{encoder_forward.7} parent=11 // pred_check
        %p162 = pneg %p58
      $region14: #{encoder_forward.7} parent=11 // pred_check_branch
        %164 = sbr.rel (%p162) target = $region16
      $region15: #{encoder_forward.7} parent=11 // pred_region
        _
      $region16: #{encoder_forward.7} parent=11 // pred_fallthru
        _
      // Predicated region
      $region17: #{encoder_forward.7} parent=11 // pred_check
        %p165 = pneg %p79
      $region18: #{encoder_forward.7} parent=11 // pred_check_branch
        %167 = sbr.rel (%p165) target = $region20
      $region19: #{encoder_forward.7} parent=11 // pred_region
        _
      $region20: #{encoder_forward.7} parent=11 // pred_fallthru
        _
      // Predicated region
      $region21: #{encoder_forward.7} parent=11 // pred_check
        %p168 = pneg %p100
      $region22: #{encoder_forward.7} parent=11 // pred_check_branch
        %170 = sbr.rel (%p168) target = $region24
      $region23: #{encoder_forward.7} parent=11 // pred_region
        _
      $region24: #{encoder_forward.7} parent=11 // pred_fallthru
        _
      // Predicated region
      $region25: #{encoder_forward.7} parent=11 // pred_check
        %p171 = pneg %p121
      $region26: #{encoder_forward.7} parent=11 // pred_check_branch
        %173 = sbr.rel (%p171) target = $region28
      $region27: #{encoder_forward.7} parent=11 // pred_region
        _
      $region28: #{encoder_forward.7} parent=11 // pred_fallthru
        _
    $region12: #{encoder_forward.7} parent=5 // pred_fallthru
      _
    %p174 = scmp.lt.s32.totalorder %s11, 4
    // Predicated region
    $region29: #{encoder_forward.7} parent=5 // pred_check
      %p175 = pneg %p174
    $region30: #{encoder_forward.7} parent=5 // pred_check_branch
      %177 = sbr.rel (%p175) target = $region32
    $region31: #{encoder_forward.7} parent=5 // pred_region
      // Predicated region
      $region33: #{encoder_forward.7} parent=31 // pred_check
        %p178 = pneg %p31
      $region34: #{encoder_forward.7} parent=31 // pred_check_branch
        %180 = sbr.rel (%p178) target = $region36
      $region35: #{encoder_forward.7} parent=31 // pred_region
        %p181 = scmp.lt.s32.totalorder %s11, 3
        %s182 = scalar_select %p181, %s11, 3
        %s183 = smul.addr %s182, 12
        %s184 = smul.addr %s183, 4
        %s185 = scalar_lea.vmem %s0, %s184
      $region36: #{encoder_forward.7} parent=31 // pred_fallthru
        _
    $region32: #{encoder_forward.7} parent=5 // pred_fallthru
      _
    %p186 = scmp.le.s32.totalorder 1, %s11
    %p187 = scmp.lt.s32.totalorder %s11, 5
    %p188 = pnand %p186, %p187
    %p189 = pneg %p188
    // Predicated region
    $region37: #{encoder_forward.7} parent=5 // pred_check
      _
    $region38: #{encoder_forward.7} parent=5 // pred_check_branch
      %191 = sbr.rel (%p188) target = $region40
    $region39: #{encoder_forward.7} parent=5 // pred_region
      %s192 = ssub.s32 %s11, 1
      %p193 = scmp.lt.s32.totalorder %s16, 3
      %s194 = scalar_select %p193, %s16, 3
      %s195 = smul.addr %s194, 12
      %s196 = smul.addr %s195, 4
      %s197 = scalar_lea.vmem %s0, %s196
      %p198 = pneg %p37
      %p199 = pneg %p34
      %p200 = pneg %p58
      %p201 = pneg %p55
      %p202 = pneg %p79
      %p203 = pneg %p76
      %p204 = pneg %p100
      %p205 = pneg %p97
      %p206 = pneg %p121
      %p207 = pneg %p118
      %p208 = pneg %p147
      %p209 = pneg %p144
      %p210 = scmp.lt.s32.totalorder %s16, 3
      %s211 = scalar_select %p210, %s16, 3
      %s212 = smul.addr %s211, 4
      %s213 = smul.addr %s212, 4
      %s214 = scalar_lea.vmem %s5, %s213
      %p215 = scmp.lt.s32.totalorder %s16, 3
      %s216 = scalar_select %p215, %s16, 3
      %s217 = smul.addr %s216, 12
      %s218 = smul.addr %s217, 4
      %s219 = scalar_lea.vmem %s0, %s218
      %p220 = scmp.lt.s32.totalorder %s16, 3
      %s221 = scalar_select %p220, %s16, 3
      %s222 = smul.addr %s221, 4
      %s223 = smul.addr %s222, 4
      %s224 = scalar_lea.vmem %s5, %s223
      %v225 = vld [vmem:[%s219] sm:$0xf]
      %v226 = vld [vmem:[%s219 + $0x4] sm:$0x1]
      %v227 = vld [vmem:[%s219 + $0x8] sm:$0xf]
      %v228 = vld [vmem:[%s219 + $0xc] sm:$0x1]
      %v229 = vld [vmem:[%s219 + $0x10] sm:$0xf]
      %v230 = vld [vmem:[%s219 + $0x14] sm:$0x1]
      %v231 = vld [vmem:[%s219 + $0x18] sm:$0xf]
      %v232 = vld [vmem:[%s219 + $0x1c] sm:$0x1]
      %v233 = vld [vmem:[%s219 + $0x20] sm:$0xf]
      %v234 = vld [vmem:[%s219 + $0x24] sm:$0x1]
      %v235 = vld [vmem:[%s219 + $0x28] sm:$0xf]
      %v236 = vld [vmem:[%s219 + $0x2c] sm:$0x1]
      %vm237 = vsmask.f32 3328
      %vm238 = vsmask.f32 7440
      %vm239 = vmor %vm237, %vm238
      %v241 = vshrl.u32 %v227, 16
      %v243 = vrot.slane %v241, 4
      %v244 = vshll.u32 %v227, 16
      %v246 = vrot.slane %v244, 5
      %v247 = vor.u32 %v243, %v246
      %v248 = vrot.slane %v247, 4
      %v250 = vshll.u32 %v228, 16
      %v252 = vrot.slane %v250, 5
      %v253 = vsel %vm239, %v248, %v252
      %v255 = vshrl.u32 %v229, 16
      %v257 = vrot.slane %v255, 4
      %v258 = vshll.u32 %v229, 16
      %v260 = vrot.slane %v258, 5
      %v261 = vor.u32 %v257, %v260
      %v262 = vrot.slane %v261, 4
      %v264 = vshll.u32 %v230, 16
      %v266 = vrot.slane %v264, 5
      %v267 = vsel %vm239, %v262, %v266
      %v269 = vshrl.u32 %v231, 16
      %v271 = vrot.slane %v269, 4
      %v272 = vshll.u32 %v231, 16
      %v274 = vrot.slane %v272, 5
      %v275 = vor.u32 %v271, %v274
      %v276 = vrot.slane %v275, 4
      %v278 = vshll.u32 %v232, 16
      %v280 = vrot.slane %v278, 5
      %v281 = vsel %vm239, %v276, %v280
      %v283 = vshrl.u32 %v233, 16
      %v285 = vrot.slane %v283, 4
      %v286 = vshll.u32 %v233, 16
      %v288 = vrot.slane %v286, 5
      %v289 = vor.u32 %v285, %v288
      %v290 = vrot.slane %v289, 4
      %v292 = vshll.u32 %v234, 16
      %v294 = vrot.slane %v292, 5
      %v295 = vsel %vm239, %v290, %v294
      %v300 = vunpack.c.l.bf16 %v253
      %v301 = vunpack.c.l.bf16 %v267
      %v302 = vunpack.c.l.bf16 %v281
      %v303 = vunpack.c.l.bf16 %v295
      %v304 = vunpack.c.l.bf16 %v225
      %v305 = vunpack.c.l.bf16 %v226
      %v306 = vunpack.c.l.bf16 %v227
      %v307 = vunpack.c.l.bf16 %v228
      %v308 = vunpack.c.l.bf16 %v229
      %v309 = vunpack.c.l.bf16 %v230
      %v310 = vunpack.c.l.bf16 %v231
      %v311 = vunpack.c.l.bf16 %v232
      %v312 = vunpack.c.l.bf16 %v233
      %v313 = vunpack.c.l.bf16 %v234
      %v314 = vunpack.c.l.bf16 %v235
      %v315 = vunpack.c.l.bf16 %v236
      %v316 = vmax.f32 %v304, 0.0
      %v317 = vmax.f32 %v305, 0.0
      %v318 = vmax.f32 %v306, 0.0
      %v319 = vmax.f32 %v307, 0.0
      %v320 = vmax.f32 %v308, 0.0
      %v321 = vmax.f32 %v309, 0.0
      %v322 = vmax.f32 %v310, 0.0
      %v323 = vmax.f32 %v311, 0.0
      %v324 = vmax.f32 %v312, 0.0
      %v325 = vmax.f32 %v313, 0.0
      %v326 = vmax.f32 %v314, 0.0
      %v327 = vmax.f32 %v315, 0.0
      %v328 = vpack.c.bf16 %v316, %v316
      %v329 = vpack.c.bf16 %v317, %v317
      %v330 = vpack.c.bf16 %v318, %v318
      %v331 = vpack.c.bf16 %v319, %v319
      %v332 = vpack.c.bf16 %v320, %v320
      %v333 = vpack.c.bf16 %v321, %v321
      %v334 = vpack.c.bf16 %v322, %v322
      %v335 = vpack.c.bf16 %v323, %v323
      %v336 = vpack.c.bf16 %v324, %v324
      %v337 = vpack.c.bf16 %v325, %v325
      %v338 = vpack.c.bf16 %v326, %v326
      %v339 = vpack.c.bf16 %v327, %v327
      %v341 = vshrl.u32 %v328, 16
      %v343 = vrot.slane %v341, 4
      %v344 = vshll.u32 %v328, 16
      %v346 = vrot.slane %v344, 5
      %v347 = vor.u32 %v343, %v346
      %v348 = vrot.slane %v347, 4
      %v350 = vshll.u32 %v329, 16
      %v352 = vrot.slane %v350, 5
      %v353 = vsel %vm239, %v348, %v352
      %v355 = vshrl.u32 %v330, 16
      %v357 = vrot.slane %v355, 4
      %v358 = vshll.u32 %v330, 16
      %v360 = vrot.slane %v358, 5
      %v361 = vor.u32 %v357, %v360
      %v362 = vrot.slane %v361, 4
      %v364 = vshll.u32 %v331, 16
      %v366 = vrot.slane %v364, 5
      %v367 = vsel %vm239, %v362, %v366
      %v369 = vshrl.u32 %v332, 16
      %v371 = vrot.slane %v369, 4
      %v372 = vshll.u32 %v332, 16
      %v374 = vrot.slane %v372, 5
      %v375 = vor.u32 %v371, %v374
      %v376 = vrot.slane %v375, 4
      %v378 = vshll.u32 %v333, 16
      %v380 = vrot.slane %v378, 5
      %v381 = vsel %vm239, %v376, %v380
      %v383 = vshrl.u32 %v334, 16
      %v385 = vrot.slane %v383, 4
      %v386 = vshll.u32 %v334, 16
      %v388 = vrot.slane %v386, 5
      %v389 = vor.u32 %v385, %v388
      %v390 = vrot.slane %v389, 4
      %v392 = vshll.u32 %v335, 16
      %v394 = vrot.slane %v392, 5
      %v395 = vsel %vm239, %v390, %v394
      %v397 = vshrl.u32 %v336, 16
      %v399 = vrot.slane %v397, 4
      %v400 = vshll.u32 %v336, 16
      %v402 = vrot.slane %v400, 5
      %v403 = vor.u32 %v399, %v402
      %v404 = vrot.slane %v403, 4
      %v406 = vshll.u32 %v337, 16
      %v408 = vrot.slane %v406, 5
      %v409 = vsel %vm239, %v404, %v408
      %v411 = vshrl.u32 %v338, 16
      %v413 = vrot.slane %v411, 4
      %v414 = vshll.u32 %v338, 16
      %v416 = vrot.slane %v414, 5
      %v417 = vor.u32 %v413, %v416
      %v418 = vrot.slane %v417, 4
      %v420 = vshll.u32 %v339, 16
      %v422 = vrot.slane %v420, 5
      %v423 = vsel %vm239, %v418, %v422
      %vm436 = vcmask 1042432
      %vm437 = vcmask 1046532
      %vm438 = vmor %vm436, %vm437
      %v439 = vrot.slane %v328, 5
      %v440 = vrot.slane %v439, 4
      %v441 = vrot.slane %v329, 5
      %v442 = vsel %vm438, %v440, %v441
      %v443 = vrot.slane %v330, 5
      %v444 = vrot.slane %v443, 4
      %v445 = vrot.slane %v331, 5
      %v446 = vsel %vm438, %v444, %v445
      %v447 = vrot.slane %v332, 5
      %v448 = vrot.slane %v447, 4
      %v449 = vrot.slane %v333, 5
      %v450 = vsel %vm438, %v448, %v449
      %v451 = vrot.slane %v334, 5
      %v452 = vrot.slane %v451, 4
      %v453 = vrot.slane %v335, 5
      %v454 = vsel %vm438, %v452, %v453
      %v455 = vrot.slane %v336, 5
      %v456 = vrot.slane %v455, 4
      %v457 = vrot.slane %v337, 5
      %v458 = vsel %vm438, %v456, %v457
      %v459 = vrot.slane %v338, 5
      %v460 = vrot.slane %v459, 4
      %v461 = vrot.slane %v339, 5
      %v462 = vsel %vm438, %v460, %v461
      %v463 = vunpack.c.l.b16 %v328
      %v464 = vunpack.c.l.b16 %v330
      %v465 = vunpack.c.l.b16 %v332
      %v466 = vunpack.c.l.b16 %v334
      %v467 = vpack.c.b16 %v464, %v463
      %v468 = vpack.c.b16 %v466, %v465
      %v471 = vunpack.c.l.b16 %v353
      %v472 = vunpack.c.l.b16 %v367
      %v473 = vunpack.c.l.b16 %v381
      %v474 = vunpack.c.l.b16 %v395
      %v475 = vpack.c.b16 %v472, %v471
      %v476 = vpack.c.b16 %v474, %v473
      %v479 = vunpack.c.l.b16 %v442
      %v480 = vunpack.c.l.b16 %v446
      %v481 = vunpack.c.l.b16 %v450
      %v482 = vunpack.c.l.b16 %v454
      %v483 = vpack.c.b16 %v480, %v479
      %v484 = vpack.c.b16 %v482, %v481
      %v487 = vunpack.c.l.b16 %v336
      %v488 = vpack.c.b16 %v465, %v464
      %v489 = vpack.c.b16 %v487, %v466
      %v492 = vunpack.c.l.b16 %v409
      %v493 = vpack.c.b16 %v473, %v472
      %v494 = vpack.c.b16 %v492, %v474
      %v497 = vunpack.c.l.b16 %v458
      %v498 = vpack.c.b16 %v481, %v480
      %v499 = vpack.c.b16 %v497, %v482
      %v502 = vunpack.c.l.b16 %v338
      %v503 = vpack.c.b16 %v502, %v487
      %v505 = vunpack.c.l.b16 %v423
      %v506 = vpack.c.b16 %v505, %v492
      %v508 = vunpack.c.l.b16 %v462
      %v509 = vpack.c.b16 %v508, %v497
      %v511 = vld [vmem:[%s1] sm:$0xf]
      %v512 = vld [vmem:[%s1 + $0x4] sm:$0xf]
      %v513 = vld [vmem:[%s1 + $0x8] sm:$0xf]
      %v514 = vld [vmem:[%s1 + $0xc] sm:$0xf]
      %v515 = vld [vmem:[%s1 + $0x10] sm:$0xf]
      %v516 = vld [vmem:[%s1 + $0x14] sm:$0xf]
      %v517 = vld [vmem:[%s1 + $0x18] sm:$0xf]
      %v518 = vld [vmem:[%s1 + $0x1c] sm:$0xf]
      %v519 = vld [vmem:[%s1 + $0x20] sm:$0xf]
      %v520 = vld [vmem:[%s1 + $0x24] sm:$0xf]
      %v521 = vld [vmem:[%s1 + $0x28] sm:$0xf]
      %v522 = vld [vmem:[%s1 + $0x2c] sm:$0xf]
      %v523 = vld [vmem:[%s1 + $0x30] sm:$0xf]
      %v524 = vld [vmem:[%s1 + $0x34] sm:$0xf]
      %v525 = vld [vmem:[%s1 + $0x38] sm:$0xf]
      %v526 = vld [vmem:[%s1 + $0x3c] sm:$0xf]
      %v527 = vld [vmem:[%s1 + $0x40] sm:$0xf]
      %v528 = vld [vmem:[%s1 + $0x44] sm:$0xf]
      %v529 = vld [vmem:[%s1 + $0x48] sm:$0xf]
      %v530 = vld [vmem:[%s1 + $0x4c] sm:$0xf]
      %v531 = vld [vmem:[%s1 + $0x50] sm:$0xf]
      %v532 = vld [vmem:[%s1 + $0x54] sm:$0xf]
      %v533 = vld [vmem:[%s1 + $0x58] sm:$0xf]
      %v534 = vld [vmem:[%s1 + $0x5c] sm:$0xf]
      %v535 = vld [vmem:[%s1 + $0x60] sm:$0xf]
      %v536 = vld [vmem:[%s1 + $0x64] sm:$0xf]
      %v537 = vld [vmem:[%s1 + $0x68] sm:$0xf]
      %v538 = vld [vmem:[%s1 + $0x6c] sm:$0xf]
      %v539 = vld [vmem:[%s1 + $0x70] sm:$0xf]
      %v540 = vld [vmem:[%s1 + $0x74] sm:$0xf]
      %v541 = vld [vmem:[%s1 + $0x78] sm:$0xf]
      %v542 = vld [vmem:[%s1 + $0x7c] sm:$0xf]
      %v543 = vld [vmem:[%s1 + $0x80] sm:$0xf]
      %v544 = vld [vmem:[%s1 + $0x84] sm:$0xf]
      %v545 = vld [vmem:[%s1 + $0x88] sm:$0xf]
      %v546 = vld [vmem:[%s1 + $0x8c] sm:$0xf]
      %v547 = vld [vmem:[%s1 + $0x90] sm:$0xf]
      %v548 = vld [vmem:[%s1 + $0x94] sm:$0xf]
      %v549 = vld [vmem:[%s1 + $0x98] sm:$0xf]
      %v550 = vld [vmem:[%s1 + $0x9c] sm:$0xf]
      %v551 = vld [vmem:[%s1 + $0xa0] sm:$0xf]
      %v552 = vld [vmem:[%s1 + $0xa4] sm:$0xf]
      %v553 = vld [vmem:[%s1 + $0xa8] sm:$0xf]
      %v554 = vld [vmem:[%s1 + $0xac] sm:$0xf]
      %v555 = vld [vmem:[%s1 + $0xb0] sm:$0xf]
      %v556 = vld [vmem:[%s1 + $0xb4] sm:$0xf]
      %v557 = vld [vmem:[%s1 + $0xb8] sm:$0xf]
      %v558 = vld [vmem:[%s1 + $0xbc] sm:$0xf]
      %v559 = vld [vmem:[%s1 + $0xc0] sm:$0xf]
      %v560 = vld [vmem:[%s1 + $0xc4] sm:$0xf]
      %v561 = vld [vmem:[%s1 + $0xc8] sm:$0xf]
      %v562 = vld [vmem:[%s1 + $0xcc] sm:$0xf]
      %v563 = vld [vmem:[%s1 + $0xd0] sm:$0xf]
      %v564 = vld [vmem:[%s1 + $0xd4] sm:$0xf]
      %v565 = vld [vmem:[%s1 + $0xd8] sm:$0xf]
      %v566 = vld [vmem:[%s1 + $0xdc] sm:$0xf]
      %v567 = vld [vmem:[%s1 + $0xe0] sm:$0xf]
      %v568 = vld [vmem:[%s1 + $0xe4] sm:$0xf]
      %v569 = vld [vmem:[%s1 + $0xe8] sm:$0xf]
      %v570 = vld [vmem:[%s1 + $0xec] sm:$0xf]
      %v571 = vld [vmem:[%s1 + $0xf0] sm:$0xf]
      %v572 = vld [vmem:[%s1 + $0xf4] sm:$0xf]
      %v573 = vld [vmem:[%s1 + $0xf8] sm:$0xf]
      %v574 = vld [vmem:[%s1 + $0xfc] sm:$0xf]
      %v575 = vld [vmem:[%s1 + $0x100] sm:$0xf]
      %v576 = vld [vmem:[%s1 + $0x104] sm:$0xf]
      %v577 = vld [vmem:[%s1 + $0x108] sm:$0xf]
      %v578 = vld [vmem:[%s1 + $0x10c] sm:$0xf]
      %v579 = vld [vmem:[%s1 + $0x110] sm:$0xf]
      %v580 = vld [vmem:[%s1 + $0x114] sm:$0xf]
      %v581 = vld [vmem:[%s1 + $0x118] sm:$0xf]
      %v582 = vld [vmem:[%s1 + $0x11c] sm:$0xf]
      %v583 = vld [vmem:[%s1 + $0x120] sm:$0xf]
      %v584 = vld [vmem:[%s1 + $0x124] sm:$0xf]
      %v585 = vld [vmem:[%s1 + $0x128] sm:$0xf]
      %v586 = vld [vmem:[%s1 + $0x12c] sm:$0xf]
      %v587 = vld [vmem:[%s1 + $0x130] sm:$0xf]
      %v588 = vld [vmem:[%s1 + $0x134] sm:$0xf]
      %v589 = vld [vmem:[%s1 + $0x138] sm:$0xf]
      %v590 = vld [vmem:[%s1 + $0x13c] sm:$0xf]
      %v591 = vld [vmem:[%s1 + $0x140] sm:$0xf]
      %v592 = vld [vmem:[%s1 + $0x144] sm:$0xf]
      %v593 = vld [vmem:[%s1 + $0x148] sm:$0xf]
      %v594 = vld [vmem:[%s1 + $0x14c] sm:$0xf]
      %v595 = vld [vmem:[%s1 + $0x150] sm:$0xf]
      %v596 = vld [vmem:[%s1 + $0x154] sm:$0xf]
      %v597 = vld [vmem:[%s1 + $0x158] sm:$0xf]
      %v598 = vld [vmem:[%s1 + $0x15c] sm:$0xf]
      %v599 = vld [vmem:[%s1 + $0x160] sm:$0xf]
      %v600 = vld [vmem:[%s1 + $0x164] sm:$0xf]
      %v601 = vld [vmem:[%s1 + $0x168] sm:$0xf]
      %v602 = vld [vmem:[%s1 + $0x16c] sm:$0xf]
      %v603 = vld [vmem:[%s1 + $0x170] sm:$0xf]
      %v604 = vld [vmem:[%s1 + $0x174] sm:$0xf]
      %v605 = vld [vmem:[%s1 + $0x178] sm:$0xf]
      %v606 = vld [vmem:[%s1 + $0x17c] sm:$0xf]
      %v607 = vld [vmem:[%s1 + $0x180] sm:$0xf]
      %v608 = vld [vmem:[%s1 + $0x184] sm:$0xf]
      %v609 = vld [vmem:[%s1 + $0x188] sm:$0xf]
      %v610 = vld [vmem:[%s1 + $0x18c] sm:$0xf]
      %v611 = vld [vmem:[%s1 + $0x190] sm:$0xf]
      %v612 = vld [vmem:[%s1 + $0x194] sm:$0xf]
      %v613 = vld [vmem:[%s1 + $0x198] sm:$0xf]
      %v614 = vld [vmem:[%s1 + $0x19c] sm:$0xf]
      %v615 = vld [vmem:[%s1 + $0x1a0] sm:$0xf]
      %v616 = vld [vmem:[%s1 + $0x1a4] sm:$0xf]
      %v617 = vld [vmem:[%s1 + $0x1a8] sm:$0xf]
      %v618 = vld [vmem:[%s1 + $0x1ac] sm:$0xf]
      %v619 = vld [vmem:[%s1 + $0x1b0] sm:$0xf]
      %v620 = vld [vmem:[%s1 + $0x1b4] sm:$0xf]
      %v621 = vld [vmem:[%s1 + $0x1b8] sm:$0xf]
      %v622 = vld [vmem:[%s1 + $0x1bc] sm:$0xf]
      %v623 = vld [vmem:[%s1 + $0x1c0] sm:$0xf]
      %v624 = vld [vmem:[%s1 + $0x1c4] sm:$0xf]
      %v625 = vld [vmem:[%s1 + $0x1c8] sm:$0xf]
      %v626 = vld [vmem:[%s1 + $0x1cc] sm:$0xf]
      %v627 = vld [vmem:[%s1 + $0x1d0] sm:$0xf]
      %v628 = vld [vmem:[%s1 + $0x1d4] sm:$0xf]
      %v629 = vld [vmem:[%s1 + $0x1d8] sm:$0xf]
      %v630 = vld [vmem:[%s1 + $0x1dc] sm:$0xf]
      %v631 = vld [vmem:[%s1 + $0x1e0] sm:$0xf]
      %v632 = vld [vmem:[%s1 + $0x1e4] sm:$0xf]
      %v633 = vld [vmem:[%s1 + $0x1e8] sm:$0xf]
      %v634 = vld [vmem:[%s1 + $0x1ec] sm:$0xf]
      %v635 = vld [vmem:[%s1 + $0x1f0] sm:$0xf]
      %v636 = vld [vmem:[%s1 + $0x1f4] sm:$0xf]
      %v637 = vld [vmem:[%s1 + $0x1f8] sm:$0xf]
      %v638 = vld [vmem:[%s1 + $0x1fc] sm:$0xf]
      %v639 = vld [vmem:[%s1 + $0x200] sm:$0xf]
      %v640 = vld [vmem:[%s1 + $0x204] sm:$0xf]
      %v641 = vld [vmem:[%s1 + $0x208] sm:$0xf]
      %v642 = vld [vmem:[%s1 + $0x20c] sm:$0xf]
      %v643 = vld [vmem:[%s1 + $0x210] sm:$0xf]
      %v644 = vld [vmem:[%s1 + $0x214] sm:$0xf]
      %v645 = vld [vmem:[%s1 + $0x218] sm:$0xf]
      %v646 = vld [vmem:[%s1 + $0x21c] sm:$0xf]
      %v647 = vld [vmem:[%s1 + $0x220] sm:$0xf]
      %v648 = vld [vmem:[%s1 + $0x224] sm:$0xf]
      %v649 = vld [vmem:[%s1 + $0x228] sm:$0xf]
      %v650 = vld [vmem:[%s1 + $0x22c] sm:$0xf]
      %v651 = vld [vmem:[%s1 + $0x230] sm:$0xf]
      %v652 = vld [vmem:[%s1 + $0x234] sm:$0xf]
      %v653 = vld [vmem:[%s1 + $0x238] sm:$0xf]
      %v654 = vld [vmem:[%s1 + $0x23c] sm:$0xf]
      %v655 = vld [vmem:[%s2] sm:$0x1]
      %v657 = vperm.slane %v655, 0
      %v803 = vunpack.c.l.b16 %v511
      %v804 = vunpack.c.l.b16 %v512
      %v805 = vunpack.c.l.b16 %v513
      %v806 = vunpack.c.l.b16 %v514
      %v807 = vunpack.c.l.b16 %v515
      %v808 = vunpack.c.l.b16 %v516
      %v809 = vunpack.c.l.b16 %v517
      %v810 = vunpack.c.l.b16 %v518
      %v811 = vunpack.c.l.b16 %v519
      %v812 = vunpack.c.l.b16 %v520
      %v813 = vunpack.c.l.b16 %v521
      %v814 = vunpack.c.l.b16 %v522
      %v815 = vunpack.c.l.b16 %v523
      %v816 = vunpack.c.l.b16 %v524
      %v817 = vunpack.c.l.b16 %v525
      %v818 = vunpack.c.l.b16 %v526
      %v819 = vunpack.c.l.b16 %v527
      %v820 = vunpack.c.l.b16 %v528
      %v821 = vunpack.c.l.b16 %v529
      %v822 = vunpack.c.l.b16 %v530
      %v823 = vunpack.c.l.b16 %v531
      %v824 = vunpack.c.l.b16 %v532
      %v825 = vunpack.c.l.b16 %v533
      %v826 = vunpack.c.l.b16 %v534
      %v827 = vunpack.c.l.b16 %v535
      %v828 = vunpack.c.l.b16 %v536
      %v829 = vunpack.c.l.b16 %v537
      %v830 = vunpack.c.l.b16 %v538
      %v831 = vunpack.c.l.b16 %v539
      %v832 = vunpack.c.l.b16 %v540
      %v833 = vunpack.c.l.b16 %v541
      %v834 = vunpack.c.l.b16 %v542
      %v835 = vunpack.c.l.b16 %v543
      %v836 = vunpack.c.l.b16 %v544
      %v837 = vunpack.c.l.b16 %v545
      %v838 = vunpack.c.l.b16 %v546
      %v839 = vunpack.c.l.b16 %v547
      %v840 = vunpack.c.l.b16 %v548
      %v841 = vunpack.c.l.b16 %v549
      %v842 = vunpack.c.l.b16 %v550
      %v843 = vunpack.c.l.b16 %v551
      %v844 = vunpack.c.l.b16 %v552
      %v845 = vunpack.c.l.b16 %v553
      %v846 = vunpack.c.l.b16 %v554
      %v847 = vunpack.c.l.b16 %v555
      %v848 = vunpack.c.l.b16 %v556
      %v849 = vunpack.c.l.b16 %v557
      %v850 = vunpack.c.l.b16 %v558
      %v851 = vunpack.c.l.b16 %v559
      %v852 = vunpack.c.l.b16 %v560
      %v853 = vunpack.c.l.b16 %v561
      %v854 = vunpack.c.l.b16 %v562
      %v855 = vunpack.c.l.b16 %v563
      %v856 = vunpack.c.l.b16 %v564
      %v857 = vunpack.c.l.b16 %v565
      %v858 = vunpack.c.l.b16 %v566
      %v859 = vunpack.c.l.b16 %v567
      %v860 = vunpack.c.l.b16 %v568
      %v861 = vunpack.c.l.b16 %v569
      %v862 = vunpack.c.l.b16 %v570
      %v863 = vunpack.c.l.b16 %v571
      %v864 = vunpack.c.l.b16 %v572
      %v865 = vunpack.c.l.b16 %v573
      %v866 = vunpack.c.l.b16 %v574
      %v867 = vunpack.c.l.b16 %v575
      %v868 = vunpack.c.l.b16 %v576
      %v869 = vunpack.c.l.b16 %v577
      %v870 = vunpack.c.l.b16 %v578
      %v871 = vunpack.c.l.b16 %v579
      %v872 = vunpack.c.l.b16 %v580
      %v873 = vunpack.c.l.b16 %v581
      %v874 = vunpack.c.l.b16 %v582
      %v875 = vunpack.c.l.b16 %v583
      %v876 = vunpack.c.l.b16 %v584
      %v877 = vunpack.c.l.b16 %v585
      %v878 = vunpack.c.l.b16 %v586
      %v879 = vunpack.c.l.b16 %v587
      %v880 = vunpack.c.l.b16 %v588
      %v881 = vunpack.c.l.b16 %v589
      %v882 = vunpack.c.l.b16 %v590
      %v883 = vunpack.c.l.b16 %v591
      %v884 = vunpack.c.l.b16 %v592
      %v885 = vunpack.c.l.b16 %v593
      %v886 = vunpack.c.l.b16 %v594
      %v887 = vunpack.c.l.b16 %v595
      %v888 = vunpack.c.l.b16 %v596
      %v889 = vunpack.c.l.b16 %v597
      %v890 = vunpack.c.l.b16 %v598
      %v891 = vunpack.c.l.b16 %v599
      %v892 = vunpack.c.l.b16 %v600
      %v893 = vunpack.c.l.b16 %v601
      %v894 = vunpack.c.l.b16 %v602
      %v895 = vunpack.c.l.b16 %v603
      %v896 = vunpack.c.l.b16 %v604
      %v897 = vunpack.c.l.b16 %v605
      %v898 = vunpack.c.l.b16 %v606
      %v899 = vunpack.c.l.b16 %v607
      %v900 = vunpack.c.l.b16 %v608
      %v901 = vunpack.c.l.b16 %v609
      %v902 = vunpack.c.l.b16 %v610
      %v903 = vunpack.c.l.b16 %v611
      %v904 = vunpack.c.l.b16 %v612
      %v905 = vunpack.c.l.b16 %v613
      %v906 = vunpack.c.l.b16 %v614
      %v907 = vunpack.c.l.b16 %v615
      %v908 = vunpack.c.l.b16 %v616
      %v909 = vunpack.c.l.b16 %v617
      %v910 = vunpack.c.l.b16 %v618
      %v911 = vunpack.c.l.b16 %v619
      %v912 = vunpack.c.l.b16 %v620
      %v913 = vunpack.c.l.b16 %v621
      %v914 = vunpack.c.l.b16 %v622
      %v915 = vunpack.c.l.b16 %v623
      %v916 = vunpack.c.l.b16 %v624
      %v917 = vunpack.c.l.b16 %v625
      %v918 = vunpack.c.l.b16 %v626
      %v919 = vunpack.c.l.b16 %v627
      %v920 = vunpack.c.l.b16 %v628
      %v921 = vunpack.c.l.b16 %v629
      %v922 = vunpack.c.l.b16 %v630
      %v923 = vunpack.c.l.b16 %v631
      %v924 = vunpack.c.l.b16 %v632
      %v925 = vunpack.c.l.b16 %v633
      %v926 = vunpack.c.l.b16 %v634
      %v927 = vunpack.c.l.b16 %v635
      %v928 = vunpack.c.l.b16 %v636
      %v929 = vunpack.c.l.b16 %v637
      %v930 = vunpack.c.l.b16 %v638
      %v931 = vunpack.c.l.b16 %v639
      %v932 = vunpack.c.l.b16 %v640
      %v933 = vunpack.c.l.b16 %v641
      %v934 = vunpack.c.l.b16 %v642
      %v935 = vunpack.c.l.b16 %v643
      %v936 = vunpack.c.l.b16 %v644
      %v937 = vunpack.c.l.b16 %v645
      %v938 = vunpack.c.l.b16 %v646
      %v939 = vunpack.c.l.b16 %v647
      %v940 = vunpack.c.l.b16 %v648
      %v941 = vunpack.c.l.b16 %v649
      %v942 = vunpack.c.l.b16 %v650
      %v943 = vunpack.c.l.b16 %v651
      %v944 = vunpack.c.l.b16 %v652
      %v945 = vunpack.c.l.b16 %v653
      %v946 = vunpack.c.l.b16 %v654
      %v947 = vpack.c.b16 %v804, %v803
      %v948 = vpack.c.b16 %v806, %v805
      %v949 = vpack.c.b16 %v808, %v807
      %v950 = vpack.c.b16 %v810, %v809
      %v951 = vpack.c.b16 %v812, %v811
      %v952 = vpack.c.b16 %v814, %v813
      %v953 = vpack.c.b16 %v816, %v815
      %v954 = vpack.c.b16 %v818, %v817
      %v955 = vpack.c.b16 %v820, %v819
      %v956 = vpack.c.b16 %v822, %v821
      %v957 = vpack.c.b16 %v824, %v823
      %v958 = vpack.c.b16 %v826, %v825
      %v959 = vpack.c.b16 %v828, %v827
      %v960 = vpack.c.b16 %v830, %v829
      %v961 = vpack.c.b16 %v832, %v831
      %v962 = vpack.c.b16 %v834, %v833
      %v963 = vpack.c.b16 %v836, %v835
      %v964 = vpack.c.b16 %v838, %v837
      %v965 = vpack.c.b16 %v840, %v839
      %v966 = vpack.c.b16 %v842, %v841
      %v967 = vpack.c.b16 %v844, %v843
      %v968 = vpack.c.b16 %v846, %v845
      %v969 = vpack.c.b16 %v848, %v847
      %v970 = vpack.c.b16 %v850, %v849
      %v971 = vpack.c.b16 %v852, %v851
      %v972 = vpack.c.b16 %v854, %v853
      %v973 = vpack.c.b16 %v856, %v855
      %v974 = vpack.c.b16 %v858, %v857
      %v975 = vpack.c.b16 %v860, %v859
      %v976 = vpack.c.b16 %v862, %v861
      %v977 = vpack.c.b16 %v864, %v863
      %v978 = vpack.c.b16 %v866, %v865
      %v979 = vpack.c.b16 %v868, %v867
      %v980 = vpack.c.b16 %v870, %v869
      %v981 = vpack.c.b16 %v872, %v871
      %v982 = vpack.c.b16 %v874, %v873
      %v983 = vpack.c.b16 %v876, %v875
      %v984 = vpack.c.b16 %v878, %v877
      %v985 = vpack.c.b16 %v880, %v879
      %v986 = vpack.c.b16 %v882, %v881
      %v987 = vpack.c.b16 %v884, %v883
      %v988 = vpack.c.b16 %v886, %v885
      %v989 = vpack.c.b16 %v888, %v887
      %v990 = vpack.c.b16 %v890, %v889
      %v991 = vpack.c.b16 %v892, %v891
      %v992 = vpack.c.b16 %v894, %v893
      %v993 = vpack.c.b16 %v896, %v895
      %v994 = vpack.c.b16 %v898, %v897
      %v995 = vpack.c.b16 %v900, %v899
      %v996 = vpack.c.b16 %v902, %v901
      %v997 = vpack.c.b16 %v904, %v903
      %v998 = vpack.c.b16 %v906, %v905
      %v999 = vpack.c.b16 %v908, %v907
      %v1000 = vpack.c.b16 %v910, %v909
      %v1001 = vpack.c.b16 %v912, %v911
      %v1002 = vpack.c.b16 %v914, %v913
      %v1003 = vpack.c.b16 %v916, %v915
      %v1004 = vpack.c.b16 %v918, %v917
      %v1005 = vpack.c.b16 %v920, %v919
      %v1006 = vpack.c.b16 %v922, %v921
      %v1007 = vpack.c.b16 %v924, %v923
      %v1008 = vpack.c.b16 %v926, %v925
      %v1009 = vpack.c.b16 %v928, %v927
      %v1010 = vpack.c.b16 %v930, %v929
      %v1011 = vpack.c.b16 %v932, %v931
      %v1012 = vpack.c.b16 %v934, %v933
      %v1013 = vpack.c.b16 %v936, %v935
      %v1014 = vpack.c.b16 %v938, %v937
      %v1015 = vpack.c.b16 %v940, %v939
      %v1016 = vpack.c.b16 %v942, %v941
      %v1017 = vpack.c.b16 %v944, %v943
      %v1018 = vpack.c.b16 %v946, %v945
      %1091 = vmatpush.bf16.msra.mxu0 %v954
      %1092 = vmatpush.bf16.msra.mxu0 %v953
      %1093 = vmatpush.bf16.msra.mxu0 %v952
      %1094 = vmatpush.bf16.msra.mxu0 %v951
      %1095 = vmatpush.bf16.msra.mxu0 %v950
      %1096 = vmatpush.bf16.msra.mxu0 %v949
      %1097 = vmatpush.bf16.msra.mxu0 %v948
      %1098 = vmatpush.bf16.msra.mxu0 %v947
      %1099 = vmatmul.bf16.gmra.mxu0 %v467
      %v1100 = vpop.f32.mrf.mxu0
      %v1101 = vadd.f32 %v657, %v1100
      %v1102 = vpop.f32.mrf.mxu0
      %v1103 = vadd.f32 %v657, %v1102
      %1104 = vmatmul.bf16.gmra.mxu0 %v468
      %v1105 = vpop.f32.mrf.mxu0
      %v1106 = vadd.f32 %v657, %v1105
      %v1107 = vpop.f32.mrf.mxu0
      %v1108 = vadd.f32 %v657, %v1107
      %1109 = vdwg.mxu0
      %1110 = vmatpush.bf16.msra.mxu0 %v962
      %1111 = vmatpush.bf16.msra.mxu0 %v961
      %1112 = vmatpush.bf16.msra.mxu0 %v960
      %1113 = vmatpush.bf16.msra.mxu0 %v959
      %1114 = vmatpush.bf16.msra.mxu0 %v958
      %1115 = vmatpush.bf16.msra.mxu0 %v957
      %1116 = vmatpush.bf16.msra.mxu0 %v956
      %1117 = vmatpush.bf16.msra.mxu0 %v955
      %1118 = vmatmul.bf16.gmra.mxu0 %v475
      %v1119 = vpop.f32.mrf.mxu0
      %v1120 = vadd.f32 %v1101, %v1119
      %v1121 = vpop.f32.mrf.mxu0
      %v1122 = vadd.f32 %v1103, %v1121
      %1123 = vmatmul.bf16.gmra.mxu0 %v476
      %v1124 = vpop.f32.mrf.mxu0
      %v1125 = vadd.f32 %v1106, %v1124
      %v1126 = vpop.f32.mrf.mxu0
      %v1127 = vadd.f32 %v1108, %v1126
      %1128 = vdwg.mxu0
      %1129 = vmatpush.bf16.msra.mxu0 %v970
      %1130 = vmatpush.bf16.msra.mxu0 %v969
      %1131 = vmatpush.bf16.msra.mxu0 %v968
      %1132 = vmatpush.bf16.msra.mxu0 %v967
      %1133 = vmatpush.bf16.msra.mxu0 %v966
      %1134 = vmatpush.bf16.msra.mxu0 %v965
      %1135 = vmatpush.bf16.msra.mxu0 %v964
      %1136 = vmatpush.bf16.msra.mxu0 %v963
      %1137 = vmatmul.bf16.gmra.mxu0 %v483
      %v1138 = vpop.f32.mrf.mxu0
      %v1139 = vadd.f32 %v1120, %v1138
      %v1140 = vpop.f32.mrf.mxu0
      %v1141 = vadd.f32 %v1122, %v1140
      %1142 = vmatmul.bf16.gmra.mxu0 %v484
      %v1143 = vpop.f32.mrf.mxu0
      %v1144 = vadd.f32 %v1125, %v1143
      %v1145 = vpop.f32.mrf.mxu0
      %v1146 = vadd.f32 %v1127, %v1145
      %1147 = vdwg.mxu0
      %1148 = vmatpush.bf16.msra.mxu0 %v978
      %1149 = vmatpush.bf16.msra.mxu0 %v977
      %1150 = vmatpush.bf16.msra.mxu0 %v976
      %1151 = vmatpush.bf16.msra.mxu0 %v975
      %1152 = vmatpush.bf16.msra.mxu0 %v974
      %1153 = vmatpush.bf16.msra.mxu0 %v973
      %1154 = vmatpush.bf16.msra.mxu0 %v972
      %1155 = vmatpush.bf16.msra.mxu0 %v971
      %1156 = vmatmul.bf16.gmra.mxu0 %v488
      %v1157 = vpop.f32.mrf.mxu0
      %v1158 = vadd.f32 %v1139, %v1157
      %v1159 = vpop.f32.mrf.mxu0
      %v1160 = vadd.f32 %v1141, %v1159
      %1161 = vmatmul.bf16.gmra.mxu0 %v489
      %v1162 = vpop.f32.mrf.mxu0
      %v1163 = vadd.f32 %v1144, %v1162
      %v1164 = vpop.f32.mrf.mxu0
      %v1165 = vadd.f32 %v1146, %v1164
      %1166 = vdwg.mxu0
      %1167 = vmatpush.bf16.msra.mxu0 %v986
      %1168 = vmatpush.bf16.msra.mxu0 %v985
      %1169 = vmatpush.bf16.msra.mxu0 %v984
      %1170 = vmatpush.bf16.msra.mxu0 %v983
      %1171 = vmatpush.bf16.msra.mxu0 %v982
      %1172 = vmatpush.bf16.msra.mxu0 %v981
      %1173 = vmatpush.bf16.msra.mxu0 %v980
      %1174 = vmatpush.bf16.msra.mxu0 %v979
      %1175 = vmatmul.bf16.gmra.mxu0 %v493
      %v1176 = vpop.f32.mrf.mxu0
      %v1177 = vadd.f32 %v1158, %v1176
      %v1178 = vpop.f32.mrf.mxu0
      %v1179 = vadd.f32 %v1160, %v1178
      %1180 = vmatmul.bf16.gmra.mxu0 %v494
      %v1181 = vpop.f32.mrf.mxu0
      %v1182 = vadd.f32 %v1163, %v1181
      %v1183 = vpop.f32.mrf.mxu0
      %v1184 = vadd.f32 %v1165, %v1183
      %1185 = vdwg.mxu0
      %1186 = vmatpush.bf16.msra.mxu0 %v994
      %1187 = vmatpush.bf16.msra.mxu0 %v993
      %1188 = vmatpush.bf16.msra.mxu0 %v992
      %1189 = vmatpush.bf16.msra.mxu0 %v991
      %1190 = vmatpush.bf16.msra.mxu0 %v990
      %1191 = vmatpush.bf16.msra.mxu0 %v989
      %1192 = vmatpush.bf16.msra.mxu0 %v988
      %1193 = vmatpush.bf16.msra.mxu0 %v987
      %1194 = vmatmul.bf16.gmra.mxu0 %v498
      %v1195 = vpop.f32.mrf.mxu0
      %v1196 = vadd.f32 %v1177, %v1195
      %v1197 = vpop.f32.mrf.mxu0
      %v1198 = vadd.f32 %v1179, %v1197
      %1199 = vmatmul.bf16.gmra.mxu0 %v499
      %v1200 = vpop.f32.mrf.mxu0
      %v1201 = vadd.f32 %v1182, %v1200
      %v1202 = vpop.f32.mrf.mxu0
      %v1203 = vadd.f32 %v1184, %v1202
      %1204 = vdwg.mxu0
      %1205 = vmatpush.bf16.msra.mxu0 %v1002
      %1206 = vmatpush.bf16.msra.mxu0 %v1001
      %1207 = vmatpush.bf16.msra.mxu0 %v1000
      %1208 = vmatpush.bf16.msra.mxu0 %v999
      %1209 = vmatpush.bf16.msra.mxu0 %v998
      %1210 = vmatpush.bf16.msra.mxu0 %v997
      %1211 = vmatpush.bf16.msra.mxu0 %v996
      %1212 = vmatpush.bf16.msra.mxu0 %v995
      %1213 = vmatmul.bf16.gmra.mxu0 %v468
      %v1214 = vpop.f32.mrf.mxu0
      %v1215 = vadd.f32 %v1196, %v1214
      %v1216 = vpop.f32.mrf.mxu0
      %v1217 = vadd.f32 %v1198, %v1216
      %1218 = vmatmul.bf16.gmra.mxu0 %v503
      %v1219 = vpop.f32.mrf.mxu0
      %v1220 = vadd.f32 %v1201, %v1219
      %v1221 = vpop.f32.mrf.mxu0
      %v1222 = vadd.f32 %v1203, %v1221
      %1223 = vdwg.mxu0
      %1224 = vmatpush.bf16.msra.mxu0 %v1010
      %1225 = vmatpush.bf16.msra.mxu0 %v1009
      %1226 = vmatpush.bf16.msra.mxu0 %v1008
      %1227 = vmatpush.bf16.msra.mxu0 %v1007
      %1228 = vmatpush.bf16.msra.mxu0 %v1006
      %1229 = vmatpush.bf16.msra.mxu0 %v1005
      %1230 = vmatpush.bf16.msra.mxu0 %v1004
      %1231 = vmatpush.bf16.msra.mxu0 %v1003
      %1232 = vmatmul.bf16.gmra.mxu0 %v476
      %v1233 = vpop.f32.mrf.mxu0
      %v1234 = vadd.f32 %v1215, %v1233
      %v1235 = vpop.f32.mrf.mxu0
      %v1236 = vadd.f32 %v1217, %v1235
      %1237 = vmatmul.bf16.gmra.mxu0 %v506
      %v1238 = vpop.f32.mrf.mxu0
      %v1239 = vadd.f32 %v1220, %v1238
      %v1240 = vpop.f32.mrf.mxu0
      %v1241 = vadd.f32 %v1222, %v1240
      %1242 = vdwg.mxu0
      %1243 = vmatpush.bf16.msra.mxu0 %v1018
      %1244 = vmatpush.bf16.msra.mxu0 %v1017
      %1245 = vmatpush.bf16.msra.mxu0 %v1016
      %1246 = vmatpush.bf16.msra.mxu0 %v1015
      %1247 = vmatpush.bf16.msra.mxu0 %v1014
      %1248 = vmatpush.bf16.msra.mxu0 %v1013
      %1249 = vmatpush.bf16.msra.mxu0 %v1012
      %1250 = vmatpush.bf16.msra.mxu0 %v1011
      %1251 = vmatmul.bf16.gmra.mxu0 %v484
      %v1252 = vpop.f32.mrf.mxu0
      %v1253 = vadd.f32 %v1234, %v1252
      %v1254 = vpop.f32.mrf.mxu0
      %v1255 = vadd.f32 %v1236, %v1254
      %1256 = vmatmul.bf16.gmra.mxu0 %v509
      %v1257 = vpop.f32.mrf.mxu0
      %v1258 = vadd.f32 %v1239, %v1257
      %v1259 = vpop.f32.mrf.mxu0
      %v1260 = vadd.f32 %v1241, %v1259
      %1261 = vdwg.mxu0
      %v1262 = vmax.f32 %v1253, 0.0
      %v1263 = vmax.f32 %v1255, 0.0
      %v1264 = vmax.f32 %v1258, 0.0
      %v1265 = vmax.f32 %v1260, 0.0
      %v1266 = vpack.c.bf16 %v1263, %v1262
      %v1267 = vpack.c.bf16 %v1265, %v1264
      %v1268 = vld [vmem:[%s3] sm:$0xf]
      %v1269 = vld [vmem:[%s3 + $0x4] sm:$0xf]
      %v1270 = vld [vmem:[%s3 + $0x8] sm:$0xf]
      %v1271 = vld [vmem:[%s3 + $0xc] sm:$0xf]
      %v1272 = vld [vmem:[%s3 + $0x10] sm:$0xf]
      %v1273 = vld [vmem:[%s3 + $0x14] sm:$0xf]
      %v1274 = vld [vmem:[%s3 + $0x18] sm:$0xf]
      %v1275 = vld [vmem:[%s3 + $0x1c] sm:$0xf]
      %v1276 = vld [vmem:[%s3 + $0x20] sm:$0xf]
      %v1277 = vld [vmem:[%s3 + $0x24] sm:$0xf]
      %v1278 = vld [vmem:[%s3 + $0x28] sm:$0xf]
      %v1279 = vld [vmem:[%s3 + $0x2c] sm:$0xf]
      %v1280 = vld [vmem:[%s3 + $0x30] sm:$0xf]
      %v1281 = vld [vmem:[%s3 + $0x34] sm:$0xf]
      %v1282 = vld [vmem:[%s3 + $0x38] sm:$0xf]
      %v1283 = vld [vmem:[%s3 + $0x3c] sm:$0xf]
      %v1284 = vld [vmem:[%s4] sm:$0x1]
      %v1286 = vperm.slane %v1284, 0
      %v1304 = vunpack.c.l.b16 %v1268
      %v1305 = vunpack.c.l.b16 %v1269
      %v1306 = vunpack.c.l.b16 %v1270
      %v1307 = vunpack.c.l.b16 %v1271
      %v1308 = vunpack.c.l.b16 %v1272
      %v1309 = vunpack.c.l.b16 %v1273
      %v1310 = vunpack.c.l.b16 %v1274
      %v1311 = vunpack.c.l.b16 %v1275
      %v1312 = vunpack.c.l.b16 %v1276
      %v1313 = vunpack.c.l.b16 %v1277
      %v1314 = vunpack.c.l.b16 %v1278
      %v1315 = vunpack.c.l.b16 %v1279
      %v1316 = vunpack.c.l.b16 %v1280
      %v1317 = vunpack.c.l.b16 %v1281
      %v1318 = vunpack.c.l.b16 %v1282
      %v1319 = vunpack.c.l.b16 %v1283
      %v1320 = vpack.c.b16 %v1305, %v1304
      %v1321 = vpack.c.b16 %v1307, %v1306
      %v1322 = vpack.c.b16 %v1309, %v1308
      %v1323 = vpack.c.b16 %v1311, %v1310
      %v1324 = vpack.c.b16 %v1313, %v1312
      %v1325 = vpack.c.b16 %v1315, %v1314
      %v1326 = vpack.c.b16 %v1317, %v1316
      %v1327 = vpack.c.b16 %v1319, %v1318
      %1336 = vmatpush.bf16.msra.mxu0 %v1327
      %1337 = vmatpush.bf16.msra.mxu0 %v1326
      %1338 = vmatpush.bf16.msra.mxu0 %v1325
      %1339 = vmatpush.bf16.msra.mxu0 %v1324
      %1340 = vmatpush.bf16.msra.mxu0 %v1323
      %1341 = vmatpush.bf16.msra.mxu0 %v1322
      %1342 = vmatpush.bf16.msra.mxu0 %v1321
      %1343 = vmatpush.bf16.msra.mxu0 %v1320
      %1344 = vmatmul.bf16.gmra.mxu0 %v1266
      %v1345 = vpop.f32.mrf.mxu0
      %v1346 = vadd.f32 %v1286, %v1345
      %v1347 = vpop.f32.mrf.mxu0
      %v1348 = vadd.f32 %v1286, %v1347
      %1349 = vmatmul.bf16.gmra.mxu0 %v1267
      %v1350 = vpop.f32.mrf.mxu0
      %v1351 = vadd.f32 %v1286, %v1350
      %v1352 = vpop.f32.mrf.mxu0
      %v1353 = vadd.f32 %v1286, %v1352
      %1354 = vdwg.mxu0
      %v1355 = vadd.f32 %v1346, %v300
      %v1356 = vadd.f32 %v1348, %v301
      %v1357 = vadd.f32 %v1351, %v302
      %v1358 = vadd.f32 %v1353, %v303
      %v1359 = vmax.f32 %v1355, 0.0
      %v1360 = vmax.f32 %v1356, 0.0
      %v1361 = vmax.f32 %v1357, 0.0
      %v1362 = vmax.f32 %v1358, 0.0
      %v1363 = vpack.c.bf16 %v1359, %v1359
      %v1364 = vpack.c.bf16 %v1360, %v1360
      %v1365 = vpack.c.bf16 %v1361, %v1361
      %v1366 = vpack.c.bf16 %v1362, %v1362
      %1367 = vst [vmem:[%s224] sm:$0xf] %v1363
      %1368 = vst [vmem:[%s224 + $0x4] sm:$0xf] %v1364
      %1369 = vst [vmem:[%s224 + $0x8] sm:$0xf] %v1365
      %1370 = vst [vmem:[%s224 + $0xc] sm:$0xf] %v1366
      %p1371 = scmp.lt.s32.totalorder %s16, 3
      %s1372 = scalar_select %p1371, %s16, 3
      %s1373 = smul.addr %s1372, 4
      %s1374 = smul.addr %s1373, 4
      %s1375 = scalar_lea.vmem %s5, %s1374
      // Predicated region
      $region41: #{encoder_forward.7} parent=39 // pred_check
        %p1376 = pneg %p144
      $region42: #{encoder_forward.7} parent=39 // pred_check_branch
        %1378 = sbr.rel (%p1376) target = $region44
      $region43: #{encoder_forward.7} parent=39 // pred_region
        _
      $region44: #{encoder_forward.7} parent=39 // pred_fallthru
        _
    $region40: #{encoder_forward.7} parent=5 // pred_fallthru
      _
    %p1379 = scmp.le.s32.totalorder 2, %s11
    // Predicated region
    $region45: #{encoder_forward.7} parent=5 // pred_check
      %p1380 = pneg %p1379
    $region46: #{encoder_forward.7} parent=5 // pred_check_branch
      %1382 = sbr.rel (%p1380) target = $region48
    $region47: #{encoder_forward.7} parent=5 // pred_region
      %s1383 = ssub.s32 %s11, 2
      // Predicated region
      $region49: #{encoder_forward.7} parent=47 // pred_check
        %p1384 = pneg %p150
      $region50: #{encoder_forward.7} parent=47 // pred_check_branch
        %1386 = sbr.rel (%p1384) target = $region52
      $region51: #{encoder_forward.7} parent=47 // pred_region
        %p1387 = scmp.lt.s32.totalorder %s17, 3
        %s1388 = scalar_select %p1387, %s17, 3
        %s1389 = smul.addr %s1388, 4
        %s1390 = smul.addr %s1389, 4
        %s1391 = scalar_lea.vmem %s5, %s1390
      $region52: #{encoder_forward.7} parent=47 // pred_fallthru
        _
    $region48: #{encoder_forward.7} parent=5 // pred_fallthru
      _
  $region6: #{encoder_forward.7} parent=0 // loop_footer
    %s15 = sadd.s32 1, %s11
  $region7: #{encoder_forward.7} parent=0 // loop_footer_branch
    %10 = sbr.rel target = $region3
  $region8: #{encoder_forward.7} parent=0 // loop_exit
    _

</llo_original>
